<compile_context>
chip_gen: v5e
topology: v5e:2x2
jax: 0.10.0
libtpu: 0.0.40
codegen_flags: <defaults>
</compile_context>

<pallas_src>
import functools
import math

import numpy as np
import jax
import jax.numpy as jnp
from jax import lax
from jax.experimental import pallas as pl
from jax.experimental.pallas import tpu as pltpu

FEAT = 9          # per-gaussian record: mx, my, -0.5*conic_a, -conic_b, -0.5*conic_c, op, r, g, b
CHUNK = 16        # gaussians per unrolled inner loop / accumulator-amortization granularity
SUBW = 128        # column sub-tile width (lane-dense, bounds vreg pressure)
BIG = 1_000_000
ALPHA_MIN = 1.0 / 255.0


def _round_up(x, m):
    return ((x + m - 1) // m) * m


def _pick_tile_h():
    # v7x: 2 TensorCores -> finer row grid for load balance.
    # v5e: single TC, 1 vst slot -> fewer row bands (less serial SMEM table walking).
    try:
        kind = jax.devices()[0].device_kind.lower()
    except Exception:
        return 16
    if "v7" in kind or "7x" in kind:
        return 8
    if "v5e" in kind or "v5 lite" in kind or "v5lite" in kind:
        return 32
    return 16


# ----------------------------------------------------------------------------- kernel
def _raster_kernel(cbbox_ref, gbbox_ref, gauss_ref, out_ref,
                   t_ref, cr_ref, cg_ref, cb_ref, done_ref,
                   *, n_chunks, bg, img_h, img_w, flip_lr, flip_ud):
    # out_ref block: (3, TILE_H, SUBW)
    # cbbox_ref: SMEM flat (n_chunks*4,) int32  per-chunk union [xmin,xmax,ymin,ymax]
    # gbbox_ref: SMEM flat (n_pad*4,)    int32  per-gaussian   [xmin,xmax,ymin,ymax]
    # gauss_ref: SMEM flat (n_pad*FEAT,) f32    depth-sorted gaussian table
    th = out_ref.shape[1]
    sw = out_ref.shape[2]
    row0 = pl.program_id(0) * th
    col0 = pl.program_id(1) * sw

    # pixel coordinate grids; flips folded in here (zero cost, no HBM flip pass)
    col_idx = lax.broadcasted_iota(jnp.int32, (th, sw), 1) + col0
    row_idx = lax.broadcasted_iota(jnp.int32, (th, sw), 0) + row0
    if flip_lr:
        col_idx = (img_w - 1) - col_idx
    if flip_ud:
        row_idx = (img_h - 1) - row_idx
    px = col_idx.astype(jnp.float32)
    py = row_idx.astype(jnp.float32)

    # x / y band (in render-pixel coords) covered by this sub-tile, for scalar culling
    if flip_ud:
        y_lo = (img_h - th) - row0
        y_hi = (img_h - 1) - row0
    else:
        y_lo = row0
        y_hi = row0 + (th - 1)
    if flip_lr:
        x_lo = (img_w - sw) - col0
        x_hi = (img_w - 1) - col0
    else:
        x_lo = col0
        x_hi = col0 + (sw - 1)

    # accumulators in VMEM scratch; per-pixel "done" flag is the sign of T
    t_ref[...] = jnp.ones((th, sw), jnp.float32)
    cr_ref[...] = jnp.zeros((th, sw), jnp.float32)
    cg_ref[...] = jnp.zeros((th, sw), jnp.float32)
    cb_ref[...] = jnp.zeros((th, sw), jnp.float32)
    done_ref[0] = jnp.int32(0)

    def chunk_body(ci, carry):
        cbase = ci * 4
        c_xmin = cbbox_ref[cbase + 0]
        c_xmax = cbbox_ref[cbase + 1]
        c_ymin = cbbox_ref[cbase + 2]
        c_ymax = cbbox_ref[cbase + 3]
        # chunk-level rect cull + tile-level early termination (flag from previous chunk)
        go = ((c_xmax >= x_lo) & (c_xmin <= x_hi) &
              (c_ymax >= y_lo) & (c_ymin <= y_hi) &
              (done_ref[0] == 0))

        @pl.when(go)
        def _process_chunk():
            # load accumulators ONCE per chunk, carry through the unrolled loop
            T = t_ref[...]
            cr = cr_ref[...]
            cg = cg_ref[...]
            cb = cb_ref[...]

            def gauss_body(j, acc):
                T, cr, cg, cb = acc
                n = ci * CHUNK + j
                gb = n * 4
                # cheap scalar per-gaussian rect test folded into opacity (no branch)
                g_hit = ((gbbox_ref[gb + 1] >= x_lo) & (gbbox_ref[gb + 0] <= x_hi) &
                         (gbbox_ref[gb + 3] >= y_lo) & (gbbox_ref[gb + 2] <= y_hi))
                b = n * FEAT
                mx = gauss_ref[b + 0]
                my = gauss_ref[b + 1]
                qa = gauss_ref[b + 2]     # -0.5 * conic_a
                qb = gauss_ref[b + 3]     # -conic_b
                qc = gauss_ref[b + 4]     # -0.5 * conic_c
                op = jnp.where(g_hit, gauss_ref[b + 5], 0.0)
                col_r = gauss_ref[b + 6]
                col_g = gauss_ref[b + 7]
                col_b = gauss_ref[b + 8]

                dx = px - mx
                dy = py - my
                power = dx * (qa * dx + qb * dy) + qc * (dy * dy)
                e = jnp.exp(power)
                alpha = jnp.where(power <= 0.0, jnp.minimum(0.99, op * e), 0.0)

                hit = (alpha >= ALPHA_MIN) & (T > 0.0)
                test_T = T * (1.0 - alpha)
                contrib = hit & (test_T >= 1e-4)
                done_now = jnp.logical_xor(hit, contrib)

                w = jnp.where(contrib, alpha * T, 0.0)
                cr = cr + w * col_r
                cg = cg + w * col_g
                cb = cb + w * col_b
                T = jnp.where(done_now, -T, jnp.where(contrib, test_T, T))
                return (T, cr, cg, cb)

            # fully unrolled -> scalar SMEM loads of gaussian n+1 overlap VPU work of gaussian n
            T, cr, cg, cb = lax.fori_loop(0, CHUNK, gauss_body,
                                          (T, cr, cg, cb), unroll=True)
            # store accumulators ONCE per chunk
            t_ref[...] = T
            cr_ref[...] = cr
            cg_ref[...] = cg
            cb_ref[...] = cb
            # early-exit flag for the NEXT chunk (reduce overlaps this chunk's epilogue)
            done_ref[0] = (jnp.max(T) <= 0.0).astype(jnp.int32)

        return carry

    lax.fori_loop(0, n_chunks, chunk_body, 0)

    t_fin = jnp.abs(t_ref[...])
    out_ref[0] = cr_ref[...] + t_fin * bg[0]
    out_ref[1] = cg_ref[...] + t_fin * bg[1]
    out_ref[2] = cb_ref[...] + t_fin * bg[2]


def _render_pallas(cbbox_flat, gbbox_flat, gauss_flat, img_h, img_w, n_chunks,
                   bg, flip_lr, flip_ud):
    tile_h = _pick_tile_h()
    h_pad = _round_up(img_h, tile_h)     # rows padded so every band is full (cropped after)
    w_pad = _round_up(img_w, SUBW)       # lane-dense output writes (cropped after)
    n_pad = n_chunks * CHUNK

    kernel = functools.partial(
        _raster_kernel, n_chunks=n_chunks, bg=bg, img_h=img_h, img_w=img_w,
        flip_lr=flip_lr, flip_ud=flip_ud)

    cost = pl.CostEstimate(
        flops=int(n_pad) * int(h_pad) * int(w_pad) * 35,
        transcendentals=int(n_pad) * int(h_pad) * int(w_pad),
        bytes_accessed=3 * int(h_pad) * int(w_pad) * 4
                       + int(n_pad) * (FEAT + 4) * 4 + int(n_chunks) * 4 * 4,
    )

    out = pl.pallas_call(
        kernel,
        out_shape=jax.ShapeDtypeStruct((3, h_pad, w_pad), jnp.float32),
        grid=(h_pad // tile_h, w_pad // SUBW),
        in_specs=[pl.BlockSpec(memory_space=pltpu.MemorySpace.SMEM)] * 3,
        out_specs=pl.BlockSpec((3, tile_h, SUBW), lambda i, j: (0, i, j)),
        scratch_shapes=[pltpu.VMEM((tile_h, SUBW), jnp.float32)] * 4
                       + [pltpu.SMEM((1,), jnp.int32)],
        compiler_params=pltpu.CompilerParams(
            dimension_semantics=("parallel", "parallel")),
        cost_estimate=cost,
    )(cbbox_flat, gbbox_flat, gauss_flat)

    return out[:, :img_h, :img_w]


# ----------------------------------------------------------------- preprocessing (glue)
def _preprocess(points, Rt, full_proj, img_w, img_h, tanfovx, tanfovy, scale_mod):
    xyz = points[:, 0:3]
    opacity = points[:, 3]
    scales = points[:, 4:7] * scale_mod
    quat = points[:, 7:11]         # (w, x, y, z) per rasterizer convention
    rgbs = points[:, 11:14]
    n = xyz.shape[0]

    ones = jnp.ones((n, 1), jnp.float32)
    xyz1 = jnp.concatenate([xyz, ones], axis=1)
    p_view = xyz1 @ Rt.T                       # camera-space points (N,4)
    p_hom = xyz1 @ full_proj.T                 # clip space (N,4)
    p_w = 1.0 / (p_hom[:, 3] + 1e-7)
    p_proj = p_hom[:, :3] * p_w[:, None]

    depth = p_view[:, 2]
    in_frustum = depth > 0.2

    # 3D covariance from scale & quaternion (computeCov3D)
    qn = quat / jnp.linalg.norm(quat, axis=1, keepdims=True)
    r, x, y, z = qn[:, 0], qn[:, 1], qn[:, 2], qn[:, 3]
    Rq = jnp.stack([
        jnp.stack([1 - 2 * (y * y + z * z), 2 * (x * y - r * z), 2 * (x * z + r * y)], axis=-1),
        jnp.stack([2 * (x * y + r * z), 1 - 2 * (x * x + z * z), 2 * (y * z - r * x)], axis=-1),
        jnp.stack([2 * (x * z - r * y), 2 * (y * z + r * x), 1 - 2 * (x * x + y * y)], axis=-1),
    ], axis=1)                                  # (N,3,3)
    Ms = Rq * scales[:, None, :]                # R @ diag(s)
    Sigma = Ms @ jnp.swapaxes(Ms, 1, 2)         # (N,3,3)

    # EWA 2D covariance (computeCov2D)
    focal_x = img_w / (2.0 * tanfovx)
    focal_y = img_h / (2.0 * tanfovy)
    tz = p_view[:, 2]
    limx, limy = 1.3 * tanfovx, 1.3 * tanfovy
    txz = jnp.clip(p_view[:, 0] / tz, -limx, limx) * tz
    tyz = jnp.clip(p_view[:, 1] / tz, -limy, limy) * tz
    zero = jnp.zeros_like(tz)
    J = jnp.stack([
        jnp.stack([focal_x / tz, zero, -(focal_x * txz) / (tz * tz)], axis=-1),
        jnp.stack([zero, focal_y / tz, -(focal_y * tyz) / (tz * tz)], axis=-1),
    ], axis=1)                                  # (N,2,3)
    Wc = Rt[:3, :3]                             # world->camera rotation
    Tm = J @ Wc                                 # (N,2,3)
    cov2d = Tm @ Sigma @ jnp.swapaxes(Tm, 1, 2)  # (N,2,2)
    cxx = cov2d[:, 0, 0] + 0.3
    cyy = cov2d[:, 1, 1] + 0.3
    cxy = cov2d[:, 0, 1]
    det = cxx * cyy - cxy * cxy
    valid = in_frustum & (det != 0.0)
    det_inv = jnp.where(det != 0.0, 1.0 / det, 0.0)
    conic_a = cyy * det_inv
    conic_b = -cxy * det_inv
    conic_c = cxx * det_inv

    # pre-scaled conic so the kernel computes power = dx*(qa*dx + qb*dy) + qc*dy*dy directly
    qa = -0.5 * conic_a
    qb = -conic_b
    qc = -0.5 * conic_c

    # ndc2Pix
    mx = ((p_proj[:, 0] + 1.0) * img_w - 1.0) * 0.5
    my = ((p_proj[:, 1] + 1.0) * img_h - 1.0) * 0.5

    # 3-sigma screen radius (CUDA preprocess / getRect analogue) for culling
    mid = 0.5 * (cxx + cyy)
    lam1 = mid + jnp.sqrt(jnp.maximum(0.1, mid * mid - det))
    radius = jnp.ceil(3.0 * jnp.sqrt(jnp.maximum(lam1, 0.0)))
    xmin = mx - radius
    xmax = mx + radius
    ymin = my - radius
    ymax = my + radius
    on_screen = ((xmax >= 0.0) & (xmin <= img_w - 1.0) &
                 (ymax >= 0.0) & (ymin <= img_h - 1.0) & (radius > 0.0))
    valid = valid & on_screen

    # global front-to-back depth ordering (invalid gaussians pushed to the end)
    order = jnp.argsort(jnp.where(valid, depth, jnp.inf))

    feats = jnp.stack([mx, my, qa, qb, qc, opacity,
                       rgbs[:, 0], rgbs[:, 1], rgbs[:, 2]], axis=1)   # (N, FEAT)
    feats = jnp.where(valid[:, None], feats, 0.0)                     # sanitize culled gaussians
    xmin_i = jnp.where(valid, jnp.floor(xmin), float(BIG)).astype(jnp.int32)
    xmax_i = jnp.where(valid, jnp.ceil(xmax), float(-BIG)).astype(jnp.int32)
    ymin_i = jnp.where(valid, jnp.floor(ymin), float(BIG)).astype(jnp.int32)
    ymax_i = jnp.where(valid, jnp.ceil(ymax), float(-BIG)).astype(jnp.int32)
    gbbox = jnp.stack([xmin_i, xmax_i, ymin_i, ymax_i], axis=1)       # (N, 4)

    feats = feats[order]
    gbbox = gbbox[order]

    # pad the depth-sorted tables to a multiple of CHUNK with never-hit entries
    n_pad = ((n + CHUNK - 1) // CHUNK) * CHUNK
    if n_pad > n:
        feats = jnp.concatenate([feats, jnp.zeros((n_pad - n, FEAT), jnp.float32)], axis=0)
        pad_bbox = jnp.tile(jnp.array([[BIG, -BIG, BIG, -BIG]], jnp.int32), (n_pad - n, 1))
        gbbox = jnp.concatenate([gbbox, pad_bbox], axis=0)

    # per-chunk union bboxes for chunk-level culling in the kernel
    n_chunks = n_pad // CHUNK
    gb3 = gbbox.reshape(n_chunks, CHUNK, 4)
    cbbox = jnp.stack([gb3[:, :, 0].min(axis=1), gb3[:, :, 1].max(axis=1),
                       gb3[:, :, 2].min(axis=1), gb3[:, :, 3].max(axis=1)], axis=1)

    return (cbbox.reshape(-1).astype(jnp.int32),
            gbbox.reshape(-1).astype(jnp.int32),
            feats.reshape(-1).astype(jnp.float32),
            n_chunks)


# --------------------------------------------------------------------------- wrapper
class GaussianRasterizerWrapperPallas:
    def __init__(self, K, sensor_size, flip_lr=True, flip_ud=False,
                 z_near=0.01, z_far=50000.0):
        self.flip_lr = flip_lr
        self.flip_ud = flip_ud
        self.z_near = z_near
        self.z_far = z_far
        self.K = np.asarray(K, dtype=np.float32)
        self.sensor_size = sensor_size                     # (width, height)
        fx, fy = self.K[0, 0], self.K[1, 1]
        self.fov_x = 2.0 * np.arctan2(sensor_size[0], 2.0 * fx)
        self.fov_y = 2.0 * np.arctan2(sensor_size[1], 2.0 * fy)
        self.tanfovx = math.tan(self.fov_x * 0.5)
        self.tanfovy = math.tan(self.fov_y * 0.5)
        self.P = self._get_projection_matrix()
        self.scale_modifier = 1.0
        self.bg = (0.0, 0.0, 0.0)                          # BG_COLOR in the torch module

    def _get_projection_matrix(self):
        fx, fy = self.K[0, 0], self.K[1, 1]
        cx, cy = self.K[0, 2], self.K[1, 2]
        w, h = self.sensor_size
        P = np.zeros((4, 4), dtype=np.float32)
        P[0, 0] = 2.0 * fx / w
        P[1, 1] = 2.0 * fy / h
        P[0, 2] = 2.0 * cx / w - 1.0
        P[1, 2] = 2.0 * cy / h - 1.0
        P[2, 2] = -(self.z_far + self.z_near) / (self.z_far - self.z_near)
        P[3, 2] = -1.0
        P[2, 3] = -2.0 * self.z_far * self.z_near / (self.z_far - self.z_near)
        return P

    def _get_w2c_matrix(self, cam_position, cam_quaternion):
        q = np.asarray(cam_quaternion, dtype=np.float64)
        q = q / np.linalg.norm(q)
        x, y, z, w = q                                      # scipy from_quat order
        R = np.array([
            [1 - 2 * (y * y + z * z), 2 * (x * y - z * w), 2 * (x * z + y * w)],
            [2 * (x * y + z * w), 1 - 2 * (x * x + z * z), 2 * (y * z - x * w)],
            [2 * (x * z - y * w), 2 * (y * z + x * w), 1 - 2 * (x * x + y * y)],
        ], dtype=np.float64)
        R = R[:, [1, 2, 0]]
        Rt = np.zeros((4, 4), dtype=np.float32)
        Rt[:3, :3] = R.T
        Rt[:3, 3] = (-R.T @ np.asarray(cam_position, dtype=np.float64)[:, None])[:, 0]
        Rt[3, 3] = 1.0
        return Rt

    def __call__(self, points, cam_position, cam_quaternion):
        n, m = points.shape
        assert m == 14, "The input tensor should have 14 channels."
        img_w, img_h = int(self.sensor_size[0]), int(self.sensor_size[1])

        Rt = jnp.asarray(self._get_w2c_matrix(cam_position, cam_quaternion))
        # the torch wrapper passes (P @ w2c)^T and CUDA reads it column-major,
        # so the effective full projection is P @ Rt
        full_proj = jnp.asarray(self.P) @ Rt

        cbbox_flat, gbbox_flat, gauss_flat, n_chunks = _preprocess(
            points, Rt, full_proj, img_w, img_h,
            self.tanfovx, self.tanfovy, self.scale_modifier)

        # flips are folded into the kernel's pixel mapping (no post-hoc jnp.flip pass)
        img = _render_pallas(cbbox_flat, gbbox_flat, gauss_flat, img_h, img_w,
                             n_chunks, self.bg, self.flip_lr, self.flip_ud)
        return img


# ------------------------------------------------------------------------------ main
if __name__ == "__main__":
    key = jax.random.PRNGKey(0)
    img_w, img_h = 128, 64
    fx = fy = 100.0
    K = np.array([[fx, 0.0, img_w / 2.0],
                  [0.0, fy, img_h / 2.0],
                  [0.0, 0.0, 1.0]], dtype=np.float32)

    wrapper = GaussianRasterizerWrapperPallas(K, (img_w, img_h),
                                              flip_lr=True, flip_ud=False)

    n = 64
    k1, k2, k3, k4, k5, k6, k7 = jax.random.split(key, 7)
    xyz = jnp.stack([
        jax.random.uniform(k1, (n,), minval=3.0, maxval=8.0),    # depth axis for this camera
        jax.random.uniform(k2, (n,), minval=-1.5, maxval=1.5),
        jax.random.uniform(k3, (n,), minval=-0.8, maxval=0.8),
    ], axis=1)
    opacity = jax.random.uniform(k4, (n, 1), minval=0.3, maxval=0.9)
    scales = jax.random.uniform(k5, (n, 3), minval=0.05, maxval=0.3)
    quat = jax.random.normal(k6, (n, 4))
    rgbs = jax.random.uniform(k7, (n, 3), minval=0.0, maxval=1.0)
    points = jnp.concatenate([xyz, opacity, scales, quat, rgbs], axis=1).astype(jnp.float32)

    cam_position = np.array([0.0, 0.0, 0.0], dtype=np.float32)
    cam_quaternion = np.array([0.0, 0.0, 0.0, 1.0], dtype=np.float32)  # (x, y, z, w)

    img = wrapper(points, cam_position, cam_quaternion)
    img = jax.block_until_ready(img)

    assert img.shape == (3, img_h, img_w), img.shape
    assert img.dtype == jnp.float32
    assert bool(jnp.isfinite(img).all())
    print("KERNEL_OK")
</pallas_src>

<mosaic_0001>
module attributes {stable_mosaic.version = 11 : i64} {
  func.func @_raster_kernel(%arg0: i32, %arg1: i32, %arg2: memref<16xi32, #tpu.memory_space<smem>>, %arg3: memref<256xi32, #tpu.memory_space<smem>>, %arg4: memref<576xf32, #tpu.memory_space<smem>>, %arg5: memref<3x16x128xf32, #tpu.memory_space<vmem>>, %arg6: memref<16x128xf32, #tpu.memory_space<vmem>>, %arg7: memref<16x128xf32, #tpu.memory_space<vmem>>, %arg8: memref<16x128xf32, #tpu.memory_space<vmem>>, %arg9: memref<16x128xf32, #tpu.memory_space<vmem>>, %arg10: memref<1xi32, #tpu.memory_space<smem>>) attributes {dimension_semantics = [#tpu.dimension_semantics<parallel>, #tpu.dimension_semantics<parallel>], iteration_bounds = array<i64: 4, 1>, scalar_prefetch = 0 : i64, scratch_operands = 5 : i64, tpu.core_type = #tpu.core_type<tc>, window_params = [{transform_indices = @transform_0, window_bounds = array<i64: 16>}, {transform_indices = @transform_1, window_bounds = array<i64: 256>}, {transform_indices = @transform_2, window_bounds = array<i64: 576>}, {transform_indices = @transform_3, window_bounds = array<i64: 3, 16, 128>}]} {
    %c16_i32 = arith.constant 16 : i32
    %0 = arith.muli %arg0, %c16_i32 : i32
    %c128_i32 = arith.constant 128 : i32
    %1 = arith.muli %arg1, %c128_i32 : i32
    %2 = tpu.iota {dimensions = array<i32: 1>} : vector<16x128xi32>
    %3 = vector.broadcast %1 : i32 to vector<16x128xi32>
    %4 = arith.addi %2, %3 : vector<16x128xi32>
    %5 = tpu.iota {dimensions = array<i32: 0>} : vector<16x128xi32>
    %6 = vector.broadcast %0 : i32 to vector<16x128xi32>
    %7 = arith.addi %5, %6 : vector<16x128xi32>
    %c127_i32 = arith.constant 127 : i32
    %8 = vector.broadcast %c127_i32 : i32 to vector<16x128xi32>
    %9 = arith.subi %8, %4 : vector<16x128xi32>
    %10 = arith.sitofp %9 : vector<16x128xi32> to vector<16x128xf32>
    %11 = arith.sitofp %7 : vector<16x128xi32> to vector<16x128xf32>
    %c15_i32 = arith.constant 15 : i32
    %12 = arith.addi %0, %c15_i32 : i32
    %c0_i32 = arith.constant 0 : i32
    %13 = arith.subi %c0_i32, %1 : i32
    %c127_i32_0 = arith.constant 127 : i32
    %14 = arith.subi %c127_i32_0, %1 : i32
    %cst = arith.constant 1.000000e+00 : f32
    %15 = vector.broadcast %cst : f32 to vector<16x128xf32>
    %c0 = arith.constant 0 : index
    %c0_1 = arith.constant 0 : index
    %16 = vector.load %arg6[%c0, %c0_1] : memref<16x128xf32, #tpu.memory_space<vmem>>, vector<16x128xf32>
    tpu.vector_store %arg6[%c0, %c0_1], %15 {strides = array<i32>} : memref<16x128xf32, #tpu.memory_space<vmem>>, vector<16x128xf32>,
    %cst_2 = arith.constant 0.000000e+00 : f32
    %17 = vector.broadcast %cst_2 : f32 to vector<16x128xf32>
    %c0_3 = arith.constant 0 : index
    %c0_4 = arith.constant 0 : index
    %18 = vector.load %arg7[%c0_3, %c0_4] : memref<16x128xf32, #tpu.memory_space<vmem>>, vector<16x128xf32>
    tpu.vector_store %arg7[%c0_3, %c0_4], %17 {strides = array<i32>} : memref<16x128xf32, #tpu.memory_space<vmem>>, vector<16x128xf32>,
    %cst_5 = arith.constant 0.000000e+00 : f32
    %19 = vector.broadcast %cst_5 : f32 to vector<16x128xf32>
    %c0_6 = arith.constant 0 : index
    %c0_7 = arith.constant 0 : index
    %20 = vector.load %arg8[%c0_6, %c0_7] : memref<16x128xf32, #tpu.memory_space<vmem>>, vector<16x128xf32>
    tpu.vector_store %arg8[%c0_6, %c0_7], %19 {strides = array<i32>} : memref<16x128xf32, #tpu.memory_space<vmem>>, vector<16x128xf32>,
    %cst_8 = arith.constant 0.000000e+00 : f32
    %21 = vector.broadcast %cst_8 : f32 to vector<16x128xf32>
    %c0_9 = arith.constant 0 : index
    %c0_10 = arith.constant 0 : index
    %22 = vector.load %arg9[%c0_9, %c0_10] : memref<16x128xf32, #tpu.memory_space<vmem>>, vector<16x128xf32>
    tpu.vector_store %arg9[%c0_9, %c0_10], %21 {strides = array<i32>} : memref<16x128xf32, #tpu.memory_space<vmem>>, vector<16x128xf32>,
    %c0_i32_11 = arith.constant 0 : i32
    %c0_12 = arith.constant 0 : index
    %23 = memref.load %arg10[%c0_12] : memref<1xi32, #tpu.memory_space<smem>>
    memref.store %c0_i32_11, %arg10[%c0_12] : memref<1xi32, #tpu.memory_space<smem>>
    %c0_i32_13 = arith.constant 0 : i32
    %c4_i32 = arith.constant 4 : i32
    %24 = arith.addi %c0_i32_13, %c4_i32 : i32
    %c1_i32 = arith.constant 1 : i32
    scf.for %arg11 = %c0_i32_13 to %24 step %c1_i32  : i32 {
      %c4_i32_33 = arith.constant 4 : i32
      %48 = arith.muli %arg11, %c4_i32_33 : i32
      %c0_i32_34 = arith.constant 0 : i32
      %49 = arith.addi %48, %c0_i32_34 : i32
      %50 = arith.index_cast %49 : i32 to index
      %51 = memref.load %arg2[%50] : memref<16xi32, #tpu.memory_space<smem>>
      %c1_i32_35 = arith.constant 1 : i32
      %52 = arith.addi %48, %c1_i32_35 : i32
      %53 = arith.index_cast %52 : i32 to index
      %54 = memref.load %arg2[%53] : memref<16xi32, #tpu.memory_space<smem>>
      %c2_i32 = arith.constant 2 : i32
      %55 = arith.addi %48, %c2_i32 : i32
      %56 = arith.index_cast %55 : i32 to index
      %57 = memref.load %arg2[%56] : memref<16xi32, #tpu.memory_space<smem>>
      %c3_i32 = arith.constant 3 : i32
      %58 = arith.addi %48, %c3_i32 : i32
      %59 = arith.index_cast %58 : i32 to index
      %60 = memref.load %arg2[%59] : memref<16xi32, #tpu.memory_space<smem>>
      %61 = arith.cmpi sge, %54, %13 : i32
      %62 = arith.cmpi sle, %51, %14 : i32
      %63 = arith.andi %61, %62 : i1
      %64 = arith.cmpi sge, %60, %0 : i32
      %65 = arith.andi %63, %64 : i1
      %66 = arith.cmpi sle, %57, %12 : i32
      %67 = arith.andi %65, %66 : i1
      %c0_36 = arith.constant 0 : index
      %68 = memref.load %arg10[%c0_36] : memref<1xi32, #tpu.memory_space<smem>>
      %c0_i32_37 = arith.constant 0 : i32
      %69 = arith.cmpi eq, %68, %c0_i32_37 : i32
      %70 = arith.andi %67, %69 : i1
      %71 = arith.extui %70 : i1 to i32
      %c0_i32_38 = arith.constant 0 : i32
      %72 = arith.cmpi ne, %71, %c0_i32_38 : i32
      scf.if %72 {
        %c0_39 = arith.constant 0 : index
        %c0_40 = arith.constant 0 : index
        %73 = vector.load %arg6[%c0_39, %c0_40] : memref<16x128xf32, #tpu.memory_space<vmem>>, vector<16x128xf32>
        %c0_41 = arith.constant 0 : index
        %c0_42 = arith.constant 0 : index
        %74 = vector.load %arg7[%c0_41, %c0_42] : memref<16x128xf32, #tpu.memory_space<vmem>>, vector<16x128xf32>
        %c0_43 = arith.constant 0 : index
        %c0_44 = arith.constant 0 : index
        %75 = vector.load %arg8[%c0_43, %c0_44] : memref<16x128xf32, #tpu.memory_space<vmem>>, vector<16x128xf32>
        %c0_45 = arith.constant 0 : index
        %c0_46 = arith.constant 0 : index
        %76 = vector.load %arg9[%c0_45, %c0_46] : memref<16x128xf32, #tpu.memory_space<vmem>>, vector<16x128xf32>
        %c0_i32_47 = arith.constant 0 : i32
        %c16_i32_48 = arith.constant 16 : i32
        %77 = arith.muli %arg11, %c16_i32_48 : i32
        %78 = arith.addi %77, %c0_i32_47 : i32
        %c4_i32_49 = arith.constant 4 : i32
        %79 = arith.muli %78, %c4_i32_49 : i32
        %c1_i32_50 = arith.constant 1 : i32
        %80 = arith.addi %79, %c1_i32_50 : i32
        %81 = arith.index_cast %80 : i32 to index
        %82 = memref.load %arg3[%81] : memref<256xi32, #tpu.memory_space<smem>>
        %83 = arith.cmpi sge, %82, %13 : i32
        %c0_i32_51 = arith.constant 0 : i32
        %84 = arith.addi %79, %c0_i32_51 : i32
        %85 = arith.index_cast %84 : i32 to index
        %86 = memref.load %arg3[%85] : memref<256xi32, #tpu.memory_space<smem>>
        %87 = arith.cmpi sle, %86, %14 : i32
        %88 = arith.andi %83, %87 : i1
        %c3_i32_52 = arith.constant 3 : i32
        %89 = arith.addi %79, %c3_i32_52 : i32
        %90 = arith.index_cast %89 : i32 to index
        %91 = memref.load %arg3[%90] : memref<256xi32, #tpu.memory_space<smem>>
        %92 = arith.cmpi sge, %91, %0 : i32
        %93 = arith.andi %88, %92 : i1
        %c2_i32_53 = arith.constant 2 : i32
        %94 = arith.addi %79, %c2_i32_53 : i32
        %95 = arith.index_cast %94 : i32 to index
        %96 = memref.load %arg3[%95] : memref<256xi32, #tpu.memory_space<smem>>
        %97 = arith.cmpi sle, %96, %12 : i32
        %98 = arith.andi %93, %97 : i1
        %c9_i32 = arith.constant 9 : i32
        %99 = arith.muli %78, %c9_i32 : i32
        %c0_i32_54 = arith.constant 0 : i32
        %100 = arith.addi %99, %c0_i32_54 : i32
        %101 = arith.index_cast %100 : i32 to index
        %102 = memref.load %arg4[%101] : memref<576xf32, #tpu.memory_space<smem>>
        %c1_i32_55 = arith.constant 1 : i32
        %103 = arith.addi %99, %c1_i32_55 : i32
        %104 = arith.index_cast %103 : i32 to index
        %105 = memref.load %arg4[%104] : memref<576xf32, #tpu.memory_space<smem>>
        %c2_i32_56 = arith.constant 2 : i32
        %106 = arith.addi %99, %c2_i32_56 : i32
        %107 = arith.index_cast %106 : i32 to index
        %108 = memref.load %arg4[%107] : memref<576xf32, #tpu.memory_space<smem>>
        %c3_i32_57 = arith.constant 3 : i32
        %109 = arith.addi %99, %c3_i32_57 : i32
        %110 = arith.index_cast %109 : i32 to index
        %111 = memref.load %arg4[%110] : memref<576xf32, #tpu.memory_space<smem>>
        %c4_i32_58 = arith.constant 4 : i32
        %112 = arith.addi %99, %c4_i32_58 : i32
        %113 = arith.index_cast %112 : i32 to index
        %114 = memref.load %arg4[%113] : memref<576xf32, #tpu.memory_space<smem>>
        %c5_i32 = arith.constant 5 : i32
        %115 = arith.addi %99, %c5_i32 : i32
        %116 = arith.index_cast %115 : i32 to index
        %117 = memref.load %arg4[%116] : memref<576xf32, #tpu.memory_space<smem>>
        %cst_59 = arith.constant 0.000000e+00 : f32
        %118 = arith.select %98, %117, %cst_59 : f32
        %c6_i32 = arith.constant 6 : i32
        %119 = arith.addi %99, %c6_i32 : i32
        %120 = arith.index_cast %119 : i32 to index
        %121 = memref.load %arg4[%120] : memref<576xf32, #tpu.memory_space<smem>>
        %c7_i32 = arith.constant 7 : i32
        %122 = arith.addi %99, %c7_i32 : i32
        %123 = arith.index_cast %122 : i32 to index
        %124 = memref.load %arg4[%123] : memref<576xf32, #tpu.memory_space<smem>>
        %c8_i32 = arith.constant 8 : i32
        %125 = arith.addi %99, %c8_i32 : i32
        %126 = arith.index_cast %125 : i32 to index
        %127 = memref.load %arg4[%126] : memref<576xf32, #tpu.memory_space<smem>>
        %128 = vector.broadcast %102 : f32 to vector<16x128xf32>
        %129 = arith.subf %10, %128 : vector<16x128xf32>
        %130 = vector.broadcast %105 : f32 to vector<16x128xf32>
        %131 = arith.subf %11, %130 : vector<16x128xf32>
        %132 = vector.broadcast %108 : f32 to vector<16x128xf32>
        %133 = arith.mulf %132, %129 : vector<16x128xf32>
        %134 = vector.broadcast %111 : f32 to vector<16x128xf32>
        %135 = arith.mulf %134, %131 : vector<16x128xf32>
        %136 = arith.addf %133, %135 : vector<16x128xf32>
        %137 = arith.mulf %129, %136 : vector<16x128xf32>
        %138 = arith.mulf %131, %131 : vector<16x128xf32>
        %139 = vector.broadcast %114 : f32 to vector<16x128xf32>
        %140 = arith.mulf %139, %138 : vector<16x128xf32>
        %141 = arith.addf %137, %140 : vector<16x128xf32>
        %142 = math.exp %141 : vector<16x128xf32>
        %cst_60 = arith.constant 0.000000e+00 : f32
        %143 = vector.broadcast %cst_60 : f32 to vector<16x128xf32>
        %144 = arith.cmpf ole, %141, %143 : vector<16x128xf32>
        %145 = vector.broadcast %118 : f32 to vector<16x128xf32>
        %146 = arith.mulf %145, %142 : vector<16x128xf32>
        %cst_61 = arith.constant 9.900000e-01 : f32
        %147 = vector.broadcast %cst_61 : f32 to vector<16x128xf32>
        %148 = arith.minimumf %147, %146 : vector<16x128xf32>
        %cst_62 = arith.constant 0.000000e+00 : f32
        %149 = vector.broadcast %cst_62 : f32 to vector<16x128xf32>
        %150 = arith.select %144, %148, %149 : vector<16x128xi1>, vector<16x128xf32>
        %cst_63 = arith.constant 0.00392156886 : f32
        %151 = vector.broadcast %cst_63 : f32 to vector<16x128xf32>
        %152 = arith.cmpf oge, %150, %151 : vector<16x128xf32>
        %cst_64 = arith.constant 0.000000e+00 : f32
        %153 = vector.broadcast %cst_64 : f32 to vector<16x128xf32>
        %154 = arith.cmpf ogt, %73, %153 : vector<16x128xf32>
        %155 = arith.andi %152, %154 : vector<16x128xi1>
        %cst_65 = arith.constant 1.000000e+00 : f32
        %156 = vector.broadcast %cst_65 : f32 to vector<16x128xf32>
        %157 = arith.subf %156, %150 : vector<16x128xf32>
        %158 = arith.mulf %73, %157 : vector<16x128xf32>
        %cst_66 = arith.constant 9.99999974E-5 : f32
        %159 = vector.broadcast %cst_66 : f32 to vector<16x128xf32>
        %160 = arith.cmpf oge, %158, %159 : vector<16x128xf32>
        %161 = arith.andi %155, %160 : vector<16x128xi1>
        %162 = arith.xori %155, %161 : vector<16x128xi1>
        %163 = arith.mulf %150, %73 : vector<16x128xf32>
        %cst_67 = arith.constant 0.000000e+00 : f32
        %164 = vector.broadcast %cst_67 : f32 to vector<16x128xf32>
        %165 = arith.select %161, %163, %164 : vector<16x128xi1>, vector<16x128xf32>
        %166 = vector.broadcast %121 : f32 to vector<16x128xf32>
        %167 = arith.mulf %165, %166 : vector<16x128xf32>
        %168 = arith.addf %74, %167 : vector<16x128xf32>
        %169 = vector.broadcast %124 : f32 to vector<16x128xf32>
        %170 = arith.mulf %165, %169 : vector<16x128xf32>
        %171 = arith.addf %75, %170 : vector<16x128xf32>
        %172 = vector.broadcast %127 : f32 to vector<16x128xf32>
        %173 = arith.mulf %165, %172 : vector<16x128xf32>
        %174 = arith.addf %76, %173 : vector<16x128xf32>
        %cst_68 = arith.constant 0.000000e+00 : f32
        %175 = vector.broadcast %cst_68 : f32 to vector<16x128xf32>
        %176 = arith.subf %175, %73 : vector<16x128xf32>
        %177 = arith.select %161, %158, %73 : vector<16x128xi1>, vector<16x128xf32>
        %178 = arith.select %162, %176, %177 : vector<16x128xi1>, vector<16x128xf32>
        %c1_i32_69 = arith.constant 1 : i32
        %c16_i32_70 = arith.constant 16 : i32
        %179 = arith.muli %arg11, %c16_i32_70 : i32
        %180 = arith.addi %179, %c1_i32_69 : i32
        %c4_i32_71 = arith.constant 4 : i32
        %181 = arith.muli %180, %c4_i32_71 : i32
        %c1_i32_72 = arith.constant 1 : i32
        %182 = arith.addi %181, %c1_i32_72 : i32
        %183 = arith.index_cast %182 : i32 to index
        %184 = memref.load %arg3[%183] : memref<256xi32, #tpu.memory_space<smem>>
        %185 = arith.cmpi sge, %184, %13 : i32
        %c0_i32_73 = arith.constant 0 : i32
        %186 = arith.addi %181, %c0_i32_73 : i32
        %187 = arith.index_cast %186 : i32 to index
        %188 = memref.load %arg3[%187] : memref<256xi32, #tpu.memory_space<smem>>
        %189 = arith.cmpi sle, %188, %14 : i32
        %190 = arith.andi %185, %189 : i1
        %c3_i32_74 = arith.constant 3 : i32
        %191 = arith.addi %181, %c3_i32_74 : i32
        %192 = arith.index_cast %191 : i32 to index
        %193 = memref.load %arg3[%192] : memref<256xi32, #tpu.memory_space<smem>>
        %194 = arith.cmpi sge, %193, %0 : i32
        %195 = arith.andi %190, %194 : i1
        %c2_i32_75 = arith.constant 2 : i32
        %196 = arith.addi %181, %c2_i32_75 : i32
        %197 = arith.index_cast %196 : i32 to index
        %198 = memref.load %arg3[%197] : memref<256xi32, #tpu.memory_space<smem>>
        %199 = arith.cmpi sle, %198, %12 : i32
        %200 = arith.andi %195, %199 : i1
        %c9_i32_76 = arith.constant 9 : i32
        %201 = arith.muli %180, %c9_i32_76 : i32
        %c0_i32_77 = arith.constant 0 : i32
        %202 = arith.addi %201, %c0_i32_77 : i32
        %203 = arith.index_cast %202 : i32 to index
        %204 = memref.load %arg4[%203] : memref<576xf32, #tpu.memory_space<smem>>
        %c1_i32_78 = arith.constant 1 : i32
        %205 = arith.addi %201, %c1_i32_78 : i32
        %206 = arith.index_cast %205 : i32 to index
        %207 = memref.load %arg4[%206] : memref<576xf32, #tpu.memory_space<smem>>
        %c2_i32_79 = arith.constant 2 : i32
        %208 = arith.addi %201, %c2_i32_79 : i32
        %209 = arith.index_cast %208 : i32 to index
        %210 = memref.load %arg4[%209] : memref<576xf32, #tpu.memory_space<smem>>
        %c3_i32_80 = arith.constant 3 : i32
        %211 = arith.addi %201, %c3_i32_80 : i32
        %212 = arith.index_cast %211 : i32 to index
        %213 = memref.load %arg4[%212] : memref<576xf32, #tpu.memory_space<smem>>
        %c4_i32_81 = arith.constant 4 : i32
        %214 = arith.addi %201, %c4_i32_81 : i32
        %215 = arith.index_cast %214 : i32 to index
        %216 = memref.load %arg4[%215] : memref<576xf32, #tpu.memory_space<smem>>
        %c5_i32_82 = arith.constant 5 : i32
        %217 = arith.addi %201, %c5_i32_82 : i32
        %218 = arith.index_cast %217 : i32 to index
        %219 = memref.load %arg4[%218] : memref<576xf32, #tpu.memory_space<smem>>
        %cst_83 = arith.constant 0.000000e+00 : f32
        %220 = arith.select %200, %219, %cst_83 : f32
        %c6_i32_84 = arith.constant 6 : i32
        %221 = arith.addi %201, %c6_i32_84 : i32
        %222 = arith.index_cast %221 : i32 to index
        %223 = memref.load %arg4[%222] : memref<576xf32, #tpu.memory_space<smem>>
        %c7_i32_85 = arith.constant 7 : i32
        %224 = arith.addi %201, %c7_i32_85 : i32
        %225 = arith.index_cast %224 : i32 to index
        %226 = memref.load %arg4[%225] : memref<576xf32, #tpu.memory_space<smem>>
        %c8_i32_86 = arith.constant 8 : i32
        %227 = arith.addi %201, %c8_i32_86 : i32
        %228 = arith.index_cast %227 : i32 to index
        %229 = memref.load %arg4[%228] : memref<576xf32, #tpu.memory_space<smem>>
        %230 = vector.broadcast %204 : f32 to vector<16x128xf32>
        %231 = arith.subf %10, %230 : vector<16x128xf32>
        %232 = vector.broadcast %207 : f32 to vector<16x128xf32>
        %233 = arith.subf %11, %232 : vector<16x128xf32>
        %234 = vector.broadcast %210 : f32 to vector<16x128xf32>
        %235 = arith.mulf %234, %231 : vector<16x128xf32>
        %236 = vector.broadcast %213 : f32 to vector<16x128xf32>
        %237 = arith.mulf %236, %233 : vector<16x128xf32>
        %238 = arith.addf %235, %237 : vector<16x128xf32>
        %239 = arith.mulf %231, %238 : vector<16x128xf32>
        %240 = arith.mulf %233, %233 : vector<16x128xf32>
        %241 = vector.broadcast %216 : f32 to vector<16x128xf32>
        %242 = arith.mulf %241, %240 : vector<16x128xf32>
        %243 = arith.addf %239, %242 : vector<16x128xf32>
        %244 = math.exp %243 : vector<16x128xf32>
        %cst_87 = arith.constant 0.000000e+00 : f32
        %245 = vector.broadcast %cst_87 : f32 to vector<16x128xf32>
        %246 = arith.cmpf ole, %243, %245 : vector<16x128xf32>
        %247 = vector.broadcast %220 : f32 to vector<16x128xf32>
        %248 = arith.mulf %247, %244 : vector<16x128xf32>
        %cst_88 = arith.constant 9.900000e-01 : f32
        %249 = vector.broadcast %cst_88 : f32 to vector<16x128xf32>
        %250 = arith.minimumf %249, %248 : vector<16x128xf32>
        %cst_89 = arith.constant 0.000000e+00 : f32
        %251 = vector.broadcast %cst_89 : f32 to vector<16x128xf32>
        %252 = arith.select %246, %250, %251 : vector<16x128xi1>, vector<16x128xf32>
        %cst_90 = arith.constant 0.00392156886 : f32
        %253 = vector.broadcast %cst_90 : f32 to vector<16x128xf32>
        %254 = arith.cmpf oge, %252, %253 : vector<16x128xf32>
        %cst_91 = arith.constant 0.000000e+00 : f32
        %255 = vector.broadcast %cst_91 : f32 to vector<16x128xf32>
        %256 = arith.cmpf ogt, %178, %255 : vector<16x128xf32>
        %257 = arith.andi %254, %256 : vector<16x128xi1>
        %cst_92 = arith.constant 1.000000e+00 : f32
        %258 = vector.broadcast %cst_92 : f32 to vector<16x128xf32>
        %259 = arith.subf %258, %252 : vector<16x128xf32>
        %260 = arith.mulf %178, %259 : vector<16x128xf32>
        %cst_93 = arith.constant 9.99999974E-5 : f32
        %261 = vector.broadcast %cst_93 : f32 to vector<16x128xf32>
        %262 = arith.cmpf oge, %260, %261 : vector<16x128xf32>
        %263 = arith.andi %257, %262 : vector<16x128xi1>
        %264 = arith.xori %257, %263 : vector<16x128xi1>
        %265 = arith.mulf %252, %178 : vector<16x128xf32>
        %cst_94 = arith.constant 0.000000e+00 : f32
        %266 = vector.broadcast %cst_94 : f32 to vector<16x128xf32>
        %267 = arith.select %263, %265, %266 : vector<16x128xi1>, vector<16x128xf32>
        %268 = vector.broadcast %223 : f32 to vector<16x128xf32>
        %269 = arith.mulf %267, %268 : vector<16x128xf32>
        %270 = arith.addf %168, %269 : vector<16x128xf32>
        %271 = vector.broadcast %226 : f32 to vector<16x128xf32>
        %272 = arith.mulf %267, %271 : vector<16x128xf32>
        %273 = arith.addf %171, %272 : vector<16x128xf32>
        %274 = vector.broadcast %229 : f32 to vector<16x128xf32>
        %275 = arith.mulf %267, %274 : vector<16x128xf32>
        %276 = arith.addf %174, %275 : vector<16x128xf32>
        %cst_95 = arith.constant 0.000000e+00 : f32
        %277 = vector.broadcast %cst_95 : f32 to vector<16x128xf32>
        %278 = arith.subf %277, %178 : vector<16x128xf32>
        %279 = arith.select %263, %260, %178 : vector<16x128xi1>, vector<16x128xf32>
        %280 = arith.select %264, %278, %279 : vector<16x128xi1>, vector<16x128xf32>
        %c2_i32_96 = arith.constant 2 : i32
        %c16_i32_97 = arith.constant 16 : i32
        %281 = arith.muli %arg11, %c16_i32_97 : i32
        %282 = arith.addi %281, %c2_i32_96 : i32
        %c4_i32_98 = arith.constant 4 : i32
        %283 = arith.muli %282, %c4_i32_98 : i32
        %c1_i32_99 = arith.constant 1 : i32
        %284 = arith.addi %283, %c1_i32_99 : i32
        %285 = arith.index_cast %284 : i32 to index
        %286 = memref.load %arg3[%285] : memref<256xi32, #tpu.memory_space<smem>>
        %287 = arith.cmpi sge, %286, %13 : i32
        %c0_i32_100 = arith.constant 0 : i32
        %288 = arith.addi %283, %c0_i32_100 : i32
        %289 = arith.index_cast %288 : i32 to index
        %290 = memref.load %arg3[%289] : memref<256xi32, #tpu.memory_space<smem>>
        %291 = arith.cmpi sle, %290, %14 : i32
        %292 = arith.andi %287, %291 : i1
        %c3_i32_101 = arith.constant 3 : i32
        %293 = arith.addi %283, %c3_i32_101 : i32
        %294 = arith.index_cast %293 : i32 to index
        %295 = memref.load %arg3[%294] : memref<256xi32, #tpu.memory_space<smem>>
        %296 = arith.cmpi sge, %295, %0 : i32
        %297 = arith.andi %292, %296 : i1
        %c2_i32_102 = arith.constant 2 : i32
        %298 = arith.addi %283, %c2_i32_102 : i32
        %299 = arith.index_cast %298 : i32 to index
        %300 = memref.load %arg3[%299] : memref<256xi32, #tpu.memory_space<smem>>
        %301 = arith.cmpi sle, %300, %12 : i32
        %302 = arith.andi %297, %301 : i1
        %c9_i32_103 = arith.constant 9 : i32
        %303 = arith.muli %282, %c9_i32_103 : i32
        %c0_i32_104 = arith.constant 0 : i32
        %304 = arith.addi %303, %c0_i32_104 : i32
        %305 = arith.index_cast %304 : i32 to index
        %306 = memref.load %arg4[%305] : memref<576xf32, #tpu.memory_space<smem>>
        %c1_i32_105 = arith.constant 1 : i32
        %307 = arith.addi %303, %c1_i32_105 : i32
        %308 = arith.index_cast %307 : i32 to index
        %309 = memref.load %arg4[%308] : memref<576xf32, #tpu.memory_space<smem>>
        %c2_i32_106 = arith.constant 2 : i32
        %310 = arith.addi %303, %c2_i32_106 : i32
        %311 = arith.index_cast %310 : i32 to index
        %312 = memref.load %arg4[%311] : memref<576xf32, #tpu.memory_space<smem>>
        %c3_i32_107 = arith.constant 3 : i32
        %313 = arith.addi %303, %c3_i32_107 : i32
        %314 = arith.index_cast %313 : i32 to index
        %315 = memref.load %arg4[%314] : memref<576xf32, #tpu.memory_space<smem>>
        %c4_i32_108 = arith.constant 4 : i32
        %316 = arith.addi %303, %c4_i32_108 : i32
        %317 = arith.index_cast %316 : i32 to index
        %318 = memref.load %arg4[%317] : memref<576xf32, #tpu.memory_space<smem>>
        %c5_i32_109 = arith.constant 5 : i32
        %319 = arith.addi %303, %c5_i32_109 : i32
        %320 = arith.index_cast %319 : i32 to index
        %321 = memref.load %arg4[%320] : memref<576xf32, #tpu.memory_space<smem>>
        %cst_110 = arith.constant 0.000000e+00 : f32
        %322 = arith.select %302, %321, %cst_110 : f32
        %c6_i32_111 = arith.constant 6 : i32
        %323 = arith.addi %303, %c6_i32_111 : i32
        %324 = arith.index_cast %323 : i32 to index
        %325 = memref.load %arg4[%324] : memref<576xf32, #tpu.memory_space<smem>>
        %c7_i32_112 = arith.constant 7 : i32
        %326 = arith.addi %303, %c7_i32_112 : i32
        %327 = arith.index_cast %326 : i32 to index
        %328 = memref.load %arg4[%327] : memref<576xf32, #tpu.memory_space<smem>>
        %c8_i32_113 = arith.constant 8 : i32
        %329 = arith.addi %303, %c8_i32_113 : i32
        %330 = arith.index_cast %329 : i32 to index
        %331 = memref.load %arg4[%330] : memref<576xf32, #tpu.memory_space<smem>>
        %332 = vector.broadcast %306 : f32 to vector<16x128xf32>
        %333 = arith.subf %10, %332 : vector<16x128xf32>
        %334 = vector.broadcast %309 : f32 to vector<16x128xf32>
        %335 = arith.subf %11, %334 : vector<16x128xf32>
        %336 = vector.broadcast %312 : f32 to vector<16x128xf32>
        %337 = arith.mulf %336, %333 : vector<16x128xf32>
        %338 = vector.broadcast %315 : f32 to vector<16x128xf32>
        %339 = arith.mulf %338, %335 : vector<16x128xf32>
        %340 = arith.addf %337, %339 : vector<16x128xf32>
        %341 = arith.mulf %333, %340 : vector<16x128xf32>
        %342 = arith.mulf %335, %335 : vector<16x128xf32>
        %343 = vector.broadcast %318 : f32 to vector<16x128xf32>
        %344 = arith.mulf %343, %342 : vector<16x128xf32>
        %345 = arith.addf %341, %344 : vector<16x128xf32>
        %346 = math.exp %345 : vector<16x128xf32>
        %cst_114 = arith.constant 0.000000e+00 : f32
        %347 = vector.broadcast %cst_114 : f32 to vector<16x128xf32>
        %348 = arith.cmpf ole, %345, %347 : vector<16x128xf32>
        %349 = vector.broadcast %322 : f32 to vector<16x128xf32>
        %350 = arith.mulf %349, %346 : vector<16x128xf32>
        %cst_115 = arith.constant 9.900000e-01 : f32
        %351 = vector.broadcast %cst_115 : f32 to vector<16x128xf32>
        %352 = arith.minimumf %351, %350 : vector<16x128xf32>
        %cst_116 = arith.constant 0.000000e+00 : f32
        %353 = vector.broadcast %cst_116 : f32 to vector<16x128xf32>
        %354 = arith.select %348, %352, %353 : vector<16x128xi1>, vector<16x128xf32>
        %cst_117 = arith.constant 0.00392156886 : f32
        %355 = vector.broadcast %cst_117 : f32 to vector<16x128xf32>
        %356 = arith.cmpf oge, %354, %355 : vector<16x128xf32>
        %cst_118 = arith.constant 0.000000e+00 : f32
        %357 = vector.broadcast %cst_118 : f32 to vector<16x128xf32>
        %358 = arith.cmpf ogt, %280, %357 : vector<16x128xf32>
        %359 = arith.andi %356, %358 : vector<16x128xi1>
        %cst_119 = arith.constant 1.000000e+00 : f32
        %360 = vector.broadcast %cst_119 : f32 to vector<16x128xf32>
        %361 = arith.subf %360, %354 : vector<16x128xf32>
        %362 = arith.mulf %280, %361 : vector<16x128xf32>
        %cst_120 = arith.constant 9.99999974E-5 : f32
        %363 = vector.broadcast %cst_120 : f32 to vector<16x128xf32>
        %364 = arith.cmpf oge, %362, %363 : vector<16x128xf32>
        %365 = arith.andi %359, %364 : vector<16x128xi1>
        %366 = arith.xori %359, %365 : vector<16x128xi1>
        %367 = arith.mulf %354, %280 : vector<16x128xf32>
        %cst_121 = arith.constant 0.000000e+00 : f32
        %368 = vector.broadcast %cst_121 : f32 to vector<16x128xf32>
        %369 = arith.select %365, %367, %368 : vector<16x128xi1>, vector<16x128xf32>
        %370 = vector.broadcast %325 : f32 to vector<16x128xf32>
        %371 = arith.mulf %369, %370 : vector<16x128xf32>
        %372 = arith.addf %270, %371 : vector<16x128xf32>
        %373 = vector.broadcast %328 : f32 to vector<16x128xf32>
        %374 = arith.mulf %369, %373 : vector<16x128xf32>
        %375 = arith.addf %273, %374 : vector<16x128xf32>
        %376 = vector.broadcast %331 : f32 to vector<16x128xf32>
        %377 = arith.mulf %369, %376 : vector<16x128xf32>
        %378 = arith.addf %276, %377 : vector<16x128xf32>
        %cst_122 = arith.constant 0.000000e+00 : f32
        %379 = vector.broadcast %cst_122 : f32 to vector<16x128xf32>
        %380 = arith.subf %379, %280 : vector<16x128xf32>
        %381 = arith.select %365, %362, %280 : vector<16x128xi1>, vector<16x128xf32>
        %382 = arith.select %366, %380, %381 : vector<16x128xi1>, vector<16x128xf32>
        %c3_i32_123 = arith.constant 3 : i32
        %c16_i32_124 = arith.constant 16 : i32
        %383 = arith.muli %arg11, %c16_i32_124 : i32
        %384 = arith.addi %383, %c3_i32_123 : i32
        %c4_i32_125 = arith.constant 4 : i32
        %385 = arith.muli %384, %c4_i32_125 : i32
        %c1_i32_126 = arith.constant 1 : i32
        %386 = arith.addi %385, %c1_i32_126 : i32
        %387 = arith.index_cast %386 : i32 to index
        %388 = memref.load %arg3[%387] : memref<256xi32, #tpu.memory_space<smem>>
        %389 = arith.cmpi sge, %388, %13 : i32
        %c0_i32_127 = arith.constant 0 : i32
        %390 = arith.addi %385, %c0_i32_127 : i32
        %391 = arith.index_cast %390 : i32 to index
        %392 = memref.load %arg3[%391] : memref<256xi32, #tpu.memory_space<smem>>
        %393 = arith.cmpi sle, %392, %14 : i32
        %394 = arith.andi %389, %393 : i1
        %c3_i32_128 = arith.constant 3 : i32
        %395 = arith.addi %385, %c3_i32_128 : i32
        %396 = arith.index_cast %395 : i32 to index
        %397 = memref.load %arg3[%396] : memref<256xi32, #tpu.memory_space<smem>>
        %398 = arith.cmpi sge, %397, %0 : i32
        %399 = arith.andi %394, %398 : i1
        %c2_i32_129 = arith.constant 2 : i32
        %400 = arith.addi %385, %c2_i32_129 : i32
        %401 = arith.index_cast %400 : i32 to index
        %402 = memref.load %arg3[%401] : memref<256xi32, #tpu.memory_space<smem>>
        %403 = arith.cmpi sle, %402, %12 : i32
        %404 = arith.andi %399, %403 : i1
        %c9_i32_130 = arith.constant 9 : i32
        %405 = arith.muli %384, %c9_i32_130 : i32
        %c0_i32_131 = arith.constant 0 : i32
        %406 = arith.addi %405, %c0_i32_131 : i32
        %407 = arith.index_cast %406 : i32 to index
        %408 = memref.load %arg4[%407] : memref<576xf32, #tpu.memory_space<smem>>
        %c1_i32_132 = arith.constant 1 : i32
        %409 = arith.addi %405, %c1_i32_132 : i32
        %410 = arith.index_cast %409 : i32 to index
        %411 = memref.load %arg4[%410] : memref<576xf32, #tpu.memory_space<smem>>
        %c2_i32_133 = arith.constant 2 : i32
        %412 = arith.addi %405, %c2_i32_133 : i32
        %413 = arith.index_cast %412 : i32 to index
        %414 = memref.load %arg4[%413] : memref<576xf32, #tpu.memory_space<smem>>
        %c3_i32_134 = arith.constant 3 : i32
        %415 = arith.addi %405, %c3_i32_134 : i32
        %416 = arith.index_cast %415 : i32 to index
        %417 = memref.load %arg4[%416] : memref<576xf32, #tpu.memory_space<smem>>
        %c4_i32_135 = arith.constant 4 : i32
        %418 = arith.addi %405, %c4_i32_135 : i32
        %419 = arith.index_cast %418 : i32 to index
        %420 = memref.load %arg4[%419] : memref<576xf32, #tpu.memory_space<smem>>
        %c5_i32_136 = arith.constant 5 : i32
        %421 = arith.addi %405, %c5_i32_136 : i32
        %422 = arith.index_cast %421 : i32 to index
        %423 = memref.load %arg4[%422] : memref<576xf32, #tpu.memory_space<smem>>
        %cst_137 = arith.constant 0.000000e+00 : f32
        %424 = arith.select %404, %423, %cst_137 : f32
        %c6_i32_138 = arith.constant 6 : i32
        %425 = arith.addi %405, %c6_i32_138 : i32
        %426 = arith.index_cast %425 : i32 to index
        %427 = memref.load %arg4[%426] : memref<576xf32, #tpu.memory_space<smem>>
        %c7_i32_139 = arith.constant 7 : i32
        %428 = arith.addi %405, %c7_i32_139 : i32
        %429 = arith.index_cast %428 : i32 to index
        %430 = memref.load %arg4[%429] : memref<576xf32, #tpu.memory_space<smem>>
        %c8_i32_140 = arith.constant 8 : i32
        %431 = arith.addi %405, %c8_i32_140 : i32
        %432 = arith.index_cast %431 : i32 to index
        %433 = memref.load %arg4[%432] : memref<576xf32, #tpu.memory_space<smem>>
        %434 = vector.broadcast %408 : f32 to vector<16x128xf32>
        %435 = arith.subf %10, %434 : vector<16x128xf32>
        %436 = vector.broadcast %411 : f32 to vector<16x128xf32>
        %437 = arith.subf %11, %436 : vector<16x128xf32>
        %438 = vector.broadcast %414 : f32 to vector<16x128xf32>
        %439 = arith.mulf %438, %435 : vector<16x128xf32>
        %440 = vector.broadcast %417 : f32 to vector<16x128xf32>
        %441 = arith.mulf %440, %437 : vector<16x128xf32>
        %442 = arith.addf %439, %441 : vector<16x128xf32>
        %443 = arith.mulf %435, %442 : vector<16x128xf32>
        %444 = arith.mulf %437, %437 : vector<16x128xf32>
        %445 = vector.broadcast %420 : f32 to vector<16x128xf32>
        %446 = arith.mulf %445, %444 : vector<16x128xf32>
        %447 = arith.addf %443, %446 : vector<16x128xf32>
        %448 = math.exp %447 : vector<16x128xf32>
        %cst_141 = arith.constant 0.000000e+00 : f32
        %449 = vector.broadcast %cst_141 : f32 to vector<16x128xf32>
        %450 = arith.cmpf ole, %447, %449 : vector<16x128xf32>
        %451 = vector.broadcast %424 : f32 to vector<16x128xf32>
        %452 = arith.mulf %451, %448 : vector<16x128xf32>
        %cst_142 = arith.constant 9.900000e-01 : f32
        %453 = vector.broadcast %cst_142 : f32 to vector<16x128xf32>
        %454 = arith.minimumf %453, %452 : vector<16x128xf32>
        %cst_143 = arith.constant 0.000000e+00 : f32
        %455 = vector.broadcast %cst_143 : f32 to vector<16x128xf32>
        %456 = arith.select %450, %454, %455 : vector<16x128xi1>, vector<16x128xf32>
        %cst_144 = arith.constant 0.00392156886 : f32
        %457 = vector.broadcast %cst_144 : f32 to vector<16x128xf32>
        %458 = arith.cmpf oge, %456, %457 : vector<16x128xf32>
        %cst_145 = arith.constant 0.000000e+00 : f32
        %459 = vector.broadcast %cst_145 : f32 to vector<16x128xf32>
        %460 = arith.cmpf ogt, %382, %459 : vector<16x128xf32>
        %461 = arith.andi %458, %460 : vector<16x128xi1>
        %cst_146 = arith.constant 1.000000e+00 : f32
        %462 = vector.broadcast %cst_146 : f32 to vector<16x128xf32>
        %463 = arith.subf %462, %456 : vector<16x128xf32>
        %464 = arith.mulf %382, %463 : vector<16x128xf32>
        %cst_147 = arith.constant 9.99999974E-5 : f32
        %465 = vector.broadcast %cst_147 : f32 to vector<16x128xf32>
        %466 = arith.cmpf oge, %464, %465 : vector<16x128xf32>
        %467 = arith.andi %461, %466 : vector<16x128xi1>
        %468 = arith.xori %461, %467 : vector<16x128xi1>
        %469 = arith.mulf %456, %382 : vector<16x128xf32>
        %cst_148 = arith.constant 0.000000e+00 : f32
        %470 = vector.broadcast %cst_148 : f32 to vector<16x128xf32>
        %471 = arith.select %467, %469, %470 : vector<16x128xi1>, vector<16x128xf32>
        %472 = vector.broadcast %427 : f32 to vector<16x128xf32>
        %473 = arith.mulf %471, %472 : vector<16x128xf32>
        %474 = arith.addf %372, %473 : vector<16x128xf32>
        %475 = vector.broadcast %430 : f32 to vector<16x128xf32>
        %476 = arith.mulf %471, %475 : vector<16x128xf32>
        %477 = arith.addf %375, %476 : vector<16x128xf32>
        %478 = vector.broadcast %433 : f32 to vector<16x128xf32>
        %479 = arith.mulf %471, %478 : vector<16x128xf32>
        %480 = arith.addf %378, %479 : vector<16x128xf32>
        %cst_149 = arith.constant 0.000000e+00 : f32
        %481 = vector.broadcast %cst_149 : f32 to vector<16x128xf32>
        %482 = arith.subf %481, %382 : vector<16x128xf32>
        %483 = arith.select %467, %464, %382 : vector<16x128xi1>, vector<16x128xf32>
        %484 = arith.select %468, %482, %483 : vector<16x128xi1>, vector<16x128xf32>
        %c4_i32_150 = arith.constant 4 : i32
        %c16_i32_151 = arith.constant 16 : i32
        %485 = arith.muli %arg11, %c16_i32_151 : i32
        %486 = arith.addi %485, %c4_i32_150 : i32
        %c4_i32_152 = arith.constant 4 : i32
        %487 = arith.muli %486, %c4_i32_152 : i32
        %c1_i32_153 = arith.constant 1 : i32
        %488 = arith.addi %487, %c1_i32_153 : i32
        %489 = arith.index_cast %488 : i32 to index
        %490 = memref.load %arg3[%489] : memref<256xi32, #tpu.memory_space<smem>>
        %491 = arith.cmpi sge, %490, %13 : i32
        %c0_i32_154 = arith.constant 0 : i32
        %492 = arith.addi %487, %c0_i32_154 : i32
        %493 = arith.index_cast %492 : i32 to index
        %494 = memref.load %arg3[%493] : memref<256xi32, #tpu.memory_space<smem>>
        %495 = arith.cmpi sle, %494, %14 : i32
        %496 = arith.andi %491, %495 : i1
        %c3_i32_155 = arith.constant 3 : i32
        %497 = arith.addi %487, %c3_i32_155 : i32
        %498 = arith.index_cast %497 : i32 to index
        %499 = memref.load %arg3[%498] : memref<256xi32, #tpu.memory_space<smem>>
        %500 = arith.cmpi sge, %499, %0 : i32
        %501 = arith.andi %496, %500 : i1
        %c2_i32_156 = arith.constant 2 : i32
        %502 = arith.addi %487, %c2_i32_156 : i32
        %503 = arith.index_cast %502 : i32 to index
        %504 = memref.load %arg3[%503] : memref<256xi32, #tpu.memory_space<smem>>
        %505 = arith.cmpi sle, %504, %12 : i32
        %506 = arith.andi %501, %505 : i1
        %c9_i32_157 = arith.constant 9 : i32
        %507 = arith.muli %486, %c9_i32_157 : i32
        %c0_i32_158 = arith.constant 0 : i32
        %508 = arith.addi %507, %c0_i32_158 : i32
        %509 = arith.index_cast %508 : i32 to index
        %510 = memref.load %arg4[%509] : memref<576xf32, #tpu.memory_space<smem>>
        %c1_i32_159 = arith.constant 1 : i32
        %511 = arith.addi %507, %c1_i32_159 : i32
        %512 = arith.index_cast %511 : i32 to index
        %513 = memref.load %arg4[%512] : memref<576xf32, #tpu.memory_space<smem>>
        %c2_i32_160 = arith.constant 2 : i32
        %514 = arith.addi %507, %c2_i32_160 : i32
        %515 = arith.index_cast %514 : i32 to index
        %516 = memref.load %arg4[%515] : memref<576xf32, #tpu.memory_space<smem>>
        %c3_i32_161 = arith.constant 3 : i32
        %517 = arith.addi %507, %c3_i32_161 : i32
        %518 = arith.index_cast %517 : i32 to index
        %519 = memref.load %arg4[%518] : memref<576xf32, #tpu.memory_space<smem>>
        %c4_i32_162 = arith.constant 4 : i32
        %520 = arith.addi %507, %c4_i32_162 : i32
        %521 = arith.index_cast %520 : i32 to index
        %522 = memref.load %arg4[%521] : memref<576xf32, #tpu.memory_space<smem>>
        %c5_i32_163 = arith.constant 5 : i32
        %523 = arith.addi %507, %c5_i32_163 : i32
        %524 = arith.index_cast %523 : i32 to index
        %525 = memref.load %arg4[%524] : memref<576xf32, #tpu.memory_space<smem>>
        %cst_164 = arith.constant 0.000000e+00 : f32
        %526 = arith.select %506, %525, %cst_164 : f32
        %c6_i32_165 = arith.constant 6 : i32
        %527 = arith.addi %507, %c6_i32_165 : i32
        %528 = arith.index_cast %527 : i32 to index
        %529 = memref.load %arg4[%528] : memref<576xf32, #tpu.memory_space<smem>>
        %c7_i32_166 = arith.constant 7 : i32
        %530 = arith.addi %507, %c7_i32_166 : i32
        %531 = arith.index_cast %530 : i32 to index
        %532 = memref.load %arg4[%531] : memref<576xf32, #tpu.memory_space<smem>>
        %c8_i32_167 = arith.constant 8 : i32
        %533 = arith.addi %507, %c8_i32_167 : i32
        %534 = arith.index_cast %533 : i32 to index
        %535 = memref.load %arg4[%534] : memref<576xf32, #tpu.memory_space<smem>>
        %536 = vector.broadcast %510 : f32 to vector<16x128xf32>
        %537 = arith.subf %10, %536 : vector<16x128xf32>
        %538 = vector.broadcast %513 : f32 to vector<16x128xf32>
        %539 = arith.subf %11, %538 : vector<16x128xf32>
        %540 = vector.broadcast %516 : f32 to vector<16x128xf32>
        %541 = arith.mulf %540, %537 : vector<16x128xf32>
        %542 = vector.broadcast %519 : f32 to vector<16x128xf32>
        %543 = arith.mulf %542, %539 : vector<16x128xf32>
        %544 = arith.addf %541, %543 : vector<16x128xf32>
        %545 = arith.mulf %537, %544 : vector<16x128xf32>
        %546 = arith.mulf %539, %539 : vector<16x128xf32>
        %547 = vector.broadcast %522 : f32 to vector<16x128xf32>
        %548 = arith.mulf %547, %546 : vector<16x128xf32>
        %549 = arith.addf %545, %548 : vector<16x128xf32>
        %550 = math.exp %549 : vector<16x128xf32>
        %cst_168 = arith.constant 0.000000e+00 : f32
        %551 = vector.broadcast %cst_168 : f32 to vector<16x128xf32>
        %552 = arith.cmpf ole, %549, %551 : vector<16x128xf32>
        %553 = vector.broadcast %526 : f32 to vector<16x128xf32>
        %554 = arith.mulf %553, %550 : vector<16x128xf32>
        %cst_169 = arith.constant 9.900000e-01 : f32
        %555 = vector.broadcast %cst_169 : f32 to vector<16x128xf32>
        %556 = arith.minimumf %555, %554 : vector<16x128xf32>
        %cst_170 = arith.constant 0.000000e+00 : f32
        %557 = vector.broadcast %cst_170 : f32 to vector<16x128xf32>
        %558 = arith.select %552, %556, %557 : vector<16x128xi1>, vector<16x128xf32>
        %cst_171 = arith.constant 0.00392156886 : f32
        %559 = vector.broadcast %cst_171 : f32 to vector<16x128xf32>
        %560 = arith.cmpf oge, %558, %559 : vector<16x128xf32>
        %cst_172 = arith.constant 0.000000e+00 : f32
        %561 = vector.broadcast %cst_172 : f32 to vector<16x128xf32>
        %562 = arith.cmpf ogt, %484, %561 : vector<16x128xf32>
        %563 = arith.andi %560, %562 : vector<16x128xi1>
        %cst_173 = arith.constant 1.000000e+00 : f32
        %564 = vector.broadcast %cst_173 : f32 to vector<16x128xf32>
        %565 = arith.subf %564, %558 : vector<16x128xf32>
        %566 = arith.mulf %484, %565 : vector<16x128xf32>
        %cst_174 = arith.constant 9.99999974E-5 : f32
        %567 = vector.broadcast %cst_174 : f32 to vector<16x128xf32>
        %568 = arith.cmpf oge, %566, %567 : vector<16x128xf32>
        %569 = arith.andi %563, %568 : vector<16x128xi1>
        %570 = arith.xori %563, %569 : vector<16x128xi1>
        %571 = arith.mulf %558, %484 : vector<16x128xf32>
        %cst_175 = arith.constant 0.000000e+00 : f32
        %572 = vector.broadcast %cst_175 : f32 to vector<16x128xf32>
        %573 = arith.select %569, %571, %572 : vector<16x128xi1>, vector<16x128xf32>
        %574 = vector.broadcast %529 : f32 to vector<16x128xf32>
        %575 = arith.mulf %573, %574 : vector<16x128xf32>
        %576 = arith.addf %474, %575 : vector<16x128xf32>
        %577 = vector.broadcast %532 : f32 to vector<16x128xf32>
        %578 = arith.mulf %573, %577 : vector<16x128xf32>
        %579 = arith.addf %477, %578 : vector<16x128xf32>
        %580 = vector.broadcast %535 : f32 to vector<16x128xf32>
        %581 = arith.mulf %573, %580 : vector<16x128xf32>
        %582 = arith.addf %480, %581 : vector<16x128xf32>
        %cst_176 = arith.constant 0.000000e+00 : f32
        %583 = vector.broadcast %cst_176 : f32 to vector<16x128xf32>
        %584 = arith.subf %583, %484 : vector<16x128xf32>
        %585 = arith.select %569, %566, %484 : vector<16x128xi1>, vector<16x128xf32>
        %586 = arith.select %570, %584, %585 : vector<16x128xi1>, vector<16x128xf32>
        %c5_i32_177 = arith.constant 5 : i32
        %c16_i32_178 = arith.constant 16 : i32
        %587 = arith.muli %arg11, %c16_i32_178 : i32
        %588 = arith.addi %587, %c5_i32_177 : i32
        %c4_i32_179 = arith.constant 4 : i32
        %589 = arith.muli %588, %c4_i32_179 : i32
        %c1_i32_180 = arith.constant 1 : i32
        %590 = arith.addi %589, %c1_i32_180 : i32
        %591 = arith.index_cast %590 : i32 to index
        %592 = memref.load %arg3[%591] : memref<256xi32, #tpu.memory_space<smem>>
        %593 = arith.cmpi sge, %592, %13 : i32
        %c0_i32_181 = arith.constant 0 : i32
        %594 = arith.addi %589, %c0_i32_181 : i32
        %595 = arith.index_cast %594 : i32 to index
        %596 = memref.load %arg3[%595] : memref<256xi32, #tpu.memory_space<smem>>
        %597 = arith.cmpi sle, %596, %14 : i32
        %598 = arith.andi %593, %597 : i1
        %c3_i32_182 = arith.constant 3 : i32
        %599 = arith.addi %589, %c3_i32_182 : i32
        %600 = arith.index_cast %599 : i32 to index
        %601 = memref.load %arg3[%600] : memref<256xi32, #tpu.memory_space<smem>>
        %602 = arith.cmpi sge, %601, %0 : i32
        %603 = arith.andi %598, %602 : i1
        %c2_i32_183 = arith.constant 2 : i32
        %604 = arith.addi %589, %c2_i32_183 : i32
        %605 = arith.index_cast %604 : i32 to index
        %606 = memref.load %arg3[%605] : memref<256xi32, #tpu.memory_space<smem>>
        %607 = arith.cmpi sle, %606, %12 : i32
        %608 = arith.andi %603, %607 : i1
        %c9_i32_184 = arith.constant 9 : i32
        %609 = arith.muli %588, %c9_i32_184 : i32
        %c0_i32_185 = arith.constant 0 : i32
        %610 = arith.addi %609, %c0_i32_185 : i32
        %611 = arith.index_cast %610 : i32 to index
        %612 = memref.load %arg4[%611] : memref<576xf32, #tpu.memory_space<smem>>
        %c1_i32_186 = arith.constant 1 : i32
        %613 = arith.addi %609, %c1_i32_186 : i32
        %614 = arith.index_cast %613 : i32 to index
        %615 = memref.load %arg4[%614] : memref<576xf32, #tpu.memory_space<smem>>
        %c2_i32_187 = arith.constant 2 : i32
        %616 = arith.addi %609, %c2_i32_187 : i32
        %617 = arith.index_cast %616 : i32 to index
        %618 = memref.load %arg4[%617] : memref<576xf32, #tpu.memory_space<smem>>
        %c3_i32_188 = arith.constant 3 : i32
        %619 = arith.addi %609, %c3_i32_188 : i32
        %620 = arith.index_cast %619 : i32 to index
        %621 = memref.load %arg4[%620] : memref<576xf32, #tpu.memory_space<smem>>
        %c4_i32_189 = arith.constant 4 : i32
        %622 = arith.addi %609, %c4_i32_189 : i32
        %623 = arith.index_cast %622 : i32 to index
        %624 = memref.load %arg4[%623] : memref<576xf32, #tpu.memory_space<smem>>
        %c5_i32_190 = arith.constant 5 : i32
        %625 = arith.addi %609, %c5_i32_190 : i32
        %626 = arith.index_cast %625 : i32 to index
        %627 = memref.load %arg4[%626] : memref<576xf32, #tpu.memory_space<smem>>
        %cst_191 = arith.constant 0.000000e+00 : f32
        %628 = arith.select %608, %627, %cst_191 : f32
        %c6_i32_192 = arith.constant 6 : i32
        %629 = arith.addi %609, %c6_i32_192 : i32
        %630 = arith.index_cast %629 : i32 to index
        %631 = memref.load %arg4[%630] : memref<576xf32, #tpu.memory_space<smem>>
        %c7_i32_193 = arith.constant 7 : i32
        %632 = arith.addi %609, %c7_i32_193 : i32
        %633 = arith.index_cast %632 : i32 to index
        %634 = memref.load %arg4[%633] : memref<576xf32, #tpu.memory_space<smem>>
        %c8_i32_194 = arith.constant 8 : i32
        %635 = arith.addi %609, %c8_i32_194 : i32
        %636 = arith.index_cast %635 : i32 to index
        %637 = memref.load %arg4[%636] : memref<576xf32, #tpu.memory_space<smem>>
        %638 = vector.broadcast %612 : f32 to vector<16x128xf32>
        %639 = arith.subf %10, %638 : vector<16x128xf32>
        %640 = vector.broadcast %615 : f32 to vector<16x128xf32>
        %641 = arith.subf %11, %640 : vector<16x128xf32>
        %642 = vector.broadcast %618 : f32 to vector<16x128xf32>
        %643 = arith.mulf %642, %639 : vector<16x128xf32>
        %644 = vector.broadcast %621 : f32 to vector<16x128xf32>
        %645 = arith.mulf %644, %641 : vector<16x128xf32>
        %646 = arith.addf %643, %645 : vector<16x128xf32>
        %647 = arith.mulf %639, %646 : vector<16x128xf32>
        %648 = arith.mulf %641, %641 : vector<16x128xf32>
        %649 = vector.broadcast %624 : f32 to vector<16x128xf32>
        %650 = arith.mulf %649, %648 : vector<16x128xf32>
        %651 = arith.addf %647, %650 : vector<16x128xf32>
        %652 = math.exp %651 : vector<16x128xf32>
        %cst_195 = arith.constant 0.000000e+00 : f32
        %653 = vector.broadcast %cst_195 : f32 to vector<16x128xf32>
        %654 = arith.cmpf ole, %651, %653 : vector<16x128xf32>
        %655 = vector.broadcast %628 : f32 to vector<16x128xf32>
        %656 = arith.mulf %655, %652 : vector<16x128xf32>
        %cst_196 = arith.constant 9.900000e-01 : f32
        %657 = vector.broadcast %cst_196 : f32 to vector<16x128xf32>
        %658 = arith.minimumf %657, %656 : vector<16x128xf32>
        %cst_197 = arith.constant 0.000000e+00 : f32
        %659 = vector.broadcast %cst_197 : f32 to vector<16x128xf32>
        %660 = arith.select %654, %658, %659 : vector<16x128xi1>, vector<16x128xf32>
        %cst_198 = arith.constant 0.00392156886 : f32
        %661 = vector.broadcast %cst_198 : f32 to vector<16x128xf32>
        %662 = arith.cmpf oge, %660, %661 : vector<16x128xf32>
        %cst_199 = arith.constant 0.000000e+00 : f32
        %663 = vector.broadcast %cst_199 : f32 to vector<16x128xf32>
        %664 = arith.cmpf ogt, %586, %663 : vector<16x128xf32>
        %665 = arith.andi %662, %664 : vector<16x128xi1>
        %cst_200 = arith.constant 1.000000e+00 : f32
        %666 = vector.broadcast %cst_200 : f32 to vector<16x128xf32>
        %667 = arith.subf %666, %660 : vector<16x128xf32>
        %668 = arith.mulf %586, %667 : vector<16x128xf32>
        %cst_201 = arith.constant 9.99999974E-5 : f32
        %669 = vector.broadcast %cst_201 : f32 to vector<16x128xf32>
        %670 = arith.cmpf oge, %668, %669 : vector<16x128xf32>
        %671 = arith.andi %665, %670 : vector<16x128xi1>
        %672 = arith.xori %665, %671 : vector<16x128xi1>
        %673 = arith.mulf %660, %586 : vector<16x128xf32>
        %cst_202 = arith.constant 0.000000e+00 : f32
        %674 = vector.broadcast %cst_202 : f32 to vector<16x128xf32>
        %675 = arith.select %671, %673, %674 : vector<16x128xi1>, vector<16x128xf32>
        %676 = vector.broadcast %631 : f32 to vector<16x128xf32>
        %677 = arith.mulf %675, %676 : vector<16x128xf32>
        %678 = arith.addf %576, %677 : vector<16x128xf32>
        %679 = vector.broadcast %634 : f32 to vector<16x128xf32>
        %680 = arith.mulf %675, %679 : vector<16x128xf32>
        %681 = arith.addf %579, %680 : vector<16x128xf32>
        %682 = vector.broadcast %637 : f32 to vector<16x128xf32>
        %683 = arith.mulf %675, %682 : vector<16x128xf32>
        %684 = arith.addf %582, %683 : vector<16x128xf32>
        %cst_203 = arith.constant 0.000000e+00 : f32
        %685 = vector.broadcast %cst_203 : f32 to vector<16x128xf32>
        %686 = arith.subf %685, %586 : vector<16x128xf32>
        %687 = arith.select %671, %668, %586 : vector<16x128xi1>, vector<16x128xf32>
        %688 = arith.select %672, %686, %687 : vector<16x128xi1>, vector<16x128xf32>
        %c6_i32_204 = arith.constant 6 : i32
        %c16_i32_205 = arith.constant 16 : i32
        %689 = arith.muli %arg11, %c16_i32_205 : i32
        %690 = arith.addi %689, %c6_i32_204 : i32
        %c4_i32_206 = arith.constant 4 : i32
        %691 = arith.muli %690, %c4_i32_206 : i32
        %c1_i32_207 = arith.constant 1 : i32
        %692 = arith.addi %691, %c1_i32_207 : i32
        %693 = arith.index_cast %692 : i32 to index
        %694 = memref.load %arg3[%693] : memref<256xi32, #tpu.memory_space<smem>>
        %695 = arith.cmpi sge, %694, %13 : i32
        %c0_i32_208 = arith.constant 0 : i32
        %696 = arith.addi %691, %c0_i32_208 : i32
        %697 = arith.index_cast %696 : i32 to index
        %698 = memref.load %arg3[%697] : memref<256xi32, #tpu.memory_space<smem>>
        %699 = arith.cmpi sle, %698, %14 : i32
        %700 = arith.andi %695, %699 : i1
        %c3_i32_209 = arith.constant 3 : i32
        %701 = arith.addi %691, %c3_i32_209 : i32
        %702 = arith.index_cast %701 : i32 to index
        %703 = memref.load %arg3[%702] : memref<256xi32, #tpu.memory_space<smem>>
        %704 = arith.cmpi sge, %703, %0 : i32
        %705 = arith.andi %700, %704 : i1
        %c2_i32_210 = arith.constant 2 : i32
        %706 = arith.addi %691, %c2_i32_210 : i32
        %707 = arith.index_cast %706 : i32 to index
        %708 = memref.load %arg3[%707] : memref<256xi32, #tpu.memory_space<smem>>
        %709 = arith.cmpi sle, %708, %12 : i32
        %710 = arith.andi %705, %709 : i1
        %c9_i32_211 = arith.constant 9 : i32
        %711 = arith.muli %690, %c9_i32_211 : i32
        %c0_i32_212 = arith.constant 0 : i32
        %712 = arith.addi %711, %c0_i32_212 : i32
        %713 = arith.index_cast %712 : i32 to index
        %714 = memref.load %arg4[%713] : memref<576xf32, #tpu.memory_space<smem>>
        %c1_i32_213 = arith.constant 1 : i32
        %715 = arith.addi %711, %c1_i32_213 : i32
        %716 = arith.index_cast %715 : i32 to index
        %717 = memref.load %arg4[%716] : memref<576xf32, #tpu.memory_space<smem>>
        %c2_i32_214 = arith.constant 2 : i32
        %718 = arith.addi %711, %c2_i32_214 : i32
        %719 = arith.index_cast %718 : i32 to index
        %720 = memref.load %arg4[%719] : memref<576xf32, #tpu.memory_space<smem>>
        %c3_i32_215 = arith.constant 3 : i32
        %721 = arith.addi %711, %c3_i32_215 : i32
        %722 = arith.index_cast %721 : i32 to index
        %723 = memref.load %arg4[%722] : memref<576xf32, #tpu.memory_space<smem>>
        %c4_i32_216 = arith.constant 4 : i32
        %724 = arith.addi %711, %c4_i32_216 : i32
        %725 = arith.index_cast %724 : i32 to index
        %726 = memref.load %arg4[%725] : memref<576xf32, #tpu.memory_space<smem>>
        %c5_i32_217 = arith.constant 5 : i32
        %727 = arith.addi %711, %c5_i32_217 : i32
        %728 = arith.index_cast %727 : i32 to index
        %729 = memref.load %arg4[%728] : memref<576xf32, #tpu.memory_space<smem>>
        %cst_218 = arith.constant 0.000000e+00 : f32
        %730 = arith.select %710, %729, %cst_218 : f32
        %c6_i32_219 = arith.constant 6 : i32
        %731 = arith.addi %711, %c6_i32_219 : i32
        %732 = arith.index_cast %731 : i32 to index
        %733 = memref.load %arg4[%732] : memref<576xf32, #tpu.memory_space<smem>>
        %c7_i32_220 = arith.constant 7 : i32
        %734 = arith.addi %711, %c7_i32_220 : i32
        %735 = arith.index_cast %734 : i32 to index
        %736 = memref.load %arg4[%735] : memref<576xf32, #tpu.memory_space<smem>>
        %c8_i32_221 = arith.constant 8 : i32
        %737 = arith.addi %711, %c8_i32_221 : i32
        %738 = arith.index_cast %737 : i32 to index
        %739 = memref.load %arg4[%738] : memref<576xf32, #tpu.memory_space<smem>>
        %740 = vector.broadcast %714 : f32 to vector<16x128xf32>
        %741 = arith.subf %10, %740 : vector<16x128xf32>
        %742 = vector.broadcast %717 : f32 to vector<16x128xf32>
        %743 = arith.subf %11, %742 : vector<16x128xf32>
        %744 = vector.broadcast %720 : f32 to vector<16x128xf32>
        %745 = arith.mulf %744, %741 : vector<16x128xf32>
        %746 = vector.broadcast %723 : f32 to vector<16x128xf32>
        %747 = arith.mulf %746, %743 : vector<16x128xf32>
        %748 = arith.addf %745, %747 : vector<16x128xf32>
        %749 = arith.mulf %741, %748 : vector<16x128xf32>
        %750 = arith.mulf %743, %743 : vector<16x128xf32>
        %751 = vector.broadcast %726 : f32 to vector<16x128xf32>
        %752 = arith.mulf %751, %750 : vector<16x128xf32>
        %753 = arith.addf %749, %752 : vector<16x128xf32>
        %754 = math.exp %753 : vector<16x128xf32>
        %cst_222 = arith.constant 0.000000e+00 : f32
        %755 = vector.broadcast %cst_222 : f32 to vector<16x128xf32>
        %756 = arith.cmpf ole, %753, %755 : vector<16x128xf32>
        %757 = vector.broadcast %730 : f32 to vector<16x128xf32>
        %758 = arith.mulf %757, %754 : vector<16x128xf32>
        %cst_223 = arith.constant 9.900000e-01 : f32
        %759 = vector.broadcast %cst_223 : f32 to vector<16x128xf32>
        %760 = arith.minimumf %759, %758 : vector<16x128xf32>
        %cst_224 = arith.constant 0.000000e+00 : f32
        %761 = vector.broadcast %cst_224 : f32 to vector<16x128xf32>
        %762 = arith.select %756, %760, %761 : vector<16x128xi1>, vector<16x128xf32>
        %cst_225 = arith.constant 0.00392156886 : f32
        %763 = vector.broadcast %cst_225 : f32 to vector<16x128xf32>
        %764 = arith.cmpf oge, %762, %763 : vector<16x128xf32>
        %cst_226 = arith.constant 0.000000e+00 : f32
        %765 = vector.broadcast %cst_226 : f32 to vector<16x128xf32>
        %766 = arith.cmpf ogt, %688, %765 : vector<16x128xf32>
        %767 = arith.andi %764, %766 : vector<16x128xi1>
        %cst_227 = arith.constant 1.000000e+00 : f32
        %768 = vector.broadcast %cst_227 : f32 to vector<16x128xf32>
        %769 = arith.subf %768, %762 : vector<16x128xf32>
        %770 = arith.mulf %688, %769 : vector<16x128xf32>
        %cst_228 = arith.constant 9.99999974E-5 : f32
        %771 = vector.broadcast %cst_228 : f32 to vector<16x128xf32>
        %772 = arith.cmpf oge, %770, %771 : vector<16x128xf32>
        %773 = arith.andi %767, %772 : vector<16x128xi1>
        %774 = arith.xori %767, %773 : vector<16x128xi1>
        %775 = arith.mulf %762, %688 : vector<16x128xf32>
        %cst_229 = arith.constant 0.000000e+00 : f32
        %776 = vector.broadcast %cst_229 : f32 to vector<16x128xf32>
        %777 = arith.select %773, %775, %776 : vector<16x128xi1>, vector<16x128xf32>
        %778 = vector.broadcast %733 : f32 to vector<16x128xf32>
        %779 = arith.mulf %777, %778 : vector<16x128xf32>
        %780 = arith.addf %678, %779 : vector<16x128xf32>
        %781 = vector.broadcast %736 : f32 to vector<16x128xf32>
        %782 = arith.mulf %777, %781 : vector<16x128xf32>
        %783 = arith.addf %681, %782 : vector<16x128xf32>
        %784 = vector.broadcast %739 : f32 to vector<16x128xf32>
        %785 = arith.mulf %777, %784 : vector<16x128xf32>
        %786 = arith.addf %684, %785 : vector<16x128xf32>
        %cst_230 = arith.constant 0.000000e+00 : f32
        %787 = vector.broadcast %cst_230 : f32 to vector<16x128xf32>
        %788 = arith.subf %787, %688 : vector<16x128xf32>
        %789 = arith.select %773, %770, %688 : vector<16x128xi1>, vector<16x128xf32>
        %790 = arith.select %774, %788, %789 : vector<16x128xi1>, vector<16x128xf32>
        %c7_i32_231 = arith.constant 7 : i32
        %c16_i32_232 = arith.constant 16 : i32
        %791 = arith.muli %arg11, %c16_i32_232 : i32
        %792 = arith.addi %791, %c7_i32_231 : i32
        %c4_i32_233 = arith.constant 4 : i32
        %793 = arith.muli %792, %c4_i32_233 : i32
        %c1_i32_234 = arith.constant 1 : i32
        %794 = arith.addi %793, %c1_i32_234 : i32
        %795 = arith.index_cast %794 : i32 to index
        %796 = memref.load %arg3[%795] : memref<256xi32, #tpu.memory_space<smem>>
        %797 = arith.cmpi sge, %796, %13 : i32
        %c0_i32_235 = arith.constant 0 : i32
        %798 = arith.addi %793, %c0_i32_235 : i32
        %799 = arith.index_cast %798 : i32 to index
        %800 = memref.load %arg3[%799] : memref<256xi32, #tpu.memory_space<smem>>
        %801 = arith.cmpi sle, %800, %14 : i32
        %802 = arith.andi %797, %801 : i1
        %c3_i32_236 = arith.constant 3 : i32
        %803 = arith.addi %793, %c3_i32_236 : i32
        %804 = arith.index_cast %803 : i32 to index
        %805 = memref.load %arg3[%804] : memref<256xi32, #tpu.memory_space<smem>>
        %806 = arith.cmpi sge, %805, %0 : i32
        %807 = arith.andi %802, %806 : i1
        %c2_i32_237 = arith.constant 2 : i32
        %808 = arith.addi %793, %c2_i32_237 : i32
        %809 = arith.index_cast %808 : i32 to index
        %810 = memref.load %arg3[%809] : memref<256xi32, #tpu.memory_space<smem>>
        %811 = arith.cmpi sle, %810, %12 : i32
        %812 = arith.andi %807, %811 : i1
        %c9_i32_238 = arith.constant 9 : i32
        %813 = arith.muli %792, %c9_i32_238 : i32
        %c0_i32_239 = arith.constant 0 : i32
        %814 = arith.addi %813, %c0_i32_239 : i32
        %815 = arith.index_cast %814 : i32 to index
        %816 = memref.load %arg4[%815] : memref<576xf32, #tpu.memory_space<smem>>
        %c1_i32_240 = arith.constant 1 : i32
        %817 = arith.addi %813, %c1_i32_240 : i32
        %818 = arith.index_cast %817 : i32 to index
        %819 = memref.load %arg4[%818] : memref<576xf32, #tpu.memory_space<smem>>
        %c2_i32_241 = arith.constant 2 : i32
        %820 = arith.addi %813, %c2_i32_241 : i32
        %821 = arith.index_cast %820 : i32 to index
        %822 = memref.load %arg4[%821] : memref<576xf32, #tpu.memory_space<smem>>
        %c3_i32_242 = arith.constant 3 : i32
        %823 = arith.addi %813, %c3_i32_242 : i32
        %824 = arith.index_cast %823 : i32 to index
        %825 = memref.load %arg4[%824] : memref<576xf32, #tpu.memory_space<smem>>
        %c4_i32_243 = arith.constant 4 : i32
        %826 = arith.addi %813, %c4_i32_243 : i32
        %827 = arith.index_cast %826 : i32 to index
        %828 = memref.load %arg4[%827] : memref<576xf32, #tpu.memory_space<smem>>
        %c5_i32_244 = arith.constant 5 : i32
        %829 = arith.addi %813, %c5_i32_244 : i32
        %830 = arith.index_cast %829 : i32 to index
        %831 = memref.load %arg4[%830] : memref<576xf32, #tpu.memory_space<smem>>
        %cst_245 = arith.constant 0.000000e+00 : f32
        %832 = arith.select %812, %831, %cst_245 : f32
        %c6_i32_246 = arith.constant 6 : i32
        %833 = arith.addi %813, %c6_i32_246 : i32
        %834 = arith.index_cast %833 : i32 to index
        %835 = memref.load %arg4[%834] : memref<576xf32, #tpu.memory_space<smem>>
        %c7_i32_247 = arith.constant 7 : i32
        %836 = arith.addi %813, %c7_i32_247 : i32
        %837 = arith.index_cast %836 : i32 to index
        %838 = memref.load %arg4[%837] : memref<576xf32, #tpu.memory_space<smem>>
        %c8_i32_248 = arith.constant 8 : i32
        %839 = arith.addi %813, %c8_i32_248 : i32
        %840 = arith.index_cast %839 : i32 to index
        %841 = memref.load %arg4[%840] : memref<576xf32, #tpu.memory_space<smem>>
        %842 = vector.broadcast %816 : f32 to vector<16x128xf32>
        %843 = arith.subf %10, %842 : vector<16x128xf32>
        %844 = vector.broadcast %819 : f32 to vector<16x128xf32>
        %845 = arith.subf %11, %844 : vector<16x128xf32>
        %846 = vector.broadcast %822 : f32 to vector<16x128xf32>
        %847 = arith.mulf %846, %843 : vector<16x128xf32>
        %848 = vector.broadcast %825 : f32 to vector<16x128xf32>
        %849 = arith.mulf %848, %845 : vector<16x128xf32>
        %850 = arith.addf %847, %849 : vector<16x128xf32>
        %851 = arith.mulf %843, %850 : vector<16x128xf32>
        %852 = arith.mulf %845, %845 : vector<16x128xf32>
        %853 = vector.broadcast %828 : f32 to vector<16x128xf32>
        %854 = arith.mulf %853, %852 : vector<16x128xf32>
        %855 = arith.addf %851, %854 : vector<16x128xf32>
        %856 = math.exp %855 : vector<16x128xf32>
        %cst_249 = arith.constant 0.000000e+00 : f32
        %857 = vector.broadcast %cst_249 : f32 to vector<16x128xf32>
        %858 = arith.cmpf ole, %855, %857 : vector<16x128xf32>
        %859 = vector.broadcast %832 : f32 to vector<16x128xf32>
        %860 = arith.mulf %859, %856 : vector<16x128xf32>
        %cst_250 = arith.constant 9.900000e-01 : f32
        %861 = vector.broadcast %cst_250 : f32 to vector<16x128xf32>
        %862 = arith.minimumf %861, %860 : vector<16x128xf32>
        %cst_251 = arith.constant 0.000000e+00 : f32
        %863 = vector.broadcast %cst_251 : f32 to vector<16x128xf32>
        %864 = arith.select %858, %862, %863 : vector<16x128xi1>, vector<16x128xf32>
        %cst_252 = arith.constant 0.00392156886 : f32
        %865 = vector.broadcast %cst_252 : f32 to vector<16x128xf32>
        %866 = arith.cmpf oge, %864, %865 : vector<16x128xf32>
        %cst_253 = arith.constant 0.000000e+00 : f32
        %867 = vector.broadcast %cst_253 : f32 to vector<16x128xf32>
        %868 = arith.cmpf ogt, %790, %867 : vector<16x128xf32>
        %869 = arith.andi %866, %868 : vector<16x128xi1>
        %cst_254 = arith.constant 1.000000e+00 : f32
        %870 = vector.broadcast %cst_254 : f32 to vector<16x128xf32>
        %871 = arith.subf %870, %864 : vector<16x128xf32>
        %872 = arith.mulf %790, %871 : vector<16x128xf32>
        %cst_255 = arith.constant 9.99999974E-5 : f32
        %873 = vector.broadcast %cst_255 : f32 to vector<16x128xf32>
        %874 = arith.cmpf oge, %872, %873 : vector<16x128xf32>
        %875 = arith.andi %869, %874 : vector<16x128xi1>
        %876 = arith.xori %869, %875 : vector<16x128xi1>
        %877 = arith.mulf %864, %790 : vector<16x128xf32>
        %cst_256 = arith.constant 0.000000e+00 : f32
        %878 = vector.broadcast %cst_256 : f32 to vector<16x128xf32>
        %879 = arith.select %875, %877, %878 : vector<16x128xi1>, vector<16x128xf32>
        %880 = vector.broadcast %835 : f32 to vector<16x128xf32>
        %881 = arith.mulf %879, %880 : vector<16x128xf32>
        %882 = arith.addf %780, %881 : vector<16x128xf32>
        %883 = vector.broadcast %838 : f32 to vector<16x128xf32>
        %884 = arith.mulf %879, %883 : vector<16x128xf32>
        %885 = arith.addf %783, %884 : vector<16x128xf32>
        %886 = vector.broadcast %841 : f32 to vector<16x128xf32>
        %887 = arith.mulf %879, %886 : vector<16x128xf32>
        %888 = arith.addf %786, %887 : vector<16x128xf32>
        %cst_257 = arith.constant 0.000000e+00 : f32
        %889 = vector.broadcast %cst_257 : f32 to vector<16x128xf32>
        %890 = arith.subf %889, %790 : vector<16x128xf32>
        %891 = arith.select %875, %872, %790 : vector<16x128xi1>, vector<16x128xf32>
        %892 = arith.select %876, %890, %891 : vector<16x128xi1>, vector<16x128xf32>
        %c8_i32_258 = arith.constant 8 : i32
        %c16_i32_259 = arith.constant 16 : i32
        %893 = arith.muli %arg11, %c16_i32_259 : i32
        %894 = arith.addi %893, %c8_i32_258 : i32
        %c4_i32_260 = arith.constant 4 : i32
        %895 = arith.muli %894, %c4_i32_260 : i32
        %c1_i32_261 = arith.constant 1 : i32
        %896 = arith.addi %895, %c1_i32_261 : i32
        %897 = arith.index_cast %896 : i32 to index
        %898 = memref.load %arg3[%897] : memref<256xi32, #tpu.memory_space<smem>>
        %899 = arith.cmpi sge, %898, %13 : i32
        %c0_i32_262 = arith.constant 0 : i32
        %900 = arith.addi %895, %c0_i32_262 : i32
        %901 = arith.index_cast %900 : i32 to index
        %902 = memref.load %arg3[%901] : memref<256xi32, #tpu.memory_space<smem>>
        %903 = arith.cmpi sle, %902, %14 : i32
        %904 = arith.andi %899, %903 : i1
        %c3_i32_263 = arith.constant 3 : i32
        %905 = arith.addi %895, %c3_i32_263 : i32
        %906 = arith.index_cast %905 : i32 to index
        %907 = memref.load %arg3[%906] : memref<256xi32, #tpu.memory_space<smem>>
        %908 = arith.cmpi sge, %907, %0 : i32
        %909 = arith.andi %904, %908 : i1
        %c2_i32_264 = arith.constant 2 : i32
        %910 = arith.addi %895, %c2_i32_264 : i32
        %911 = arith.index_cast %910 : i32 to index
        %912 = memref.load %arg3[%911] : memref<256xi32, #tpu.memory_space<smem>>
        %913 = arith.cmpi sle, %912, %12 : i32
        %914 = arith.andi %909, %913 : i1
        %c9_i32_265 = arith.constant 9 : i32
        %915 = arith.muli %894, %c9_i32_265 : i32
        %c0_i32_266 = arith.constant 0 : i32
        %916 = arith.addi %915, %c0_i32_266 : i32
        %917 = arith.index_cast %916 : i32 to index
        %918 = memref.load %arg4[%917] : memref<576xf32, #tpu.memory_space<smem>>
        %c1_i32_267 = arith.constant 1 : i32
        %919 = arith.addi %915, %c1_i32_267 : i32
        %920 = arith.index_cast %919 : i32 to index
        %921 = memref.load %arg4[%920] : memref<576xf32, #tpu.memory_space<smem>>
        %c2_i32_268 = arith.constant 2 : i32
        %922 = arith.addi %915, %c2_i32_268 : i32
        %923 = arith.index_cast %922 : i32 to index
        %924 = memref.load %arg4[%923] : memref<576xf32, #tpu.memory_space<smem>>
        %c3_i32_269 = arith.constant 3 : i32
        %925 = arith.addi %915, %c3_i32_269 : i32
        %926 = arith.index_cast %925 : i32 to index
        %927 = memref.load %arg4[%926] : memref<576xf32, #tpu.memory_space<smem>>
        %c4_i32_270 = arith.constant 4 : i32
        %928 = arith.addi %915, %c4_i32_270 : i32
        %929 = arith.index_cast %928 : i32 to index
        %930 = memref.load %arg4[%929] : memref<576xf32, #tpu.memory_space<smem>>
        %c5_i32_271 = arith.constant 5 : i32
        %931 = arith.addi %915, %c5_i32_271 : i32
        %932 = arith.index_cast %931 : i32 to index
        %933 = memref.load %arg4[%932] : memref<576xf32, #tpu.memory_space<smem>>
        %cst_272 = arith.constant 0.000000e+00 : f32
        %934 = arith.select %914, %933, %cst_272 : f32
        %c6_i32_273 = arith.constant 6 : i32
        %935 = arith.addi %915, %c6_i32_273 : i32
        %936 = arith.index_cast %935 : i32 to index
        %937 = memref.load %arg4[%936] : memref<576xf32, #tpu.memory_space<smem>>
        %c7_i32_274 = arith.constant 7 : i32
        %938 = arith.addi %915, %c7_i32_274 : i32
        %939 = arith.index_cast %938 : i32 to index
        %940 = memref.load %arg4[%939] : memref<576xf32, #tpu.memory_space<smem>>
        %c8_i32_275 = arith.constant 8 : i32
        %941 = arith.addi %915, %c8_i32_275 : i32
        %942 = arith.index_cast %941 : i32 to index
        %943 = memref.load %arg4[%942] : memref<576xf32, #tpu.memory_space<smem>>
        %944 = vector.broadcast %918 : f32 to vector<16x128xf32>
        %945 = arith.subf %10, %944 : vector<16x128xf32>
        %946 = vector.broadcast %921 : f32 to vector<16x128xf32>
        %947 = arith.subf %11, %946 : vector<16x128xf32>
        %948 = vector.broadcast %924 : f32 to vector<16x128xf32>
        %949 = arith.mulf %948, %945 : vector<16x128xf32>
        %950 = vector.broadcast %927 : f32 to vector<16x128xf32>
        %951 = arith.mulf %950, %947 : vector<16x128xf32>
        %952 = arith.addf %949, %951 : vector<16x128xf32>
        %953 = arith.mulf %945, %952 : vector<16x128xf32>
        %954 = arith.mulf %947, %947 : vector<16x128xf32>
        %955 = vector.broadcast %930 : f32 to vector<16x128xf32>
        %956 = arith.mulf %955, %954 : vector<16x128xf32>
        %957 = arith.addf %953, %956 : vector<16x128xf32>
        %958 = math.exp %957 : vector<16x128xf32>
        %cst_276 = arith.constant 0.000000e+00 : f32
        %959 = vector.broadcast %cst_276 : f32 to vector<16x128xf32>
        %960 = arith.cmpf ole, %957, %959 : vector<16x128xf32>
        %961 = vector.broadcast %934 : f32 to vector<16x128xf32>
        %962 = arith.mulf %961, %958 : vector<16x128xf32>
        %cst_277 = arith.constant 9.900000e-01 : f32
        %963 = vector.broadcast %cst_277 : f32 to vector<16x128xf32>
        %964 = arith.minimumf %963, %962 : vector<16x128xf32>
        %cst_278 = arith.constant 0.000000e+00 : f32
        %965 = vector.broadcast %cst_278 : f32 to vector<16x128xf32>
        %966 = arith.select %960, %964, %965 : vector<16x128xi1>, vector<16x128xf32>
        %cst_279 = arith.constant 0.00392156886 : f32
        %967 = vector.broadcast %cst_279 : f32 to vector<16x128xf32>
        %968 = arith.cmpf oge, %966, %967 : vector<16x128xf32>
        %cst_280 = arith.constant 0.000000e+00 : f32
        %969 = vector.broadcast %cst_280 : f32 to vector<16x128xf32>
        %970 = arith.cmpf ogt, %892, %969 : vector<16x128xf32>
        %971 = arith.andi %968, %970 : vector<16x128xi1>
        %cst_281 = arith.constant 1.000000e+00 : f32
        %972 = vector.broadcast %cst_281 : f32 to vector<16x128xf32>
        %973 = arith.subf %972, %966 : vector<16x128xf32>
        %974 = arith.mulf %892, %973 : vector<16x128xf32>
        %cst_282 = arith.constant 9.99999974E-5 : f32
        %975 = vector.broadcast %cst_282 : f32 to vector<16x128xf32>
        %976 = arith.cmpf oge, %974, %975 : vector<16x128xf32>
        %977 = arith.andi %971, %976 : vector<16x128xi1>
        %978 = arith.xori %971, %977 : vector<16x128xi1>
        %979 = arith.mulf %966, %892 : vector<16x128xf32>
        %cst_283 = arith.constant 0.000000e+00 : f32
        %980 = vector.broadcast %cst_283 : f32 to vector<16x128xf32>
        %981 = arith.select %977, %979, %980 : vector<16x128xi1>, vector<16x128xf32>
        %982 = vector.broadcast %937 : f32 to vector<16x128xf32>
        %983 = arith.mulf %981, %982 : vector<16x128xf32>
        %984 = arith.addf %882, %983 : vector<16x128xf32>
        %985 = vector.broadcast %940 : f32 to vector<16x128xf32>
        %986 = arith.mulf %981, %985 : vector<16x128xf32>
        %987 = arith.addf %885, %986 : vector<16x128xf32>
        %988 = vector.broadcast %943 : f32 to vector<16x128xf32>
        %989 = arith.mulf %981, %988 : vector<16x128xf32>
        %990 = arith.addf %888, %989 : vector<16x128xf32>
        %cst_284 = arith.constant 0.000000e+00 : f32
        %991 = vector.broadcast %cst_284 : f32 to vector<16x128xf32>
        %992 = arith.subf %991, %892 : vector<16x128xf32>
        %993 = arith.select %977, %974, %892 : vector<16x128xi1>, vector<16x128xf32>
        %994 = arith.select %978, %992, %993 : vector<16x128xi1>, vector<16x128xf32>
        %c9_i32_285 = arith.constant 9 : i32
        %c16_i32_286 = arith.constant 16 : i32
        %995 = arith.muli %arg11, %c16_i32_286 : i32
        %996 = arith.addi %995, %c9_i32_285 : i32
        %c4_i32_287 = arith.constant 4 : i32
        %997 = arith.muli %996, %c4_i32_287 : i32
        %c1_i32_288 = arith.constant 1 : i32
        %998 = arith.addi %997, %c1_i32_288 : i32
        %999 = arith.index_cast %998 : i32 to index
        %1000 = memref.load %arg3[%999] : memref<256xi32, #tpu.memory_space<smem>>
        %1001 = arith.cmpi sge, %1000, %13 : i32
        %c0_i32_289 = arith.constant 0 : i32
        %1002 = arith.addi %997, %c0_i32_289 : i32
        %1003 = arith.index_cast %1002 : i32 to index
        %1004 = memref.load %arg3[%1003] : memref<256xi32, #tpu.memory_space<smem>>
        %1005 = arith.cmpi sle, %1004, %14 : i32
        %1006 = arith.andi %1001, %1005 : i1
        %c3_i32_290 = arith.constant 3 : i32
        %1007 = arith.addi %997, %c3_i32_290 : i32
        %1008 = arith.index_cast %1007 : i32 to index
        %1009 = memref.load %arg3[%1008] : memref<256xi32, #tpu.memory_space<smem>>
        %1010 = arith.cmpi sge, %1009, %0 : i32
        %1011 = arith.andi %1006, %1010 : i1
        %c2_i32_291 = arith.constant 2 : i32
        %1012 = arith.addi %997, %c2_i32_291 : i32
        %1013 = arith.index_cast %1012 : i32 to index
        %1014 = memref.load %arg3[%1013] : memref<256xi32, #tpu.memory_space<smem>>
        %1015 = arith.cmpi sle, %1014, %12 : i32
        %1016 = arith.andi %1011, %1015 : i1
        %c9_i32_292 = arith.constant 9 : i32
        %1017 = arith.muli %996, %c9_i32_292 : i32
        %c0_i32_293 = arith.constant 0 : i32
        %1018 = arith.addi %1017, %c0_i32_293 : i32
        %1019 = arith.index_cast %1018 : i32 to index
        %1020 = memref.load %arg4[%1019] : memref<576xf32, #tpu.memory_space<smem>>
        %c1_i32_294 = arith.constant 1 : i32
        %1021 = arith.addi %1017, %c1_i32_294 : i32
        %1022 = arith.index_cast %1021 : i32 to index
        %1023 = memref.load %arg4[%1022] : memref<576xf32, #tpu.memory_space<smem>>
        %c2_i32_295 = arith.constant 2 : i32
        %1024 = arith.addi %1017, %c2_i32_295 : i32
        %1025 = arith.index_cast %1024 : i32 to index
        %1026 = memref.load %arg4[%1025] : memref<576xf32, #tpu.memory_space<smem>>
        %c3_i32_296 = arith.constant 3 : i32
        %1027 = arith.addi %1017, %c3_i32_296 : i32
        %1028 = arith.index_cast %1027 : i32 to index
        %1029 = memref.load %arg4[%1028] : memref<576xf32, #tpu.memory_space<smem>>
        %c4_i32_297 = arith.constant 4 : i32
        %1030 = arith.addi %1017, %c4_i32_297 : i32
        %1031 = arith.index_cast %1030 : i32 to index
        %1032 = memref.load %arg4[%1031] : memref<576xf32, #tpu.memory_space<smem>>
        %c5_i32_298 = arith.constant 5 : i32
        %1033 = arith.addi %1017, %c5_i32_298 : i32
        %1034 = arith.index_cast %1033 : i32 to index
        %1035 = memref.load %arg4[%1034] : memref<576xf32, #tpu.memory_space<smem>>
        %cst_299 = arith.constant 0.000000e+00 : f32
        %1036 = arith.select %1016, %1035, %cst_299 : f32
        %c6_i32_300 = arith.constant 6 : i32
        %1037 = arith.addi %1017, %c6_i32_300 : i32
        %1038 = arith.index_cast %1037 : i32 to index
        %1039 = memref.load %arg4[%1038] : memref<576xf32, #tpu.memory_space<smem>>
        %c7_i32_301 = arith.constant 7 : i32
        %1040 = arith.addi %1017, %c7_i32_301 : i32
        %1041 = arith.index_cast %1040 : i32 to index
        %1042 = memref.load %arg4[%1041] : memref<576xf32, #tpu.memory_space<smem>>
        %c8_i32_302 = arith.constant 8 : i32
        %1043 = arith.addi %1017, %c8_i32_302 : i32
        %1044 = arith.index_cast %1043 : i32 to index
        %1045 = memref.load %arg4[%1044] : memref<576xf32, #tpu.memory_space<smem>>
        %1046 = vector.broadcast %1020 : f32 to vector<16x128xf32>
        %1047 = arith.subf %10, %1046 : vector<16x128xf32>
        %1048 = vector.broadcast %1023 : f32 to vector<16x128xf32>
        %1049 = arith.subf %11, %1048 : vector<16x128xf32>
        %1050 = vector.broadcast %1026 : f32 to vector<16x128xf32>
        %1051 = arith.mulf %1050, %1047 : vector<16x128xf32>
        %1052 = vector.broadcast %1029 : f32 to vector<16x128xf32>
        %1053 = arith.mulf %1052, %1049 : vector<16x128xf32>
        %1054 = arith.addf %1051, %1053 : vector<16x128xf32>
        %1055 = arith.mulf %1047, %1054 : vector<16x128xf32>
        %1056 = arith.mulf %1049, %1049 : vector<16x128xf32>
        %1057 = vector.broadcast %1032 : f32 to vector<16x128xf32>
        %1058 = arith.mulf %1057, %1056 : vector<16x128xf32>
        %1059 = arith.addf %1055, %1058 : vector<16x128xf32>
        %1060 = math.exp %1059 : vector<16x128xf32>
        %cst_303 = arith.constant 0.000000e+00 : f32
        %1061 = vector.broadcast %cst_303 : f32 to vector<16x128xf32>
        %1062 = arith.cmpf ole, %1059, %1061 : vector<16x128xf32>
        %1063 = vector.broadcast %1036 : f32 to vector<16x128xf32>
        %1064 = arith.mulf %1063, %1060 : vector<16x128xf32>
        %cst_304 = arith.constant 9.900000e-01 : f32
        %1065 = vector.broadcast %cst_304 : f32 to vector<16x128xf32>
        %1066 = arith.minimumf %1065, %1064 : vector<16x128xf32>
        %cst_305 = arith.constant 0.000000e+00 : f32
        %1067 = vector.broadcast %cst_305 : f32 to vector<16x128xf32>
        %1068 = arith.select %1062, %1066, %1067 : vector<16x128xi1>, vector<16x128xf32>
        %cst_306 = arith.constant 0.00392156886 : f32
        %1069 = vector.broadcast %cst_306 : f32 to vector<16x128xf32>
        %1070 = arith.cmpf oge, %1068, %1069 : vector<16x128xf32>
        %cst_307 = arith.constant 0.000000e+00 : f32
        %1071 = vector.broadcast %cst_307 : f32 to vector<16x128xf32>
        %1072 = arith.cmpf ogt, %994, %1071 : vector<16x128xf32>
        %1073 = arith.andi %1070, %1072 : vector<16x128xi1>
        %cst_308 = arith.constant 1.000000e+00 : f32
        %1074 = vector.broadcast %cst_308 : f32 to vector<16x128xf32>
        %1075 = arith.subf %1074, %1068 : vector<16x128xf32>
        %1076 = arith.mulf %994, %1075 : vector<16x128xf32>
        %cst_309 = arith.constant 9.99999974E-5 : f32
        %1077 = vector.broadcast %cst_309 : f32 to vector<16x128xf32>
        %1078 = arith.cmpf oge, %1076, %1077 : vector<16x128xf32>
        %1079 = arith.andi %1073, %1078 : vector<16x128xi1>
        %1080 = arith.xori %1073, %1079 : vector<16x128xi1>
        %1081 = arith.mulf %1068, %994 : vector<16x128xf32>
        %cst_310 = arith.constant 0.000000e+00 : f32
        %1082 = vector.broadcast %cst_310 : f32 to vector<16x128xf32>
        %1083 = arith.select %1079, %1081, %1082 : vector<16x128xi1>, vector<16x128xf32>
        %1084 = vector.broadcast %1039 : f32 to vector<16x128xf32>
        %1085 = arith.mulf %1083, %1084 : vector<16x128xf32>
        %1086 = arith.addf %984, %1085 : vector<16x128xf32>
        %1087 = vector.broadcast %1042 : f32 to vector<16x128xf32>
        %1088 = arith.mulf %1083, %1087 : vector<16x128xf32>
        %1089 = arith.addf %987, %1088 : vector<16x128xf32>
        %1090 = vector.broadcast %1045 : f32 to vector<16x128xf32>
        %1091 = arith.mulf %1083, %1090 : vector<16x128xf32>
        %1092 = arith.addf %990, %1091 : vector<16x128xf32>
        %cst_311 = arith.constant 0.000000e+00 : f32
        %1093 = vector.broadcast %cst_311 : f32 to vector<16x128xf32>
        %1094 = arith.subf %1093, %994 : vector<16x128xf32>
        %1095 = arith.select %1079, %1076, %994 : vector<16x128xi1>, vector<16x128xf32>
        %1096 = arith.select %1080, %1094, %1095 : vector<16x128xi1>, vector<16x128xf32>
        %c10_i32 = arith.constant 10 : i32
        %c16_i32_312 = arith.constant 16 : i32
        %1097 = arith.muli %arg11, %c16_i32_312 : i32
        %1098 = arith.addi %1097, %c10_i32 : i32
        %c4_i32_313 = arith.constant 4 : i32
        %1099 = arith.muli %1098, %c4_i32_313 : i32
        %c1_i32_314 = arith.constant 1 : i32
        %1100 = arith.addi %1099, %c1_i32_314 : i32
        %1101 = arith.index_cast %1100 : i32 to index
        %1102 = memref.load %arg3[%1101] : memref<256xi32, #tpu.memory_space<smem>>
        %1103 = arith.cmpi sge, %1102, %13 : i32
        %c0_i32_315 = arith.constant 0 : i32
        %1104 = arith.addi %1099, %c0_i32_315 : i32
        %1105 = arith.index_cast %1104 : i32 to index
        %1106 = memref.load %arg3[%1105] : memref<256xi32, #tpu.memory_space<smem>>
        %1107 = arith.cmpi sle, %1106, %14 : i32
        %1108 = arith.andi %1103, %1107 : i1
        %c3_i32_316 = arith.constant 3 : i32
        %1109 = arith.addi %1099, %c3_i32_316 : i32
        %1110 = arith.index_cast %1109 : i32 to index
        %1111 = memref.load %arg3[%1110] : memref<256xi32, #tpu.memory_space<smem>>
        %1112 = arith.cmpi sge, %1111, %0 : i32
        %1113 = arith.andi %1108, %1112 : i1
        %c2_i32_317 = arith.constant 2 : i32
        %1114 = arith.addi %1099, %c2_i32_317 : i32
        %1115 = arith.index_cast %1114 : i32 to index
        %1116 = memref.load %arg3[%1115] : memref<256xi32, #tpu.memory_space<smem>>
        %1117 = arith.cmpi sle, %1116, %12 : i32
        %1118 = arith.andi %1113, %1117 : i1
        %c9_i32_318 = arith.constant 9 : i32
        %1119 = arith.muli %1098, %c9_i32_318 : i32
        %c0_i32_319 = arith.constant 0 : i32
        %1120 = arith.addi %1119, %c0_i32_319 : i32
        %1121 = arith.index_cast %1120 : i32 to index
        %1122 = memref.load %arg4[%1121] : memref<576xf32, #tpu.memory_space<smem>>
        %c1_i32_320 = arith.constant 1 : i32
        %1123 = arith.addi %1119, %c1_i32_320 : i32
        %1124 = arith.index_cast %1123 : i32 to index
        %1125 = memref.load %arg4[%1124] : memref<576xf32, #tpu.memory_space<smem>>
        %c2_i32_321 = arith.constant 2 : i32
        %1126 = arith.addi %1119, %c2_i32_321 : i32
        %1127 = arith.index_cast %1126 : i32 to index
        %1128 = memref.load %arg4[%1127] : memref<576xf32, #tpu.memory_space<smem>>
        %c3_i32_322 = arith.constant 3 : i32
        %1129 = arith.addi %1119, %c3_i32_322 : i32
        %1130 = arith.index_cast %1129 : i32 to index
        %1131 = memref.load %arg4[%1130] : memref<576xf32, #tpu.memory_space<smem>>
        %c4_i32_323 = arith.constant 4 : i32
        %1132 = arith.addi %1119, %c4_i32_323 : i32
        %1133 = arith.index_cast %1132 : i32 to index
        %1134 = memref.load %arg4[%1133] : memref<576xf32, #tpu.memory_space<smem>>
        %c5_i32_324 = arith.constant 5 : i32
        %1135 = arith.addi %1119, %c5_i32_324 : i32
        %1136 = arith.index_cast %1135 : i32 to index
        %1137 = memref.load %arg4[%1136] : memref<576xf32, #tpu.memory_space<smem>>
        %cst_325 = arith.constant 0.000000e+00 : f32
        %1138 = arith.select %1118, %1137, %cst_325 : f32
        %c6_i32_326 = arith.constant 6 : i32
        %1139 = arith.addi %1119, %c6_i32_326 : i32
        %1140 = arith.index_cast %1139 : i32 to index
        %1141 = memref.load %arg4[%1140] : memref<576xf32, #tpu.memory_space<smem>>
        %c7_i32_327 = arith.constant 7 : i32
        %1142 = arith.addi %1119, %c7_i32_327 : i32
        %1143 = arith.index_cast %1142 : i32 to index
        %1144 = memref.load %arg4[%1143] : memref<576xf32, #tpu.memory_space<smem>>
        %c8_i32_328 = arith.constant 8 : i32
        %1145 = arith.addi %1119, %c8_i32_328 : i32
        %1146 = arith.index_cast %1145 : i32 to index
        %1147 = memref.load %arg4[%1146] : memref<576xf32, #tpu.memory_space<smem>>
        %1148 = vector.broadcast %1122 : f32 to vector<16x128xf32>
        %1149 = arith.subf %10, %1148 : vector<16x128xf32>
        %1150 = vector.broadcast %1125 : f32 to vector<16x128xf32>
        %1151 = arith.subf %11, %1150 : vector<16x128xf32>
        %1152 = vector.broadcast %1128 : f32 to vector<16x128xf32>
        %1153 = arith.mulf %1152, %1149 : vector<16x128xf32>
        %1154 = vector.broadcast %1131 : f32 to vector<16x128xf32>
        %1155 = arith.mulf %1154, %1151 : vector<16x128xf32>
        %1156 = arith.addf %1153, %1155 : vector<16x128xf32>
        %1157 = arith.mulf %1149, %1156 : vector<16x128xf32>
        %1158 = arith.mulf %1151, %1151 : vector<16x128xf32>
        %1159 = vector.broadcast %1134 : f32 to vector<16x128xf32>
        %1160 = arith.mulf %1159, %1158 : vector<16x128xf32>
        %1161 = arith.addf %1157, %1160 : vector<16x128xf32>
        %1162 = math.exp %1161 : vector<16x128xf32>
        %cst_329 = arith.constant 0.000000e+00 : f32
        %1163 = vector.broadcast %cst_329 : f32 to vector<16x128xf32>
        %1164 = arith.cmpf ole, %1161, %1163 : vector<16x128xf32>
        %1165 = vector.broadcast %1138 : f32 to vector<16x128xf32>
        %1166 = arith.mulf %1165, %1162 : vector<16x128xf32>
        %cst_330 = arith.constant 9.900000e-01 : f32
        %1167 = vector.broadcast %cst_330 : f32 to vector<16x128xf32>
        %1168 = arith.minimumf %1167, %1166 : vector<16x128xf32>
        %cst_331 = arith.constant 0.000000e+00 : f32
        %1169 = vector.broadcast %cst_331 : f32 to vector<16x128xf32>
        %1170 = arith.select %1164, %1168, %1169 : vector<16x128xi1>, vector<16x128xf32>
        %cst_332 = arith.constant 0.00392156886 : f32
        %1171 = vector.broadcast %cst_332 : f32 to vector<16x128xf32>
        %1172 = arith.cmpf oge, %1170, %1171 : vector<16x128xf32>
        %cst_333 = arith.constant 0.000000e+00 : f32
        %1173 = vector.broadcast %cst_333 : f32 to vector<16x128xf32>
        %1174 = arith.cmpf ogt, %1096, %1173 : vector<16x128xf32>
        %1175 = arith.andi %1172, %1174 : vector<16x128xi1>
        %cst_334 = arith.constant 1.000000e+00 : f32
        %1176 = vector.broadcast %cst_334 : f32 to vector<16x128xf32>
        %1177 = arith.subf %1176, %1170 : vector<16x128xf32>
        %1178 = arith.mulf %1096, %1177 : vector<16x128xf32>
        %cst_335 = arith.constant 9.99999974E-5 : f32
        %1179 = vector.broadcast %cst_335 : f32 to vector<16x128xf32>
        %1180 = arith.cmpf oge, %1178, %1179 : vector<16x128xf32>
        %1181 = arith.andi %1175, %1180 : vector<16x128xi1>
        %1182 = arith.xori %1175, %1181 : vector<16x128xi1>
        %1183 = arith.mulf %1170, %1096 : vector<16x128xf32>
        %cst_336 = arith.constant 0.000000e+00 : f32
        %1184 = vector.broadcast %cst_336 : f32 to vector<16x128xf32>
        %1185 = arith.select %1181, %1183, %1184 : vector<16x128xi1>, vector<16x128xf32>
        %1186 = vector.broadcast %1141 : f32 to vector<16x128xf32>
        %1187 = arith.mulf %1185, %1186 : vector<16x128xf32>
        %1188 = arith.addf %1086, %1187 : vector<16x128xf32>
        %1189 = vector.broadcast %1144 : f32 to vector<16x128xf32>
        %1190 = arith.mulf %1185, %1189 : vector<16x128xf32>
        %1191 = arith.addf %1089, %1190 : vector<16x128xf32>
        %1192 = vector.broadcast %1147 : f32 to vector<16x128xf32>
        %1193 = arith.mulf %1185, %1192 : vector<16x128xf32>
        %1194 = arith.addf %1092, %1193 : vector<16x128xf32>
        %cst_337 = arith.constant 0.000000e+00 : f32
        %1195 = vector.broadcast %cst_337 : f32 to vector<16x128xf32>
        %1196 = arith.subf %1195, %1096 : vector<16x128xf32>
        %1197 = arith.select %1181, %1178, %1096 : vector<16x128xi1>, vector<16x128xf32>
        %1198 = arith.select %1182, %1196, %1197 : vector<16x128xi1>, vector<16x128xf32>
        %c11_i32 = arith.constant 11 : i32
        %c16_i32_338 = arith.constant 16 : i32
        %1199 = arith.muli %arg11, %c16_i32_338 : i32
        %1200 = arith.addi %1199, %c11_i32 : i32
        %c4_i32_339 = arith.constant 4 : i32
        %1201 = arith.muli %1200, %c4_i32_339 : i32
        %c1_i32_340 = arith.constant 1 : i32
        %1202 = arith.addi %1201, %c1_i32_340 : i32
        %1203 = arith.index_cast %1202 : i32 to index
        %1204 = memref.load %arg3[%1203] : memref<256xi32, #tpu.memory_space<smem>>
        %1205 = arith.cmpi sge, %1204, %13 : i32
        %c0_i32_341 = arith.constant 0 : i32
        %1206 = arith.addi %1201, %c0_i32_341 : i32
        %1207 = arith.index_cast %1206 : i32 to index
        %1208 = memref.load %arg3[%1207] : memref<256xi32, #tpu.memory_space<smem>>
        %1209 = arith.cmpi sle, %1208, %14 : i32
        %1210 = arith.andi %1205, %1209 : i1
        %c3_i32_342 = arith.constant 3 : i32
        %1211 = arith.addi %1201, %c3_i32_342 : i32
        %1212 = arith.index_cast %1211 : i32 to index
        %1213 = memref.load %arg3[%1212] : memref<256xi32, #tpu.memory_space<smem>>
        %1214 = arith.cmpi sge, %1213, %0 : i32
        %1215 = arith.andi %1210, %1214 : i1
        %c2_i32_343 = arith.constant 2 : i32
        %1216 = arith.addi %1201, %c2_i32_343 : i32
        %1217 = arith.index_cast %1216 : i32 to index
        %1218 = memref.load %arg3[%1217] : memref<256xi32, #tpu.memory_space<smem>>
        %1219 = arith.cmpi sle, %1218, %12 : i32
        %1220 = arith.andi %1215, %1219 : i1
        %c9_i32_344 = arith.constant 9 : i32
        %1221 = arith.muli %1200, %c9_i32_344 : i32
        %c0_i32_345 = arith.constant 0 : i32
        %1222 = arith.addi %1221, %c0_i32_345 : i32
        %1223 = arith.index_cast %1222 : i32 to index
        %1224 = memref.load %arg4[%1223] : memref<576xf32, #tpu.memory_space<smem>>
        %c1_i32_346 = arith.constant 1 : i32
        %1225 = arith.addi %1221, %c1_i32_346 : i32
        %1226 = arith.index_cast %1225 : i32 to index
        %1227 = memref.load %arg4[%1226] : memref<576xf32, #tpu.memory_space<smem>>
        %c2_i32_347 = arith.constant 2 : i32
        %1228 = arith.addi %1221, %c2_i32_347 : i32
        %1229 = arith.index_cast %1228 : i32 to index
        %1230 = memref.load %arg4[%1229] : memref<576xf32, #tpu.memory_space<smem>>
        %c3_i32_348 = arith.constant 3 : i32
        %1231 = arith.addi %1221, %c3_i32_348 : i32
        %1232 = arith.index_cast %1231 : i32 to index
        %1233 = memref.load %arg4[%1232] : memref<576xf32, #tpu.memory_space<smem>>
        %c4_i32_349 = arith.constant 4 : i32
        %1234 = arith.addi %1221, %c4_i32_349 : i32
        %1235 = arith.index_cast %1234 : i32 to index
        %1236 = memref.load %arg4[%1235] : memref<576xf32, #tpu.memory_space<smem>>
        %c5_i32_350 = arith.constant 5 : i32
        %1237 = arith.addi %1221, %c5_i32_350 : i32
        %1238 = arith.index_cast %1237 : i32 to index
        %1239 = memref.load %arg4[%1238] : memref<576xf32, #tpu.memory_space<smem>>
        %cst_351 = arith.constant 0.000000e+00 : f32
        %1240 = arith.select %1220, %1239, %cst_351 : f32
        %c6_i32_352 = arith.constant 6 : i32
        %1241 = arith.addi %1221, %c6_i32_352 : i32
        %1242 = arith.index_cast %1241 : i32 to index
        %1243 = memref.load %arg4[%1242] : memref<576xf32, #tpu.memory_space<smem>>
        %c7_i32_353 = arith.constant 7 : i32
        %1244 = arith.addi %1221, %c7_i32_353 : i32
        %1245 = arith.index_cast %1244 : i32 to index
        %1246 = memref.load %arg4[%1245] : memref<576xf32, #tpu.memory_space<smem>>
        %c8_i32_354 = arith.constant 8 : i32
        %1247 = arith.addi %1221, %c8_i32_354 : i32
        %1248 = arith.index_cast %1247 : i32 to index
        %1249 = memref.load %arg4[%1248] : memref<576xf32, #tpu.memory_space<smem>>
        %1250 = vector.broadcast %1224 : f32 to vector<16x128xf32>
        %1251 = arith.subf %10, %1250 : vector<16x128xf32>
        %1252 = vector.broadcast %1227 : f32 to vector<16x128xf32>
        %1253 = arith.subf %11, %1252 : vector<16x128xf32>
        %1254 = vector.broadcast %1230 : f32 to vector<16x128xf32>
        %1255 = arith.mulf %1254, %1251 : vector<16x128xf32>
        %1256 = vector.broadcast %1233 : f32 to vector<16x128xf32>
        %1257 = arith.mulf %1256, %1253 : vector<16x128xf32>
        %1258 = arith.addf %1255, %1257 : vector<16x128xf32>
        %1259 = arith.mulf %1251, %1258 : vector<16x128xf32>
        %1260 = arith.mulf %1253, %1253 : vector<16x128xf32>
        %1261 = vector.broadcast %1236 : f32 to vector<16x128xf32>
        %1262 = arith.mulf %1261, %1260 : vector<16x128xf32>
        %1263 = arith.addf %1259, %1262 : vector<16x128xf32>
        %1264 = math.exp %1263 : vector<16x128xf32>
        %cst_355 = arith.constant 0.000000e+00 : f32
        %1265 = vector.broadcast %cst_355 : f32 to vector<16x128xf32>
        %1266 = arith.cmpf ole, %1263, %1265 : vector<16x128xf32>
        %1267 = vector.broadcast %1240 : f32 to vector<16x128xf32>
        %1268 = arith.mulf %1267, %1264 : vector<16x128xf32>
        %cst_356 = arith.constant 9.900000e-01 : f32
        %1269 = vector.broadcast %cst_356 : f32 to vector<16x128xf32>
        %1270 = arith.minimumf %1269, %1268 : vector<16x128xf32>
        %cst_357 = arith.constant 0.000000e+00 : f32
        %1271 = vector.broadcast %cst_357 : f32 to vector<16x128xf32>
        %1272 = arith.select %1266, %1270, %1271 : vector<16x128xi1>, vector<16x128xf32>
        %cst_358 = arith.constant 0.00392156886 : f32
        %1273 = vector.broadcast %cst_358 : f32 to vector<16x128xf32>
        %1274 = arith.cmpf oge, %1272, %1273 : vector<16x128xf32>
        %cst_359 = arith.constant 0.000000e+00 : f32
        %1275 = vector.broadcast %cst_359 : f32 to vector<16x128xf32>
        %1276 = arith.cmpf ogt, %1198, %1275 : vector<16x128xf32>
        %1277 = arith.andi %1274, %1276 : vector<16x128xi1>
        %cst_360 = arith.constant 1.000000e+00 : f32
        %1278 = vector.broadcast %cst_360 : f32 to vector<16x128xf32>
        %1279 = arith.subf %1278, %1272 : vector<16x128xf32>
        %1280 = arith.mulf %1198, %1279 : vector<16x128xf32>
        %cst_361 = arith.constant 9.99999974E-5 : f32
        %1281 = vector.broadcast %cst_361 : f32 to vector<16x128xf32>
        %1282 = arith.cmpf oge, %1280, %1281 : vector<16x128xf32>
        %1283 = arith.andi %1277, %1282 : vector<16x128xi1>
        %1284 = arith.xori %1277, %1283 : vector<16x128xi1>
        %1285 = arith.mulf %1272, %1198 : vector<16x128xf32>
        %cst_362 = arith.constant 0.000000e+00 : f32
        %1286 = vector.broadcast %cst_362 : f32 to vector<16x128xf32>
        %1287 = arith.select %1283, %1285, %1286 : vector<16x128xi1>, vector<16x128xf32>
        %1288 = vector.broadcast %1243 : f32 to vector<16x128xf32>
        %1289 = arith.mulf %1287, %1288 : vector<16x128xf32>
        %1290 = arith.addf %1188, %1289 : vector<16x128xf32>
        %1291 = vector.broadcast %1246 : f32 to vector<16x128xf32>
        %1292 = arith.mulf %1287, %1291 : vector<16x128xf32>
        %1293 = arith.addf %1191, %1292 : vector<16x128xf32>
        %1294 = vector.broadcast %1249 : f32 to vector<16x128xf32>
        %1295 = arith.mulf %1287, %1294 : vector<16x128xf32>
        %1296 = arith.addf %1194, %1295 : vector<16x128xf32>
        %cst_363 = arith.constant 0.000000e+00 : f32
        %1297 = vector.broadcast %cst_363 : f32 to vector<16x128xf32>
        %1298 = arith.subf %1297, %1198 : vector<16x128xf32>
        %1299 = arith.select %1283, %1280, %1198 : vector<16x128xi1>, vector<16x128xf32>
        %1300 = arith.select %1284, %1298, %1299 : vector<16x128xi1>, vector<16x128xf32>
        %c12_i32 = arith.constant 12 : i32
        %c16_i32_364 = arith.constant 16 : i32
        %1301 = arith.muli %arg11, %c16_i32_364 : i32
        %1302 = arith.addi %1301, %c12_i32 : i32
        %c4_i32_365 = arith.constant 4 : i32
        %1303 = arith.muli %1302, %c4_i32_365 : i32
        %c1_i32_366 = arith.constant 1 : i32
        %1304 = arith.addi %1303, %c1_i32_366 : i32
        %1305 = arith.index_cast %1304 : i32 to index
        %1306 = memref.load %arg3[%1305] : memref<256xi32, #tpu.memory_space<smem>>
        %1307 = arith.cmpi sge, %1306, %13 : i32
        %c0_i32_367 = arith.constant 0 : i32
        %1308 = arith.addi %1303, %c0_i32_367 : i32
        %1309 = arith.index_cast %1308 : i32 to index
        %1310 = memref.load %arg3[%1309] : memref<256xi32, #tpu.memory_space<smem>>
        %1311 = arith.cmpi sle, %1310, %14 : i32
        %1312 = arith.andi %1307, %1311 : i1
        %c3_i32_368 = arith.constant 3 : i32
        %1313 = arith.addi %1303, %c3_i32_368 : i32
        %1314 = arith.index_cast %1313 : i32 to index
        %1315 = memref.load %arg3[%1314] : memref<256xi32, #tpu.memory_space<smem>>
        %1316 = arith.cmpi sge, %1315, %0 : i32
        %1317 = arith.andi %1312, %1316 : i1
        %c2_i32_369 = arith.constant 2 : i32
        %1318 = arith.addi %1303, %c2_i32_369 : i32
        %1319 = arith.index_cast %1318 : i32 to index
        %1320 = memref.load %arg3[%1319] : memref<256xi32, #tpu.memory_space<smem>>
        %1321 = arith.cmpi sle, %1320, %12 : i32
        %1322 = arith.andi %1317, %1321 : i1
        %c9_i32_370 = arith.constant 9 : i32
        %1323 = arith.muli %1302, %c9_i32_370 : i32
        %c0_i32_371 = arith.constant 0 : i32
        %1324 = arith.addi %1323, %c0_i32_371 : i32
        %1325 = arith.index_cast %1324 : i32 to index
        %1326 = memref.load %arg4[%1325] : memref<576xf32, #tpu.memory_space<smem>>
        %c1_i32_372 = arith.constant 1 : i32
        %1327 = arith.addi %1323, %c1_i32_372 : i32
        %1328 = arith.index_cast %1327 : i32 to index
        %1329 = memref.load %arg4[%1328] : memref<576xf32, #tpu.memory_space<smem>>
        %c2_i32_373 = arith.constant 2 : i32
        %1330 = arith.addi %1323, %c2_i32_373 : i32
        %1331 = arith.index_cast %1330 : i32 to index
        %1332 = memref.load %arg4[%1331] : memref<576xf32, #tpu.memory_space<smem>>
        %c3_i32_374 = arith.constant 3 : i32
        %1333 = arith.addi %1323, %c3_i32_374 : i32
        %1334 = arith.index_cast %1333 : i32 to index
        %1335 = memref.load %arg4[%1334] : memref<576xf32, #tpu.memory_space<smem>>
        %c4_i32_375 = arith.constant 4 : i32
        %1336 = arith.addi %1323, %c4_i32_375 : i32
        %1337 = arith.index_cast %1336 : i32 to index
        %1338 = memref.load %arg4[%1337] : memref<576xf32, #tpu.memory_space<smem>>
        %c5_i32_376 = arith.constant 5 : i32
        %1339 = arith.addi %1323, %c5_i32_376 : i32
        %1340 = arith.index_cast %1339 : i32 to index
        %1341 = memref.load %arg4[%1340] : memref<576xf32, #tpu.memory_space<smem>>
        %cst_377 = arith.constant 0.000000e+00 : f32
        %1342 = arith.select %1322, %1341, %cst_377 : f32
        %c6_i32_378 = arith.constant 6 : i32
        %1343 = arith.addi %1323, %c6_i32_378 : i32
        %1344 = arith.index_cast %1343 : i32 to index
        %1345 = memref.load %arg4[%1344] : memref<576xf32, #tpu.memory_space<smem>>
        %c7_i32_379 = arith.constant 7 : i32
        %1346 = arith.addi %1323, %c7_i32_379 : i32
        %1347 = arith.index_cast %1346 : i32 to index
        %1348 = memref.load %arg4[%1347] : memref<576xf32, #tpu.memory_space<smem>>
        %c8_i32_380 = arith.constant 8 : i32
        %1349 = arith.addi %1323, %c8_i32_380 : i32
        %1350 = arith.index_cast %1349 : i32 to index
        %1351 = memref.load %arg4[%1350] : memref<576xf32, #tpu.memory_space<smem>>
        %1352 = vector.broadcast %1326 : f32 to vector<16x128xf32>
        %1353 = arith.subf %10, %1352 : vector<16x128xf32>
        %1354 = vector.broadcast %1329 : f32 to vector<16x128xf32>
        %1355 = arith.subf %11, %1354 : vector<16x128xf32>
        %1356 = vector.broadcast %1332 : f32 to vector<16x128xf32>
        %1357 = arith.mulf %1356, %1353 : vector<16x128xf32>
        %1358 = vector.broadcast %1335 : f32 to vector<16x128xf32>
        %1359 = arith.mulf %1358, %1355 : vector<16x128xf32>
        %1360 = arith.addf %1357, %1359 : vector<16x128xf32>
        %1361 = arith.mulf %1353, %1360 : vector<16x128xf32>
        %1362 = arith.mulf %1355, %1355 : vector<16x128xf32>
        %1363 = vector.broadcast %1338 : f32 to vector<16x128xf32>
        %1364 = arith.mulf %1363, %1362 : vector<16x128xf32>
        %1365 = arith.addf %1361, %1364 : vector<16x128xf32>
        %1366 = math.exp %1365 : vector<16x128xf32>
        %cst_381 = arith.constant 0.000000e+00 : f32
        %1367 = vector.broadcast %cst_381 : f32 to vector<16x128xf32>
        %1368 = arith.cmpf ole, %1365, %1367 : vector<16x128xf32>
        %1369 = vector.broadcast %1342 : f32 to vector<16x128xf32>
        %1370 = arith.mulf %1369, %1366 : vector<16x128xf32>
        %cst_382 = arith.constant 9.900000e-01 : f32
        %1371 = vector.broadcast %cst_382 : f32 to vector<16x128xf32>
        %1372 = arith.minimumf %1371, %1370 : vector<16x128xf32>
        %cst_383 = arith.constant 0.000000e+00 : f32
        %1373 = vector.broadcast %cst_383 : f32 to vector<16x128xf32>
        %1374 = arith.select %1368, %1372, %1373 : vector<16x128xi1>, vector<16x128xf32>
        %cst_384 = arith.constant 0.00392156886 : f32
        %1375 = vector.broadcast %cst_384 : f32 to vector<16x128xf32>
        %1376 = arith.cmpf oge, %1374, %1375 : vector<16x128xf32>
        %cst_385 = arith.constant 0.000000e+00 : f32
        %1377 = vector.broadcast %cst_385 : f32 to vector<16x128xf32>
        %1378 = arith.cmpf ogt, %1300, %1377 : vector<16x128xf32>
        %1379 = arith.andi %1376, %1378 : vector<16x128xi1>
        %cst_386 = arith.constant 1.000000e+00 : f32
        %1380 = vector.broadcast %cst_386 : f32 to vector<16x128xf32>
        %1381 = arith.subf %1380, %1374 : vector<16x128xf32>
        %1382 = arith.mulf %1300, %1381 : vector<16x128xf32>
        %cst_387 = arith.constant 9.99999974E-5 : f32
        %1383 = vector.broadcast %cst_387 : f32 to vector<16x128xf32>
        %1384 = arith.cmpf oge, %1382, %1383 : vector<16x128xf32>
        %1385 = arith.andi %1379, %1384 : vector<16x128xi1>
        %1386 = arith.xori %1379, %1385 : vector<16x128xi1>
        %1387 = arith.mulf %1374, %1300 : vector<16x128xf32>
        %cst_388 = arith.constant 0.000000e+00 : f32
        %1388 = vector.broadcast %cst_388 : f32 to vector<16x128xf32>
        %1389 = arith.select %1385, %1387, %1388 : vector<16x128xi1>, vector<16x128xf32>
        %1390 = vector.broadcast %1345 : f32 to vector<16x128xf32>
        %1391 = arith.mulf %1389, %1390 : vector<16x128xf32>
        %1392 = arith.addf %1290, %1391 : vector<16x128xf32>
        %1393 = vector.broadcast %1348 : f32 to vector<16x128xf32>
        %1394 = arith.mulf %1389, %1393 : vector<16x128xf32>
        %1395 = arith.addf %1293, %1394 : vector<16x128xf32>
        %1396 = vector.broadcast %1351 : f32 to vector<16x128xf32>
        %1397 = arith.mulf %1389, %1396 : vector<16x128xf32>
        %1398 = arith.addf %1296, %1397 : vector<16x128xf32>
        %cst_389 = arith.constant 0.000000e+00 : f32
        %1399 = vector.broadcast %cst_389 : f32 to vector<16x128xf32>
        %1400 = arith.subf %1399, %1300 : vector<16x128xf32>
        %1401 = arith.select %1385, %1382, %1300 : vector<16x128xi1>, vector<16x128xf32>
        %1402 = arith.select %1386, %1400, %1401 : vector<16x128xi1>, vector<16x128xf32>
        %c13_i32 = arith.constant 13 : i32
        %c16_i32_390 = arith.constant 16 : i32
        %1403 = arith.muli %arg11, %c16_i32_390 : i32
        %1404 = arith.addi %1403, %c13_i32 : i32
        %c4_i32_391 = arith.constant 4 : i32
        %1405 = arith.muli %1404, %c4_i32_391 : i32
        %c1_i32_392 = arith.constant 1 : i32
        %1406 = arith.addi %1405, %c1_i32_392 : i32
        %1407 = arith.index_cast %1406 : i32 to index
        %1408 = memref.load %arg3[%1407] : memref<256xi32, #tpu.memory_space<smem>>
        %1409 = arith.cmpi sge, %1408, %13 : i32
        %c0_i32_393 = arith.constant 0 : i32
        %1410 = arith.addi %1405, %c0_i32_393 : i32
        %1411 = arith.index_cast %1410 : i32 to index
        %1412 = memref.load %arg3[%1411] : memref<256xi32, #tpu.memory_space<smem>>
        %1413 = arith.cmpi sle, %1412, %14 : i32
        %1414 = arith.andi %1409, %1413 : i1
        %c3_i32_394 = arith.constant 3 : i32
        %1415 = arith.addi %1405, %c3_i32_394 : i32
        %1416 = arith.index_cast %1415 : i32 to index
        %1417 = memref.load %arg3[%1416] : memref<256xi32, #tpu.memory_space<smem>>
        %1418 = arith.cmpi sge, %1417, %0 : i32
        %1419 = arith.andi %1414, %1418 : i1
        %c2_i32_395 = arith.constant 2 : i32
        %1420 = arith.addi %1405, %c2_i32_395 : i32
        %1421 = arith.index_cast %1420 : i32 to index
        %1422 = memref.load %arg3[%1421] : memref<256xi32, #tpu.memory_space<smem>>
        %1423 = arith.cmpi sle, %1422, %12 : i32
        %1424 = arith.andi %1419, %1423 : i1
        %c9_i32_396 = arith.constant 9 : i32
        %1425 = arith.muli %1404, %c9_i32_396 : i32
        %c0_i32_397 = arith.constant 0 : i32
        %1426 = arith.addi %1425, %c0_i32_397 : i32
        %1427 = arith.index_cast %1426 : i32 to index
        %1428 = memref.load %arg4[%1427] : memref<576xf32, #tpu.memory_space<smem>>
        %c1_i32_398 = arith.constant 1 : i32
        %1429 = arith.addi %1425, %c1_i32_398 : i32
        %1430 = arith.index_cast %1429 : i32 to index
        %1431 = memref.load %arg4[%1430] : memref<576xf32, #tpu.memory_space<smem>>
        %c2_i32_399 = arith.constant 2 : i32
        %1432 = arith.addi %1425, %c2_i32_399 : i32
        %1433 = arith.index_cast %1432 : i32 to index
        %1434 = memref.load %arg4[%1433] : memref<576xf32, #tpu.memory_space<smem>>
        %c3_i32_400 = arith.constant 3 : i32
        %1435 = arith.addi %1425, %c3_i32_400 : i32
        %1436 = arith.index_cast %1435 : i32 to index
        %1437 = memref.load %arg4[%1436] : memref<576xf32, #tpu.memory_space<smem>>
        %c4_i32_401 = arith.constant 4 : i32
        %1438 = arith.addi %1425, %c4_i32_401 : i32
        %1439 = arith.index_cast %1438 : i32 to index
        %1440 = memref.load %arg4[%1439] : memref<576xf32, #tpu.memory_space<smem>>
        %c5_i32_402 = arith.constant 5 : i32
        %1441 = arith.addi %1425, %c5_i32_402 : i32
        %1442 = arith.index_cast %1441 : i32 to index
        %1443 = memref.load %arg4[%1442] : memref<576xf32, #tpu.memory_space<smem>>
        %cst_403 = arith.constant 0.000000e+00 : f32
        %1444 = arith.select %1424, %1443, %cst_403 : f32
        %c6_i32_404 = arith.constant 6 : i32
        %1445 = arith.addi %1425, %c6_i32_404 : i32
        %1446 = arith.index_cast %1445 : i32 to index
        %1447 = memref.load %arg4[%1446] : memref<576xf32, #tpu.memory_space<smem>>
        %c7_i32_405 = arith.constant 7 : i32
        %1448 = arith.addi %1425, %c7_i32_405 : i32
        %1449 = arith.index_cast %1448 : i32 to index
        %1450 = memref.load %arg4[%1449] : memref<576xf32, #tpu.memory_space<smem>>
        %c8_i32_406 = arith.constant 8 : i32
        %1451 = arith.addi %1425, %c8_i32_406 : i32
        %1452 = arith.index_cast %1451 : i32 to index
        %1453 = memref.load %arg4[%1452] : memref<576xf32, #tpu.memory_space<smem>>
        %1454 = vector.broadcast %1428 : f32 to vector<16x128xf32>
        %1455 = arith.subf %10, %1454 : vector<16x128xf32>
        %1456 = vector.broadcast %1431 : f32 to vector<16x128xf32>
        %1457 = arith.subf %11, %1456 : vector<16x128xf32>
        %1458 = vector.broadcast %1434 : f32 to vector<16x128xf32>
        %1459 = arith.mulf %1458, %1455 : vector<16x128xf32>
        %1460 = vector.broadcast %1437 : f32 to vector<16x128xf32>
        %1461 = arith.mulf %1460, %1457 : vector<16x128xf32>
        %1462 = arith.addf %1459, %1461 : vector<16x128xf32>
        %1463 = arith.mulf %1455, %1462 : vector<16x128xf32>
        %1464 = arith.mulf %1457, %1457 : vector<16x128xf32>
        %1465 = vector.broadcast %1440 : f32 to vector<16x128xf32>
        %1466 = arith.mulf %1465, %1464 : vector<16x128xf32>
        %1467 = arith.addf %1463, %1466 : vector<16x128xf32>
        %1468 = math.exp %1467 : vector<16x128xf32>
        %cst_407 = arith.constant 0.000000e+00 : f32
        %1469 = vector.broadcast %cst_407 : f32 to vector<16x128xf32>
        %1470 = arith.cmpf ole, %1467, %1469 : vector<16x128xf32>
        %1471 = vector.broadcast %1444 : f32 to vector<16x128xf32>
        %1472 = arith.mulf %1471, %1468 : vector<16x128xf32>
        %cst_408 = arith.constant 9.900000e-01 : f32
        %1473 = vector.broadcast %cst_408 : f32 to vector<16x128xf32>
        %1474 = arith.minimumf %1473, %1472 : vector<16x128xf32>
        %cst_409 = arith.constant 0.000000e+00 : f32
        %1475 = vector.broadcast %cst_409 : f32 to vector<16x128xf32>
        %1476 = arith.select %1470, %1474, %1475 : vector<16x128xi1>, vector<16x128xf32>
        %cst_410 = arith.constant 0.00392156886 : f32
        %1477 = vector.broadcast %cst_410 : f32 to vector<16x128xf32>
        %1478 = arith.cmpf oge, %1476, %1477 : vector<16x128xf32>
        %cst_411 = arith.constant 0.000000e+00 : f32
        %1479 = vector.broadcast %cst_411 : f32 to vector<16x128xf32>
        %1480 = arith.cmpf ogt, %1402, %1479 : vector<16x128xf32>
        %1481 = arith.andi %1478, %1480 : vector<16x128xi1>
        %cst_412 = arith.constant 1.000000e+00 : f32
        %1482 = vector.broadcast %cst_412 : f32 to vector<16x128xf32>
        %1483 = arith.subf %1482, %1476 : vector<16x128xf32>
        %1484 = arith.mulf %1402, %1483 : vector<16x128xf32>
        %cst_413 = arith.constant 9.99999974E-5 : f32
        %1485 = vector.broadcast %cst_413 : f32 to vector<16x128xf32>
        %1486 = arith.cmpf oge, %1484, %1485 : vector<16x128xf32>
        %1487 = arith.andi %1481, %1486 : vector<16x128xi1>
        %1488 = arith.xori %1481, %1487 : vector<16x128xi1>
        %1489 = arith.mulf %1476, %1402 : vector<16x128xf32>
        %cst_414 = arith.constant 0.000000e+00 : f32
        %1490 = vector.broadcast %cst_414 : f32 to vector<16x128xf32>
        %1491 = arith.select %1487, %1489, %1490 : vector<16x128xi1>, vector<16x128xf32>
        %1492 = vector.broadcast %1447 : f32 to vector<16x128xf32>
        %1493 = arith.mulf %1491, %1492 : vector<16x128xf32>
        %1494 = arith.addf %1392, %1493 : vector<16x128xf32>
        %1495 = vector.broadcast %1450 : f32 to vector<16x128xf32>
        %1496 = arith.mulf %1491, %1495 : vector<16x128xf32>
        %1497 = arith.addf %1395, %1496 : vector<16x128xf32>
        %1498 = vector.broadcast %1453 : f32 to vector<16x128xf32>
        %1499 = arith.mulf %1491, %1498 : vector<16x128xf32>
        %1500 = arith.addf %1398, %1499 : vector<16x128xf32>
        %cst_415 = arith.constant 0.000000e+00 : f32
        %1501 = vector.broadcast %cst_415 : f32 to vector<16x128xf32>
        %1502 = arith.subf %1501, %1402 : vector<16x128xf32>
        %1503 = arith.select %1487, %1484, %1402 : vector<16x128xi1>, vector<16x128xf32>
        %1504 = arith.select %1488, %1502, %1503 : vector<16x128xi1>, vector<16x128xf32>
        %c14_i32 = arith.constant 14 : i32
        %c16_i32_416 = arith.constant 16 : i32
        %1505 = arith.muli %arg11, %c16_i32_416 : i32
        %1506 = arith.addi %1505, %c14_i32 : i32
        %c4_i32_417 = arith.constant 4 : i32
        %1507 = arith.muli %1506, %c4_i32_417 : i32
        %c1_i32_418 = arith.constant 1 : i32
        %1508 = arith.addi %1507, %c1_i32_418 : i32
        %1509 = arith.index_cast %1508 : i32 to index
        %1510 = memref.load %arg3[%1509] : memref<256xi32, #tpu.memory_space<smem>>
        %1511 = arith.cmpi sge, %1510, %13 : i32
        %c0_i32_419 = arith.constant 0 : i32
        %1512 = arith.addi %1507, %c0_i32_419 : i32
        %1513 = arith.index_cast %1512 : i32 to index
        %1514 = memref.load %arg3[%1513] : memref<256xi32, #tpu.memory_space<smem>>
        %1515 = arith.cmpi sle, %1514, %14 : i32
        %1516 = arith.andi %1511, %1515 : i1
        %c3_i32_420 = arith.constant 3 : i32
        %1517 = arith.addi %1507, %c3_i32_420 : i32
        %1518 = arith.index_cast %1517 : i32 to index
        %1519 = memref.load %arg3[%1518] : memref<256xi32, #tpu.memory_space<smem>>
        %1520 = arith.cmpi sge, %1519, %0 : i32
        %1521 = arith.andi %1516, %1520 : i1
        %c2_i32_421 = arith.constant 2 : i32
        %1522 = arith.addi %1507, %c2_i32_421 : i32
        %1523 = arith.index_cast %1522 : i32 to index
        %1524 = memref.load %arg3[%1523] : memref<256xi32, #tpu.memory_space<smem>>
        %1525 = arith.cmpi sle, %1524, %12 : i32
        %1526 = arith.andi %1521, %1525 : i1
        %c9_i32_422 = arith.constant 9 : i32
        %1527 = arith.muli %1506, %c9_i32_422 : i32
        %c0_i32_423 = arith.constant 0 : i32
        %1528 = arith.addi %1527, %c0_i32_423 : i32
        %1529 = arith.index_cast %1528 : i32 to index
        %1530 = memref.load %arg4[%1529] : memref<576xf32, #tpu.memory_space<smem>>
        %c1_i32_424 = arith.constant 1 : i32
        %1531 = arith.addi %1527, %c1_i32_424 : i32
        %1532 = arith.index_cast %1531 : i32 to index
        %1533 = memref.load %arg4[%1532] : memref<576xf32, #tpu.memory_space<smem>>
        %c2_i32_425 = arith.constant 2 : i32
        %1534 = arith.addi %1527, %c2_i32_425 : i32
        %1535 = arith.index_cast %1534 : i32 to index
        %1536 = memref.load %arg4[%1535] : memref<576xf32, #tpu.memory_space<smem>>
        %c3_i32_426 = arith.constant 3 : i32
        %1537 = arith.addi %1527, %c3_i32_426 : i32
        %1538 = arith.index_cast %1537 : i32 to index
        %1539 = memref.load %arg4[%1538] : memref<576xf32, #tpu.memory_space<smem>>
        %c4_i32_427 = arith.constant 4 : i32
        %1540 = arith.addi %1527, %c4_i32_427 : i32
        %1541 = arith.index_cast %1540 : i32 to index
        %1542 = memref.load %arg4[%1541] : memref<576xf32, #tpu.memory_space<smem>>
        %c5_i32_428 = arith.constant 5 : i32
        %1543 = arith.addi %1527, %c5_i32_428 : i32
        %1544 = arith.index_cast %1543 : i32 to index
        %1545 = memref.load %arg4[%1544] : memref<576xf32, #tpu.memory_space<smem>>
        %cst_429 = arith.constant 0.000000e+00 : f32
        %1546 = arith.select %1526, %1545, %cst_429 : f32
        %c6_i32_430 = arith.constant 6 : i32
        %1547 = arith.addi %1527, %c6_i32_430 : i32
        %1548 = arith.index_cast %1547 : i32 to index
        %1549 = memref.load %arg4[%1548] : memref<576xf32, #tpu.memory_space<smem>>
        %c7_i32_431 = arith.constant 7 : i32
        %1550 = arith.addi %1527, %c7_i32_431 : i32
        %1551 = arith.index_cast %1550 : i32 to index
        %1552 = memref.load %arg4[%1551] : memref<576xf32, #tpu.memory_space<smem>>
        %c8_i32_432 = arith.constant 8 : i32
        %1553 = arith.addi %1527, %c8_i32_432 : i32
        %1554 = arith.index_cast %1553 : i32 to index
        %1555 = memref.load %arg4[%1554] : memref<576xf32, #tpu.memory_space<smem>>
        %1556 = vector.broadcast %1530 : f32 to vector<16x128xf32>
        %1557 = arith.subf %10, %1556 : vector<16x128xf32>
        %1558 = vector.broadcast %1533 : f32 to vector<16x128xf32>
        %1559 = arith.subf %11, %1558 : vector<16x128xf32>
        %1560 = vector.broadcast %1536 : f32 to vector<16x128xf32>
        %1561 = arith.mulf %1560, %1557 : vector<16x128xf32>
        %1562 = vector.broadcast %1539 : f32 to vector<16x128xf32>
        %1563 = arith.mulf %1562, %1559 : vector<16x128xf32>
        %1564 = arith.addf %1561, %1563 : vector<16x128xf32>
        %1565 = arith.mulf %1557, %1564 : vector<16x128xf32>
        %1566 = arith.mulf %1559, %1559 : vector<16x128xf32>
        %1567 = vector.broadcast %1542 : f32 to vector<16x128xf32>
        %1568 = arith.mulf %1567, %1566 : vector<16x128xf32>
        %1569 = arith.addf %1565, %1568 : vector<16x128xf32>
        %1570 = math.exp %1569 : vector<16x128xf32>
        %cst_433 = arith.constant 0.000000e+00 : f32
        %1571 = vector.broadcast %cst_433 : f32 to vector<16x128xf32>
        %1572 = arith.cmpf ole, %1569, %1571 : vector<16x128xf32>
        %1573 = vector.broadcast %1546 : f32 to vector<16x128xf32>
        %1574 = arith.mulf %1573, %1570 : vector<16x128xf32>
        %cst_434 = arith.constant 9.900000e-01 : f32
        %1575 = vector.broadcast %cst_434 : f32 to vector<16x128xf32>
        %1576 = arith.minimumf %1575, %1574 : vector<16x128xf32>
        %cst_435 = arith.constant 0.000000e+00 : f32
        %1577 = vector.broadcast %cst_435 : f32 to vector<16x128xf32>
        %1578 = arith.select %1572, %1576, %1577 : vector<16x128xi1>, vector<16x128xf32>
        %cst_436 = arith.constant 0.00392156886 : f32
        %1579 = vector.broadcast %cst_436 : f32 to vector<16x128xf32>
        %1580 = arith.cmpf oge, %1578, %1579 : vector<16x128xf32>
        %cst_437 = arith.constant 0.000000e+00 : f32
        %1581 = vector.broadcast %cst_437 : f32 to vector<16x128xf32>
        %1582 = arith.cmpf ogt, %1504, %1581 : vector<16x128xf32>
        %1583 = arith.andi %1580, %1582 : vector<16x128xi1>
        %cst_438 = arith.constant 1.000000e+00 : f32
        %1584 = vector.broadcast %cst_438 : f32 to vector<16x128xf32>
        %1585 = arith.subf %1584, %1578 : vector<16x128xf32>
        %1586 = arith.mulf %1504, %1585 : vector<16x128xf32>
        %cst_439 = arith.constant 9.99999974E-5 : f32
        %1587 = vector.broadcast %cst_439 : f32 to vector<16x128xf32>
        %1588 = arith.cmpf oge, %1586, %1587 : vector<16x128xf32>
        %1589 = arith.andi %1583, %1588 : vector<16x128xi1>
        %1590 = arith.xori %1583, %1589 : vector<16x128xi1>
        %1591 = arith.mulf %1578, %1504 : vector<16x128xf32>
        %cst_440 = arith.constant 0.000000e+00 : f32
        %1592 = vector.broadcast %cst_440 : f32 to vector<16x128xf32>
        %1593 = arith.select %1589, %1591, %1592 : vector<16x128xi1>, vector<16x128xf32>
        %1594 = vector.broadcast %1549 : f32 to vector<16x128xf32>
        %1595 = arith.mulf %1593, %1594 : vector<16x128xf32>
        %1596 = arith.addf %1494, %1595 : vector<16x128xf32>
        %1597 = vector.broadcast %1552 : f32 to vector<16x128xf32>
        %1598 = arith.mulf %1593, %1597 : vector<16x128xf32>
        %1599 = arith.addf %1497, %1598 : vector<16x128xf32>
        %1600 = vector.broadcast %1555 : f32 to vector<16x128xf32>
        %1601 = arith.mulf %1593, %1600 : vector<16x128xf32>
        %1602 = arith.addf %1500, %1601 : vector<16x128xf32>
        %cst_441 = arith.constant 0.000000e+00 : f32
        %1603 = vector.broadcast %cst_441 : f32 to vector<16x128xf32>
        %1604 = arith.subf %1603, %1504 : vector<16x128xf32>
        %1605 = arith.select %1589, %1586, %1504 : vector<16x128xi1>, vector<16x128xf32>
        %1606 = arith.select %1590, %1604, %1605 : vector<16x128xi1>, vector<16x128xf32>
        %c15_i32_442 = arith.constant 15 : i32
        %c16_i32_443 = arith.constant 16 : i32
        %1607 = arith.muli %arg11, %c16_i32_443 : i32
        %1608 = arith.addi %1607, %c15_i32_442 : i32
        %c4_i32_444 = arith.constant 4 : i32
        %1609 = arith.muli %1608, %c4_i32_444 : i32
        %c1_i32_445 = arith.constant 1 : i32
        %1610 = arith.addi %1609, %c1_i32_445 : i32
        %1611 = arith.index_cast %1610 : i32 to index
        %1612 = memref.load %arg3[%1611] : memref<256xi32, #tpu.memory_space<smem>>
        %1613 = arith.cmpi sge, %1612, %13 : i32
        %c0_i32_446 = arith.constant 0 : i32
        %1614 = arith.addi %1609, %c0_i32_446 : i32
        %1615 = arith.index_cast %1614 : i32 to index
        %1616 = memref.load %arg3[%1615] : memref<256xi32, #tpu.memory_space<smem>>
        %1617 = arith.cmpi sle, %1616, %14 : i32
        %1618 = arith.andi %1613, %1617 : i1
        %c3_i32_447 = arith.constant 3 : i32
        %1619 = arith.addi %1609, %c3_i32_447 : i32
        %1620 = arith.index_cast %1619 : i32 to index
        %1621 = memref.load %arg3[%1620] : memref<256xi32, #tpu.memory_space<smem>>
        %1622 = arith.cmpi sge, %1621, %0 : i32
        %1623 = arith.andi %1618, %1622 : i1
        %c2_i32_448 = arith.constant 2 : i32
        %1624 = arith.addi %1609, %c2_i32_448 : i32
        %1625 = arith.index_cast %1624 : i32 to index
        %1626 = memref.load %arg3[%1625] : memref<256xi32, #tpu.memory_space<smem>>
        %1627 = arith.cmpi sle, %1626, %12 : i32
        %1628 = arith.andi %1623, %1627 : i1
        %c9_i32_449 = arith.constant 9 : i32
        %1629 = arith.muli %1608, %c9_i32_449 : i32
        %c0_i32_450 = arith.constant 0 : i32
        %1630 = arith.addi %1629, %c0_i32_450 : i32
        %1631 = arith.index_cast %1630 : i32 to index
        %1632 = memref.load %arg4[%1631] : memref<576xf32, #tpu.memory_space<smem>>
        %c1_i32_451 = arith.constant 1 : i32
        %1633 = arith.addi %1629, %c1_i32_451 : i32
        %1634 = arith.index_cast %1633 : i32 to index
        %1635 = memref.load %arg4[%1634] : memref<576xf32, #tpu.memory_space<smem>>
        %c2_i32_452 = arith.constant 2 : i32
        %1636 = arith.addi %1629, %c2_i32_452 : i32
        %1637 = arith.index_cast %1636 : i32 to index
        %1638 = memref.load %arg4[%1637] : memref<576xf32, #tpu.memory_space<smem>>
        %c3_i32_453 = arith.constant 3 : i32
        %1639 = arith.addi %1629, %c3_i32_453 : i32
        %1640 = arith.index_cast %1639 : i32 to index
        %1641 = memref.load %arg4[%1640] : memref<576xf32, #tpu.memory_space<smem>>
        %c4_i32_454 = arith.constant 4 : i32
        %1642 = arith.addi %1629, %c4_i32_454 : i32
        %1643 = arith.index_cast %1642 : i32 to index
        %1644 = memref.load %arg4[%1643] : memref<576xf32, #tpu.memory_space<smem>>
        %c5_i32_455 = arith.constant 5 : i32
        %1645 = arith.addi %1629, %c5_i32_455 : i32
        %1646 = arith.index_cast %1645 : i32 to index
        %1647 = memref.load %arg4[%1646] : memref<576xf32, #tpu.memory_space<smem>>
        %cst_456 = arith.constant 0.000000e+00 : f32
        %1648 = arith.select %1628, %1647, %cst_456 : f32
        %c6_i32_457 = arith.constant 6 : i32
        %1649 = arith.addi %1629, %c6_i32_457 : i32
        %1650 = arith.index_cast %1649 : i32 to index
        %1651 = memref.load %arg4[%1650] : memref<576xf32, #tpu.memory_space<smem>>
        %c7_i32_458 = arith.constant 7 : i32
        %1652 = arith.addi %1629, %c7_i32_458 : i32
        %1653 = arith.index_cast %1652 : i32 to index
        %1654 = memref.load %arg4[%1653] : memref<576xf32, #tpu.memory_space<smem>>
        %c8_i32_459 = arith.constant 8 : i32
        %1655 = arith.addi %1629, %c8_i32_459 : i32
        %1656 = arith.index_cast %1655 : i32 to index
        %1657 = memref.load %arg4[%1656] : memref<576xf32, #tpu.memory_space<smem>>
        %1658 = vector.broadcast %1632 : f32 to vector<16x128xf32>
        %1659 = arith.subf %10, %1658 : vector<16x128xf32>
        %1660 = vector.broadcast %1635 : f32 to vector<16x128xf32>
        %1661 = arith.subf %11, %1660 : vector<16x128xf32>
        %1662 = vector.broadcast %1638 : f32 to vector<16x128xf32>
        %1663 = arith.mulf %1662, %1659 : vector<16x128xf32>
        %1664 = vector.broadcast %1641 : f32 to vector<16x128xf32>
        %1665 = arith.mulf %1664, %1661 : vector<16x128xf32>
        %1666 = arith.addf %1663, %1665 : vector<16x128xf32>
        %1667 = arith.mulf %1659, %1666 : vector<16x128xf32>
        %1668 = arith.mulf %1661, %1661 : vector<16x128xf32>
        %1669 = vector.broadcast %1644 : f32 to vector<16x128xf32>
        %1670 = arith.mulf %1669, %1668 : vector<16x128xf32>
        %1671 = arith.addf %1667, %1670 : vector<16x128xf32>
        %1672 = math.exp %1671 : vector<16x128xf32>
        %cst_460 = arith.constant 0.000000e+00 : f32
        %1673 = vector.broadcast %cst_460 : f32 to vector<16x128xf32>
        %1674 = arith.cmpf ole, %1671, %1673 : vector<16x128xf32>
        %1675 = vector.broadcast %1648 : f32 to vector<16x128xf32>
        %1676 = arith.mulf %1675, %1672 : vector<16x128xf32>
        %cst_461 = arith.constant 9.900000e-01 : f32
        %1677 = vector.broadcast %cst_461 : f32 to vector<16x128xf32>
        %1678 = arith.minimumf %1677, %1676 : vector<16x128xf32>
        %cst_462 = arith.constant 0.000000e+00 : f32
        %1679 = vector.broadcast %cst_462 : f32 to vector<16x128xf32>
        %1680 = arith.select %1674, %1678, %1679 : vector<16x128xi1>, vector<16x128xf32>
        %cst_463 = arith.constant 0.00392156886 : f32
        %1681 = vector.broadcast %cst_463 : f32 to vector<16x128xf32>
        %1682 = arith.cmpf oge, %1680, %1681 : vector<16x128xf32>
        %cst_464 = arith.constant 0.000000e+00 : f32
        %1683 = vector.broadcast %cst_464 : f32 to vector<16x128xf32>
        %1684 = arith.cmpf ogt, %1606, %1683 : vector<16x128xf32>
        %1685 = arith.andi %1682, %1684 : vector<16x128xi1>
        %cst_465 = arith.constant 1.000000e+00 : f32
        %1686 = vector.broadcast %cst_465 : f32 to vector<16x128xf32>
        %1687 = arith.subf %1686, %1680 : vector<16x128xf32>
        %1688 = arith.mulf %1606, %1687 : vector<16x128xf32>
        %cst_466 = arith.constant 9.99999974E-5 : f32
        %1689 = vector.broadcast %cst_466 : f32 to vector<16x128xf32>
        %1690 = arith.cmpf oge, %1688, %1689 : vector<16x128xf32>
        %1691 = arith.andi %1685, %1690 : vector<16x128xi1>
        %1692 = arith.xori %1685, %1691 : vector<16x128xi1>
        %1693 = arith.mulf %1680, %1606 : vector<16x128xf32>
        %cst_467 = arith.constant 0.000000e+00 : f32
        %1694 = vector.broadcast %cst_467 : f32 to vector<16x128xf32>
        %1695 = arith.select %1691, %1693, %1694 : vector<16x128xi1>, vector<16x128xf32>
        %1696 = vector.broadcast %1651 : f32 to vector<16x128xf32>
        %1697 = arith.mulf %1695, %1696 : vector<16x128xf32>
        %1698 = arith.addf %1596, %1697 : vector<16x128xf32>
        %1699 = vector.broadcast %1654 : f32 to vector<16x128xf32>
        %1700 = arith.mulf %1695, %1699 : vector<16x128xf32>
        %1701 = arith.addf %1599, %1700 : vector<16x128xf32>
        %1702 = vector.broadcast %1657 : f32 to vector<16x128xf32>
        %1703 = arith.mulf %1695, %1702 : vector<16x128xf32>
        %1704 = arith.addf %1602, %1703 : vector<16x128xf32>
        %cst_468 = arith.constant 0.000000e+00 : f32
        %1705 = vector.broadcast %cst_468 : f32 to vector<16x128xf32>
        %1706 = arith.subf %1705, %1606 : vector<16x128xf32>
        %1707 = arith.select %1691, %1688, %1606 : vector<16x128xi1>, vector<16x128xf32>
        %1708 = arith.select %1692, %1706, %1707 : vector<16x128xi1>, vector<16x128xf32>
        %c16_i32_469 = arith.constant 16 : i32
        %c0_470 = arith.constant 0 : index
        %c0_471 = arith.constant 0 : index
        %1709 = vector.load %arg6[%c0_470, %c0_471] : memref<16x128xf32, #tpu.memory_space<vmem>>, vector<16x128xf32>
        tpu.vector_store %arg6[%c0_470, %c0_471], %1708 {strides = array<i32>} : memref<16x128xf32, #tpu.memory_space<vmem>>, vector<16x128xf32>,
        %c0_472 = arith.constant 0 : index
        %c0_473 = arith.constant 0 : index
        %1710 = vector.load %arg7[%c0_472, %c0_473] : memref<16x128xf32, #tpu.memory_space<vmem>>, vector<16x128xf32>
        tpu.vector_store %arg7[%c0_472, %c0_473], %1698 {strides = array<i32>} : memref<16x128xf32, #tpu.memory_space<vmem>>, vector<16x128xf32>,
        %c0_474 = arith.constant 0 : index
        %c0_475 = arith.constant 0 : index
        %1711 = vector.load %arg8[%c0_474, %c0_475] : memref<16x128xf32, #tpu.memory_space<vmem>>, vector<16x128xf32>
        tpu.vector_store %arg8[%c0_474, %c0_475], %1701 {strides = array<i32>} : memref<16x128xf32, #tpu.memory_space<vmem>>, vector<16x128xf32>,
        %c0_476 = arith.constant 0 : index
        %c0_477 = arith.constant 0 : index
        %1712 = vector.load %arg9[%c0_476, %c0_477] : memref<16x128xf32, #tpu.memory_space<vmem>>, vector<16x128xf32>
        tpu.vector_store %arg9[%c0_476, %c0_477], %1704 {strides = array<i32>} : memref<16x128xf32, #tpu.memory_space<vmem>>, vector<16x128xf32>,
        %1713 = vector.shape_cast %1708 : vector<16x128xf32> to vector<1x16x128xf32>
        %cst_478 = arith.constant dense<0xFF800000> : vector<1xf32>
        %1714 = vector.multi_reduction <maximumf>, %1713, %cst_478 [1, 2] : vector<1x16x128xf32> to vector<1xf32>
        %1715 = vector.shape_cast %1714 : vector<1xf32> to vector<1x1x1xf32>
        %1716 = vector.extract %1715[0, 0, 0] : f32 from vector<1x1x1xf32>
        %cst_479 = arith.constant 0.000000e+00 : f32
        %1717 = arith.cmpf ole, %1716, %cst_479 : f32
        %1718 = arith.extui %1717 : i1 to i32
        %c0_480 = arith.constant 0 : index
        %1719 = memref.load %arg10[%c0_480] : memref<1xi32, #tpu.memory_space<smem>>
        memref.store %1718, %arg10[%c0_480] : memref<1xi32, #tpu.memory_space<smem>>
      } else {
      }
    }
    %c4_i32_14 = arith.constant 4 : i32
    %c0_15 = arith.constant 0 : index
    %c0_16 = arith.constant 0 : index
    %25 = vector.load %arg6[%c0_15, %c0_16] : memref<16x128xf32, #tpu.memory_space<vmem>>, vector<16x128xf32>
    %26 = math.absf %25 : vector<16x128xf32>
    %c0_17 = arith.constant 0 : index
    %c0_18 = arith.constant 0 : index
    %27 = vector.load %arg7[%c0_17, %c0_18] : memref<16x128xf32, #tpu.memory_space<vmem>>, vector<16x128xf32>
    %cst_19 = arith.constant 0.000000e+00 : f32
    %28 = vector.broadcast %cst_19 : f32 to vector<16x128xf32>
    %29 = arith.mulf %26, %28 : vector<16x128xf32>
    %30 = arith.addf %27, %29 : vector<16x128xf32>
    %c0_20 = arith.constant 0 : index
    %c0_21 = arith.constant 0 : index
    %c0_22 = arith.constant 0 : index
    %31 = vector.load %arg5[%c0_20, %c0_21, %c0_22] : memref<3x16x128xf32, #tpu.memory_space<vmem>>, vector<1x16x128xf32>
    %32 = vector.shape_cast %31 : vector<1x16x128xf32> to vector<16x128xf32>
    %33 = vector.shape_cast %30 : vector<16x128xf32> to vector<1x16x128xf32>
    tpu.vector_store %arg5[%c0_20, %c0_21, %c0_22], %33 {strides = array<i32>} : memref<3x16x128xf32, #tpu.memory_space<vmem>>, vector<1x16x128xf32>,
    %c0_23 = arith.constant 0 : index
    %c0_24 = arith.constant 0 : index
    %34 = vector.load %arg8[%c0_23, %c0_24] : memref<16x128xf32, #tpu.memory_space<vmem>>, vector<16x128xf32>
    %cst_25 = arith.constant 0.000000e+00 : f32
    %35 = vector.broadcast %cst_25 : f32 to vector<16x128xf32>
    %36 = arith.mulf %26, %35 : vector<16x128xf32>
    %37 = arith.addf %34, %36 : vector<16x128xf32>
    %c1 = arith.constant 1 : index
    %c0_26 = arith.constant 0 : index
    %c0_27 = arith.constant 0 : index
    %38 = vector.load %arg5[%c1, %c0_26, %c0_27] : memref<3x16x128xf32, #tpu.memory_space<vmem>>, vector<1x16x128xf32>
    %39 = vector.shape_cast %38 : vector<1x16x128xf32> to vector<16x128xf32>
    %40 = vector.shape_cast %37 : vector<16x128xf32> to vector<1x16x128xf32>
    tpu.vector_store %arg5[%c1, %c0_26, %c0_27], %40 {strides = array<i32>} : memref<3x16x128xf32, #tpu.memory_space<vmem>>, vector<1x16x128xf32>,
    %c0_28 = arith.constant 0 : index
    %c0_29 = arith.constant 0 : index
    %41 = vector.load %arg9[%c0_28, %c0_29] : memref<16x128xf32, #tpu.memory_space<vmem>>, vector<16x128xf32>
    %cst_30 = arith.constant 0.000000e+00 : f32
    %42 = vector.broadcast %cst_30 : f32 to vector<16x128xf32>
    %43 = arith.mulf %26, %42 : vector<16x128xf32>
    %44 = arith.addf %41, %43 : vector<16x128xf32>
    %c2 = arith.constant 2 : index
    %c0_31 = arith.constant 0 : index
    %c0_32 = arith.constant 0 : index
    %45 = vector.load %arg5[%c2, %c0_31, %c0_32] : memref<3x16x128xf32, #tpu.memory_space<vmem>>, vector<1x16x128xf32>
    %46 = vector.shape_cast %45 : vector<1x16x128xf32> to vector<16x128xf32>
    %47 = vector.shape_cast %44 : vector<16x128xf32> to vector<1x16x128xf32>
    tpu.vector_store %arg5[%c2, %c0_31, %c0_32], %47 {strides = array<i32>} : memref<3x16x128xf32, #tpu.memory_space<vmem>>, vector<1x16x128xf32>,
    return
  }
  func.func @transform_0(%arg0: i32, %arg1: i32) -> i32 {
    %c0_i32 = arith.constant 0 : i32
    %c0_i32_0 = arith.constant 0 : i32
    return %c0_i32 : i32
  }
  func.func @transform_1(%arg0: i32, %arg1: i32) -> i32 {
    %c0_i32 = arith.constant 0 : i32
    %c0_i32_0 = arith.constant 0 : i32
    return %c0_i32 : i32
  }
  func.func @transform_2(%arg0: i32, %arg1: i32) -> i32 {
    %c0_i32 = arith.constant 0 : i32
    %c0_i32_0 = arith.constant 0 : i32
    return %c0_i32 : i32
  }
  func.func @transform_3(%arg0: i32, %arg1: i32) -> (i32, i32, i32) {
    %c0_i32 = arith.constant 0 : i32
    %c0_i32_0 = arith.constant 0 : i32
    return %c0_i32, %arg0, %arg1 : i32, i32, i32
  }
}

</mosaic_0001>

<llo_original>
// kernel: tpu_custom_call.1
$region0: #{tpu_custom_call.1}
  #allocation0 [shape = 'u32[]', space=smem, size = 0x4, offset = 0x4, fixed_abs, tag = 'smem constant byte address 0x4 - core index']
  #allocation1 [shape = 'u32[72,128]{1,0:T(1,128)}', space=vmem, size = 0x9000, scoped, tag = 'internal scratch']
  #allocation2 [shape = 'f32[16,128]{1,0:T(8,128)}', space=vmem, size = 0x2000, scoped, tag = 'scratch operand']
  #allocation3 [shape = 'f32[16,128]{1,0:T(8,128)}', space=vmem, size = 0x2000, scoped, tag = 'scratch operand']
  #allocation4 [shape = 'f32[16,128]{1,0:T(8,128)}', space=vmem, size = 0x2000, scoped, tag = 'scratch operand']
  #allocation5 [shape = 'f32[16,128]{1,0:T(8,128)}', space=vmem, size = 0x2000, scoped, tag = 'scratch operand']
  #allocation6 [shape = 's32[1]{0:T(128)}', space=smem, size = 0x200, scoped, tag = 'scratch operand']
  #allocation14 [shape = 's32[]', space=sflag, size = 0x4, offset = 0, fixed_abs, tag = 'sflag constant byte address 0x0 - dummy sync flag']
  %s0 = inlined_call_operand.hbm [shape: s32[16], index: 0, kind: input, shape index: {}]
  %s1 = inlined_call_operand.hbm [shape: s32[256], index: 1, kind: input, shape index: {}]
  %s2 = inlined_call_operand.hbm [shape: f32[576], index: 2, kind: input, shape index: {}]
  %s3 = inlined_call_operand.hbm [shape: f32[3,64,128], index: 3, kind: output, shape index: {}]
  %s4 = sld [smem:[#allocation0]]
  $region68: #{tpu_custom_call.1} parent=0
    _
  %s6 = ssub.s32 1, %s4
  %s7 = scalar_select 0, %s6, %s4
  $region1: #{tpu_custom_call.1} parent=0
    #allocation7 [shape = 'u8[512]{0}', space=smem, size = 0x200, scoped, tag = 'input window, operand 0, single buffered']
    #allocation8 [shape = 's32[2]{0}', space=sflag, size = 0x8, scoped, tag = 'scoped memory for tpu_custom_call.1']
    #allocation9 [shape = 's32[2]{0}', space=sflag, size = 0x8, scoped, tag = 'scoped memory for tpu_custom_call.1']
    #allocation10 [shape = 'u8[1024]{0}', space=smem, size = 0x400, scoped, tag = 'input window, operand 1, single buffered']
    #allocation11 [shape = 's32[1]{0}', space=sflag, size = 0x4, scoped, tag = 'scoped memory for tpu_custom_call.1']
    #allocation12 [shape = 'u8[2560]{0}', space=smem, size = 0xa00, scoped, tag = 'input window, operand 2, single buffered']
    #allocation13 [shape = 'u8[49152]{0}', space=vmem, size = 0xc000, scoped, tag = 'output window, operand 0']
    %8 = vsyncpa [#allocation9], 0
    %9 = vsyncpa [#allocation11], 0
    %10 = vsyncpa [#allocation8], 0
    %s11 = scalar_lea.sflag [#allocation8], 1
    %12 = vsyncpa %s11, 0
    loop: start=0, step=1, limit=6
    $region2: #{tpu_custom_call.1} parent=1 // loop_pre_header
      _
    $region3: #{tpu_custom_call.1} parent=1 // loop_header
      %s14 = sphi 0, %s18
      %p15 = scmp.ge.s32.totalorder %s14, 6
      %s21 = sphi 0, %s33
      %s22 = sphi 0, %s29
      %s23 = sphi 0, %s21
      %s24 = sphi 0, %s22
      %s25 = sphi 0, %s23
      %s26 = sphi 0, %s24
      %s34 = sphi 0, %s34
      %s36 = sphi 0, %s34
      %s37 = sphi 0, %s36
      %s51 = sphi 0, %s37
      %s55 = sphi 0, %s55
      %s57 = sphi 0, %s55
      %s58 = sphi 0, %s57
      %s72 = sphi 0, %s58
      %s76 = sphi 0, %s76
      %s78 = sphi 0, %s76
      %s79 = sphi 0, %s78
      %s93 = sphi 0, %s79
      %s101 = sphi 0, %s103
      %s104 = sphi 0, %s101
      %s105 = sphi 0, %s104
      %s121 = sphi 0, %s105
    $region4: #{tpu_custom_call.1} parent=1 // loop_header_branch
      %17 = sbr.rel (%p15) target = $region8
    $region5: #{tpu_custom_call.1} parent=1 // loop_body
      %s19 = ssub.s32 %s14, 1
      %s20 = ssub.s32 %s14, 2
      %s27 = sadd.s32 1, %s22
      %p28 = scmp.ge.s32.totalorder %s27, 1
      %s29 = scalar_select %p28, 0, %s27
      %s30 = sadd.s32 1, %s21
      %s31 = scalar_select %p28, %s30, %s21
      %p32 = scmp.ge.s32.totalorder %s31, 4
      %s33 = scalar_select %p32, 0, %s31
      %s35 = sadd.s32 %s34, 1
      %p38 = scmp.eq.s32.totalorder %s14, 3
      %p39 = scmp.ne.s32.totalorder %s34, %s36
      %p40 = scmp.eq.s32.totalorder %s14, 0
      %p41 = por %p39, %p40
      %p42 = scmp.ne.s32.totalorder %s34, %s36
      %p43 = scmp.eq.s32.totalorder %s19, 3
      %p44 = por %p42, %p43
      %p45 = scmp.ne.s32.totalorder %s36, %s37
      %p46 = scmp.eq.s32.totalorder %s19, 0
      %p47 = por %p45, %p46
      %p48 = scmp.ne.s32.totalorder %s36, %s37
      %p49 = scmp.eq.s32.totalorder %s20, 3
      %p50 = por %p48, %p49
      %p52 = scmp.ne.s32.totalorder %s37, %s51
      %p53 = scmp.eq.s32.totalorder %s20, 0
      %p54 = por %p52, %p53
      %s56 = sadd.s32 %s55, 1
      %p59 = scmp.eq.s32.totalorder %s14, 3
      %p60 = scmp.ne.s32.totalorder %s55, %s57
      %p61 = scmp.eq.s32.totalorder %s14, 0
      %p62 = por %p60, %p61
      %p63 = scmp.ne.s32.totalorder %s55, %s57
      %p64 = scmp.eq.s32.totalorder %s19, 3
      %p65 = por %p63, %p64
      %p66 = scmp.ne.s32.totalorder %s57, %s58
      %p67 = scmp.eq.s32.totalorder %s19, 0
      %p68 = por %p66, %p67
      %p69 = scmp.ne.s32.totalorder %s57, %s58
      %p70 = scmp.eq.s32.totalorder %s20, 3
      %p71 = por %p69, %p70
      %p73 = scmp.ne.s32.totalorder %s58, %s72
      %p74 = scmp.eq.s32.totalorder %s20, 0
      %p75 = por %p73, %p74
      %s77 = sadd.s32 %s76, 1
      %p80 = scmp.eq.s32.totalorder %s14, 3
      %p81 = scmp.ne.s32.totalorder %s76, %s78
      %p82 = scmp.eq.s32.totalorder %s14, 0
      %p83 = por %p81, %p82
      %p84 = scmp.ne.s32.totalorder %s76, %s78
      %p85 = scmp.eq.s32.totalorder %s19, 3
      %p86 = por %p84, %p85
      %p87 = scmp.ne.s32.totalorder %s78, %s79
      %p88 = scmp.eq.s32.totalorder %s19, 0
      %p89 = por %p87, %p88
      %p90 = scmp.ne.s32.totalorder %s78, %s79
      %p91 = scmp.eq.s32.totalorder %s20, 3
      %p92 = por %p90, %p91
      %p94 = scmp.ne.s32.totalorder %s79, %s93
      %p95 = scmp.eq.s32.totalorder %s20, 0
      %p96 = por %p94, %p95
      %s97 = ssub.s32 %s21, %s33
      %s98 = ssub.s32 %s22, %s29
      %s99 = sor.u32 %s97, %s98
      %p100 = scmp.eq.s32.totalorder %s99, 0
      %s102 = sadd.s32 %s101, 1
      %s103 = scalar_select %p100, %s101, %s102
      %p106 = pneg %p100
      %p107 = scmp.eq.s32.totalorder %s14, 3
      %p108 = por %p106, %p107
      %p109 = scmp.ne.s32.totalorder %s101, %s104
      %p110 = scmp.eq.s32.totalorder %s14, 0
      %p111 = por %p109, %p110
      %p112 = scmp.ne.s32.totalorder %s101, %s104
      %p113 = scmp.eq.s32.totalorder %s19, 3
      %p114 = por %p112, %p113
      %p115 = scmp.ne.s32.totalorder %s104, %s105
      %p116 = scmp.eq.s32.totalorder %s19, 0
      %p117 = por %p115, %p116
      %p118 = scmp.ne.s32.totalorder %s104, %s105
      %p119 = scmp.eq.s32.totalorder %s20, 3
      %p120 = por %p118, %p119
      %p122 = scmp.ne.s32.totalorder %s105, %s121
      %p123 = scmp.eq.s32.totalorder %s20, 0
      %p124 = por %p122, %p123
      %p125 = scmp.le.s32.totalorder 1, %s14
      %p126 = scmp.lt.s32.totalorder %s14, 5
      %p127 = pnand %p125, %p126
      %p128 = pneg %p127
      // Predicated region
      $region9: #{tpu_custom_call.1} parent=5 // pred_check
        _
      $region10: #{tpu_custom_call.1} parent=5 // pred_check_branch
        %130 = sbr.rel (%p127) target = $region12
      $region11: #{tpu_custom_call.1} parent=5 // pred_region
        %s131 = ssub.s32 %s14, 1
        // Predicated region
        $region13: #{tpu_custom_call.1} parent=11 // pred_check
          %p132 = pneg %p47
        $region14: #{tpu_custom_call.1} parent=11 // pred_check_branch
          %134 = sbr.rel (%p132) target = $region16
        $region15: #{tpu_custom_call.1} parent=11 // pred_region
          %136 = vsyncadd [#allocation9], 0
          %s138 = sshll.u32 %s0, 4
          %s139 = int_to_ptr.hbm [resolvable:$true] %s138
          %141 = dma.hbm_to_smem %s139, 16, [#allocation7], [#allocation9]
        $region16: #{tpu_custom_call.1} parent=11 // pred_fallthru
          _
        // Predicated region
        $region17: #{tpu_custom_call.1} parent=11 // pred_check
          %p142 = pneg %p68
        $region18: #{tpu_custom_call.1} parent=11 // pred_check_branch
          %144 = sbr.rel (%p142) target = $region20
        $region19: #{tpu_custom_call.1} parent=11 // pred_region
          %146 = vsyncadd [#allocation11], 0
          %s148 = sshll.u32 %s1, 4
          %s149 = int_to_ptr.hbm [resolvable:$true] %s148
          %151 = dma.hbm_to_smem %s149, 32, [#allocation10], [#allocation11]
        $region20: #{tpu_custom_call.1} parent=11 // pred_fallthru
          _
        // Predicated region
        $region21: #{tpu_custom_call.1} parent=11 // pred_check
          %p152 = pneg %p89
        $region22: #{tpu_custom_call.1} parent=11 // pred_check_branch
          %154 = sbr.rel (%p152) target = $region24
        $region23: #{tpu_custom_call.1} parent=11 // pred_region
          %156 = vsyncadd [#allocation11], 0
          %s158 = sshll.u32 %s2, 4
          %s159 = int_to_ptr.hbm [resolvable:$true] %s158
          %161 = dma.hbm_to_smem %s159, 80, [#allocation12], [#allocation11]
        $region24: #{tpu_custom_call.1} parent=11 // pred_fallthru
          _
      $region12: #{tpu_custom_call.1} parent=5 // pred_fallthru
        _
      %p162 = scmp.lt.s32.totalorder %s14, 4
      // Predicated region
      $region25: #{tpu_custom_call.1} parent=5 // pred_check
        %p163 = pneg %p162
      $region26: #{tpu_custom_call.1} parent=5 // pred_check_branch
        %165 = sbr.rel (%p163) target = $region28
      $region27: #{tpu_custom_call.1} parent=5 // pred_region
        _
      $region28: #{tpu_custom_call.1} parent=5 // pred_fallthru
        _
      %p166 = scmp.le.s32.totalorder 1, %s14
      %p167 = scmp.lt.s32.totalorder %s14, 5
      %p168 = pnand %p166, %p167
      %p169 = pneg %p168
      // Predicated region
      $region29: #{tpu_custom_call.1} parent=5 // pred_check
        _
      $region30: #{tpu_custom_call.1} parent=5 // pred_check_branch
        %171 = sbr.rel (%p168) target = $region32
      $region31: #{tpu_custom_call.1} parent=5 // pred_region
        %s172 = ssub.s32 %s14, 1
        // Predicated region
        $region33: #{tpu_custom_call.1} parent=31 // pred_check
          %p173 = pneg %p47
        $region34: #{tpu_custom_call.1} parent=31 // pred_check_branch
          %175 = sbr.rel (%p173) target = $region36
        $region35: #{tpu_custom_call.1} parent=31 // pred_region
          %177 = dma.done [#allocation9], 16
        $region36: #{tpu_custom_call.1} parent=31 // pred_fallthru
          _
        // Predicated region
        $region37: #{tpu_custom_call.1} parent=31 // pred_check
          %p178 = pneg %p68
        $region38: #{tpu_custom_call.1} parent=31 // pred_check_branch
          %180 = sbr.rel (%p178) target = $region40
        $region39: #{tpu_custom_call.1} parent=31 // pred_region
          %182 = dma.done [#allocation11], 32
        $region40: #{tpu_custom_call.1} parent=31 // pred_fallthru
          _
        // Predicated region
        $region41: #{tpu_custom_call.1} parent=31 // pred_check
          %p183 = pneg %p89
        $region42: #{tpu_custom_call.1} parent=31 // pred_check_branch
          %185 = sbr.rel (%p183) target = $region44
        $region43: #{tpu_custom_call.1} parent=31 // pred_region
          %187 = dma.done [#allocation11], 80
        $region44: #{tpu_custom_call.1} parent=31 // pred_fallthru
          _
        %188 = sfence
        %p189 = pneg %p47
        %p190 = pneg %p44
        %p191 = pneg %p68
        %p192 = pneg %p65
        %p193 = pneg %p89
        %p194 = pneg %p86
        %p195 = pneg %p117
        %p196 = pneg %p114
        %s197 = sand.u32 %s104, 1
        %s198 = scalar_lea.sflag [#allocation8], %s197
        %s199 = sand.u32 %s104, 1
        %s200 = smul.addr %s199, 48
        %s201 = scalar_lea.vmem [#allocation13], %s200
        %s202 = smul.u32 2, %s23
        %s203 = smul.u32 %s23, 16
        %s204 = smul.u32 %s24, 128
        %v205 = vlaneseq
        %v206 = vand.u32 %v205, 127
        %v207 = vstv %s204
        %v208 = vadd.s32 %v206, %v207
        %v209 = vlaneseq
        %v210 = vshrl.u32 %v209, 7
        %v211 = vadd.s32 %v210, 8
        %v212 = vstv %s203
        %v213 = vadd.s32 %v210, %v212
        %v214 = vadd.s32 %v211, %v212
        %v215 = vsub.s32 127, %v208
        %v216 = vcvt.s32.f32 %v215
        %v217 = vcvt.s32.f32 %v213
        %v218 = vcvt.s32.f32 %v214
        %s219 = sadd.s32 %s203, 15
        %s220 = ssub.s32 0, %s204
        %s221 = ssub.s32 127, %s204
        %222 = vst [vmem:[#allocation2] sm:$0xff] 1.0
        %223 = vst [vmem:[#allocation2 + $0x8] sm:$0xff] 1.0
        %224 = vst [vmem:[#allocation3] sm:$0xff] 0.0
        %225 = vst [vmem:[#allocation3 + $0x8] sm:$0xff] 0.0
        %226 = vst [vmem:[#allocation4] sm:$0xff] 0.0
        %227 = vst [vmem:[#allocation4 + $0x8] sm:$0xff] 0.0
        %228 = vst [vmem:[#allocation5] sm:$0xff] 0.0
        %229 = vst [vmem:[#allocation5 + $0x8] sm:$0xff] 0.0
        %s230 = scalar_lea.smem [#allocation6], 0
        %231 = sst [smem:[%s230]] 0
        loop: start=0, step=1, limit=4
        $region45: #{tpu_custom_call.1} parent=31 // loop_pre_header
          _
        $region46: #{tpu_custom_call.1} parent=31 // loop_header
          %s233 = sphi 0, %s237
          %p234 = scmp.ge.s32.totalorder %s233, 4
        $region47: #{tpu_custom_call.1} parent=31 // loop_header_branch
          %236 = sbr.rel (%p234) target = $region51
        $region48: #{tpu_custom_call.1} parent=31 // loop_body
          %s238 = smul.u32 %s233, 4
          %s239 = sld [smem:[#allocation7 + %s238]]
          %s240 = sadd.s32 %s238, 1
          %s241 = sld [smem:[#allocation7 + %s240]]
          %s242 = sadd.s32 %s238, 2
          %s243 = sld [smem:[#allocation7 + %s242]]
          %s244 = sadd.s32 %s238, 3
          %s245 = sld [smem:[#allocation7 + %s244]]
          %p246 = scmp.ge.s32.totalorder %s241, %s220
          %p247 = scmp.le.s32.totalorder %s239, %s221
          %p248 = pnand %p246, %p247
          %p249 = pneg %p248
          %p250 = scmp.ge.s32.totalorder %s245, %s203
          %p251 = pnand %p249, %p250
          %p252 = pneg %p251
          %p253 = scmp.le.s32.totalorder %s243, %s219
          %p254 = pnand %p252, %p253
          %p255 = pneg %p254
          %s256 = sld [smem:[#allocation6]]
          %p257 = scmp.eq.s32.totalorder %s256, 0
          %p258 = pnand %p255, %p257
          %p259 = pneg %p258
          // Predicated region
          $region52: #{tpu_custom_call.1} parent=48 // pred_check
            _
          $region53: #{tpu_custom_call.1} parent=48 // pred_check_branch
            %261 = sbr.rel (%p258) target = $region55
          $region54: #{tpu_custom_call.1} parent=48 // pred_region
            %v262 = vld [vmem:[#allocation2] sm:$0xff]
            %v263 = vld [vmem:[#allocation2 + $0x8] sm:$0xff]
            %v264 = vld [vmem:[#allocation3] sm:$0xff]
            %v265 = vld [vmem:[#allocation3 + $0x8] sm:$0xff]
            %v266 = vld [vmem:[#allocation4] sm:$0xff]
            %v267 = vld [vmem:[#allocation4 + $0x8] sm:$0xff]
            %v268 = vld [vmem:[#allocation5] sm:$0xff]
            %v269 = vld [vmem:[#allocation5 + $0x8] sm:$0xff]
            %s270 = smul.u32 %s233, 64
            %s271 = sadd.s32 %s270, 1
            %s272 = sld [smem:[#allocation10 + %s271]]
            %p273 = scmp.ge.s32.totalorder %s272, %s220
            %s274 = sld [smem:[#allocation10 + %s270]]
            %p275 = scmp.le.s32.totalorder %s274, %s221
            %p276 = pnand %p273, %p275
            %p277 = pneg %p276
            %s278 = sadd.s32 %s270, 3
            %s279 = sld [smem:[#allocation10 + %s278]]
            %p280 = scmp.ge.s32.totalorder %s279, %s203
            %p281 = pnand %p277, %p280
            %p282 = pneg %p281
            %s283 = sadd.s32 %s270, 2
            %s284 = sld [smem:[#allocation10 + %s283]]
            %p285 = scmp.le.s32.totalorder %s284, %s219
            %p286 = pnand %p282, %p285
            %p287 = pneg %p286
            %s288 = smul.u32 %s233, 144
            %s289 = sld [smem:[#allocation12 + %s288]]
            %s290 = sadd.s32 %s288, 1
            %s291 = sld [smem:[#allocation12 + %s290]]
            %s292 = sadd.s32 %s288, 2
            %s293 = sld [smem:[#allocation12 + %s292]]
            %s294 = sadd.s32 %s288, 3
            %s295 = sld [smem:[#allocation12 + %s294]]
            %s296 = sadd.s32 %s288, 4
            %s297 = sld [smem:[#allocation12 + %s296]]
            %s298 = sadd.s32 %s288, 5
            %s299 = sld [smem:[#allocation12 + %s298]]
            %s300 = scalar_select %p287, %s299, 0.0
            %s301 = sadd.s32 %s288, 6
            %s302 = sld [smem:[#allocation12 + %s301]]
            %s303 = sadd.s32 %s288, 7
            %s304 = sld [smem:[#allocation12 + %s303]]
            %s305 = sadd.s32 %s288, 8
            %s306 = sld [smem:[#allocation12 + %s305]]
            %v307 = vstv %s289
            %v308 = vsub.f32 %v216, %v307
            %v309 = vstv %s291
            %v310 = vsub.f32 %v217, %v309
            %v311 = vsub.f32 %v218, %v309
            %v312 = vstv %s293
            %v313 = vmul.f32 %v312, %v308
            %v314 = vstv %s295
            %v315 = vmul.f32 %v314, %v310
            %v316 = vmul.f32 %v314, %v311
            %v317 = vadd.f32 %v313, %v315
            %v318 = vadd.f32 %v313, %v316
            %v319 = vmul.f32 %v308, %v317
            %v320 = vmul.f32 %v308, %v318
            %v321 = vmul.f32 %v310, %v310
            %v322 = vmul.f32 %v311, %v311
            %v323 = vstv %s297
            %v324 = vmul.f32 %v323, %v321
            %v325 = vmul.f32 %v323, %v322
            %v326 = vadd.f32 %v319, %v324
            %v327 = vadd.f32 %v320, %v325
            %v328 = vmul.f32 %v326, 1.442695
            %v329 = vpow.pop %v328
            %v330 = vmul.f32 %v327, 1.442695
            %v331 = vpow.pop %v330
            %vm332 = vcmp.le.f32.partialorder %v326, 0.0
            %vm333 = vcmp.le.f32.partialorder %v327, 0.0
            %v334 = vstv %s300
            %v335 = vmul.f32 %v334, %v329
            %v336 = vmul.f32 %v334, %v331
            %v337 = vmin.f32 %v335, 0.99
            %v338 = vmin.f32 %v336, 0.99
            %v339 = vsel %vm332, %v337, 0.0
            %v340 = vsel %vm333, %v338, 0.0
            %vm341 = vcmp.ge.f32.partialorder %v339, 0.003921569
            %vm342 = vcmp.ge.f32.partialorder %v340, 0.003921569
            %vm343 = vcmp.gt.f32.partialorder %v262, 0.0
            %vm344 = vcmp.gt.f32.partialorder %v263, 0.0
            %vm345 = vmand %vm341, %vm343
            %vm346 = vmand %vm342, %vm344
            %v347 = vsub.f32 1.0, %v339
            %v348 = vsub.f32 1.0, %v340
            %v349 = vmul.f32 %v262, %v347
            %v350 = vmul.f32 %v263, %v348
            %vm351 = vcmp.ge.f32.partialorder %v349, 0.0001
            %vm352 = vcmp.ge.f32.partialorder %v350, 0.0001
            %vm353 = vmand %vm345, %vm351
            %vm354 = vmand %vm346, %vm352
            %vm355 = vmxor %vm345, %vm353
            %vm356 = vmxor %vm346, %vm354
            %v357 = vmul.f32 %v339, %v262
            %v358 = vmul.f32 %v340, %v263
            %v359 = vsel %vm353, %v357, 0.0
            %v360 = vsel %vm354, %v358, 0.0
            %v361 = vstv %s302
            %v362 = vmul.f32 %v359, %v361
            %v363 = vmul.f32 %v360, %v361
            %v364 = vadd.f32 %v264, %v362
            %v365 = vadd.f32 %v265, %v363
            %v366 = vstv %s304
            %v367 = vmul.f32 %v359, %v366
            %v368 = vmul.f32 %v360, %v366
            %v369 = vadd.f32 %v266, %v367
            %v370 = vadd.f32 %v267, %v368
            %v371 = vstv %s306
            %v372 = vmul.f32 %v359, %v371
            %v373 = vmul.f32 %v360, %v371
            %v374 = vadd.f32 %v268, %v372
            %v375 = vadd.f32 %v269, %v373
            %v376 = vsub.f32 0.0, %v262
            %v377 = vsub.f32 0.0, %v263
            %v378 = vsel %vm353, %v349, %v262
            %v379 = vsel %vm354, %v350, %v263
            %v380 = vsel %vm355, %v376, %v378
            %v381 = vsel %vm356, %v377, %v379
            %s382 = smul.u32 %s233, 16
            %s383 = sadd.s32 %s382, 1
            %s384 = smul.u32 %s383, 4
            %s385 = sadd.s32 %s384, 1
            %s386 = sld [smem:[#allocation10 + %s385]]
            %p387 = scmp.ge.s32.totalorder %s386, %s220
            %s388 = sld [smem:[#allocation10 + %s384]]
            %p389 = scmp.le.s32.totalorder %s388, %s221
            %p390 = pnand %p387, %p389
            %p391 = pneg %p390
            %s392 = sadd.s32 %s384, 3
            %s393 = sld [smem:[#allocation10 + %s392]]
            %p394 = scmp.ge.s32.totalorder %s393, %s203
            %p395 = pnand %p391, %p394
            %p396 = pneg %p395
            %s397 = sadd.s32 %s384, 2
            %s398 = sld [smem:[#allocation10 + %s397]]
            %p399 = scmp.le.s32.totalorder %s398, %s219
            %p400 = pnand %p396, %p399
            %p401 = pneg %p400
            %s402 = smul.u32 %s383, 9
            %s403 = sld [smem:[#allocation12 + %s402]]
            %s404 = sadd.s32 %s402, 1
            %s405 = sld [smem:[#allocation12 + %s404]]
            %s406 = sadd.s32 %s402, 2
            %s407 = sld [smem:[#allocation12 + %s406]]
            %s408 = sadd.s32 %s402, 3
            %s409 = sld [smem:[#allocation12 + %s408]]
            %s410 = sadd.s32 %s402, 4
            %s411 = sld [smem:[#allocation12 + %s410]]
            %s412 = sadd.s32 %s402, 5
            %s413 = sld [smem:[#allocation12 + %s412]]
            %s414 = scalar_select %p401, %s413, 0.0
            %s415 = sadd.s32 %s402, 6
            %s416 = sld [smem:[#allocation12 + %s415]]
            %s417 = sadd.s32 %s402, 7
            %s418 = sld [smem:[#allocation12 + %s417]]
            %s419 = sadd.s32 %s402, 8
            %s420 = sld [smem:[#allocation12 + %s419]]
            %v421 = vstv %s403
            %v422 = vsub.f32 %v216, %v421
            %v423 = vstv %s405
            %v424 = vsub.f32 %v217, %v423
            %v425 = vsub.f32 %v218, %v423
            %v426 = vstv %s407
            %v427 = vmul.f32 %v426, %v422
            %v428 = vstv %s409
            %v429 = vmul.f32 %v428, %v424
            %v430 = vmul.f32 %v428, %v425
            %v431 = vadd.f32 %v427, %v429
            %v432 = vadd.f32 %v427, %v430
            %v433 = vmul.f32 %v422, %v431
            %v434 = vmul.f32 %v422, %v432
            %v435 = vmul.f32 %v424, %v424
            %v436 = vmul.f32 %v425, %v425
            %v437 = vstv %s411
            %v438 = vmul.f32 %v437, %v435
            %v439 = vmul.f32 %v437, %v436
            %v440 = vadd.f32 %v433, %v438
            %v441 = vadd.f32 %v434, %v439
            %v442 = vmul.f32 %v440, 1.442695
            %v443 = vpow.pop %v442
            %v444 = vmul.f32 %v441, 1.442695
            %v445 = vpow.pop %v444
            %vm446 = vcmp.le.f32.partialorder %v440, 0.0
            %vm447 = vcmp.le.f32.partialorder %v441, 0.0
            %v448 = vstv %s414
            %v449 = vmul.f32 %v448, %v443
            %v450 = vmul.f32 %v448, %v445
            %v451 = vmin.f32 %v449, 0.99
            %v452 = vmin.f32 %v450, 0.99
            %v453 = vsel %vm446, %v451, 0.0
            %v454 = vsel %vm447, %v452, 0.0
            %vm455 = vcmp.ge.f32.partialorder %v453, 0.003921569
            %vm456 = vcmp.ge.f32.partialorder %v454, 0.003921569
            %vm457 = vcmp.gt.f32.partialorder %v380, 0.0
            %vm458 = vcmp.gt.f32.partialorder %v381, 0.0
            %vm459 = vmand %vm455, %vm457
            %vm460 = vmand %vm456, %vm458
            %v461 = vsub.f32 1.0, %v453
            %v462 = vsub.f32 1.0, %v454
            %v463 = vmul.f32 %v380, %v461
            %v464 = vmul.f32 %v381, %v462
            %vm465 = vcmp.ge.f32.partialorder %v463, 0.0001
            %vm466 = vcmp.ge.f32.partialorder %v464, 0.0001
            %vm467 = vmand %vm459, %vm465
            %vm468 = vmand %vm460, %vm466
            %vm469 = vmxor %vm459, %vm467
            %vm470 = vmxor %vm460, %vm468
            %v471 = vmul.f32 %v453, %v380
            %v472 = vmul.f32 %v454, %v381
            %v473 = vsel %vm467, %v471, 0.0
            %v474 = vsel %vm468, %v472, 0.0
            %v475 = vstv %s416
            %v476 = vmul.f32 %v473, %v475
            %v477 = vmul.f32 %v474, %v475
            %v478 = vadd.f32 %v364, %v476
            %v479 = vadd.f32 %v365, %v477
            %v480 = vstv %s418
            %v481 = vmul.f32 %v473, %v480
            %v482 = vmul.f32 %v474, %v480
            %v483 = vadd.f32 %v369, %v481
            %v484 = vadd.f32 %v370, %v482
            %v485 = vstv %s420
            %v486 = vmul.f32 %v473, %v485
            %v487 = vmul.f32 %v474, %v485
            %v488 = vadd.f32 %v374, %v486
            %v489 = vadd.f32 %v375, %v487
            %v490 = vsub.f32 0.0, %v380
            %v491 = vsub.f32 0.0, %v381
            %v492 = vsel %vm467, %v463, %v380
            %v493 = vsel %vm468, %v464, %v381
            %v494 = vsel %vm469, %v490, %v492
            %v495 = vsel %vm470, %v491, %v493
            %s496 = sadd.s32 %s382, 2
            %s497 = smul.u32 %s496, 4
            %s498 = sadd.s32 %s497, 1
            %s499 = sld [smem:[#allocation10 + %s498]]
            %p500 = scmp.ge.s32.totalorder %s499, %s220
            %s501 = sld [smem:[#allocation10 + %s497]]
            %p502 = scmp.le.s32.totalorder %s501, %s221
            %p503 = pnand %p500, %p502
            %p504 = pneg %p503
            %s505 = sadd.s32 %s497, 3
            %s506 = sld [smem:[#allocation10 + %s505]]
            %p507 = scmp.ge.s32.totalorder %s506, %s203
            %p508 = pnand %p504, %p507
            %p509 = pneg %p508
            %s510 = sadd.s32 %s497, 2
            %s511 = sld [smem:[#allocation10 + %s510]]
            %p512 = scmp.le.s32.totalorder %s511, %s219
            %p513 = pnand %p509, %p512
            %p514 = pneg %p513
            %s515 = smul.u32 %s496, 9
            %s516 = sld [smem:[#allocation12 + %s515]]
            %s517 = sadd.s32 %s515, 1
            %s518 = sld [smem:[#allocation12 + %s517]]
            %s519 = sadd.s32 %s515, 2
            %s520 = sld [smem:[#allocation12 + %s519]]
            %s521 = sadd.s32 %s515, 3
            %s522 = sld [smem:[#allocation12 + %s521]]
            %s523 = sadd.s32 %s515, 4
            %s524 = sld [smem:[#allocation12 + %s523]]
            %s525 = sadd.s32 %s515, 5
            %s526 = sld [smem:[#allocation12 + %s525]]
            %s527 = scalar_select %p514, %s526, 0.0
            %s528 = sadd.s32 %s515, 6
            %s529 = sld [smem:[#allocation12 + %s528]]
            %s530 = sadd.s32 %s515, 7
            %s531 = sld [smem:[#allocation12 + %s530]]
            %s532 = sadd.s32 %s515, 8
            %s533 = sld [smem:[#allocation12 + %s532]]
            %v534 = vstv %s516
            %v535 = vsub.f32 %v216, %v534
            %v536 = vstv %s518
            %v537 = vsub.f32 %v217, %v536
            %v538 = vsub.f32 %v218, %v536
            %v539 = vstv %s520
            %v540 = vmul.f32 %v539, %v535
            %v541 = vstv %s522
            %v542 = vmul.f32 %v541, %v537
            %v543 = vmul.f32 %v541, %v538
            %v544 = vadd.f32 %v540, %v542
            %v545 = vadd.f32 %v540, %v543
            %v546 = vmul.f32 %v535, %v544
            %v547 = vmul.f32 %v535, %v545
            %v548 = vmul.f32 %v537, %v537
            %v549 = vmul.f32 %v538, %v538
            %v550 = vstv %s524
            %v551 = vmul.f32 %v550, %v548
            %v552 = vmul.f32 %v550, %v549
            %v553 = vadd.f32 %v546, %v551
            %v554 = vadd.f32 %v547, %v552
            %v555 = vmul.f32 %v553, 1.442695
            %v556 = vpow.pop %v555
            %v557 = vmul.f32 %v554, 1.442695
            %v558 = vpow.pop %v557
            %vm559 = vcmp.le.f32.partialorder %v553, 0.0
            %vm560 = vcmp.le.f32.partialorder %v554, 0.0
            %v561 = vstv %s527
            %v562 = vmul.f32 %v561, %v556
            %v563 = vmul.f32 %v561, %v558
            %v564 = vmin.f32 %v562, 0.99
            %v565 = vmin.f32 %v563, 0.99
            %v566 = vsel %vm559, %v564, 0.0
            %v567 = vsel %vm560, %v565, 0.0
            %vm568 = vcmp.ge.f32.partialorder %v566, 0.003921569
            %vm569 = vcmp.ge.f32.partialorder %v567, 0.003921569
            %vm570 = vcmp.gt.f32.partialorder %v494, 0.0
            %vm571 = vcmp.gt.f32.partialorder %v495, 0.0
            %vm572 = vmand %vm568, %vm570
            %vm573 = vmand %vm569, %vm571
            %v574 = vsub.f32 1.0, %v566
            %v575 = vsub.f32 1.0, %v567
            %v576 = vmul.f32 %v494, %v574
            %v577 = vmul.f32 %v495, %v575
            %vm578 = vcmp.ge.f32.partialorder %v576, 0.0001
            %vm579 = vcmp.ge.f32.partialorder %v577, 0.0001
            %vm580 = vmand %vm572, %vm578
            %vm581 = vmand %vm573, %vm579
            %vm582 = vmxor %vm572, %vm580
            %vm583 = vmxor %vm573, %vm581
            %v584 = vmul.f32 %v566, %v494
            %v585 = vmul.f32 %v567, %v495
            %v586 = vsel %vm580, %v584, 0.0
            %v587 = vsel %vm581, %v585, 0.0
            %v588 = vstv %s529
            %v589 = vmul.f32 %v586, %v588
            %v590 = vmul.f32 %v587, %v588
            %v591 = vadd.f32 %v478, %v589
            %v592 = vadd.f32 %v479, %v590
            %v593 = vstv %s531
            %v594 = vmul.f32 %v586, %v593
            %v595 = vmul.f32 %v587, %v593
            %v596 = vadd.f32 %v483, %v594
            %v597 = vadd.f32 %v484, %v595
            %v598 = vstv %s533
            %v599 = vmul.f32 %v586, %v598
            %v600 = vmul.f32 %v587, %v598
            %v601 = vadd.f32 %v488, %v599
            %v602 = vadd.f32 %v489, %v600
            %v603 = vsub.f32 0.0, %v494
            %v604 = vsub.f32 0.0, %v495
            %v605 = vsel %vm580, %v576, %v494
            %v606 = vsel %vm581, %v577, %v495
            %v607 = vsel %vm582, %v603, %v605
            %v608 = vsel %vm583, %v604, %v606
            %s609 = sadd.s32 %s382, 3
            %s610 = smul.u32 %s609, 4
            %s611 = sadd.s32 %s610, 1
            %s612 = sld [smem:[#allocation10 + %s611]]
            %p613 = scmp.ge.s32.totalorder %s612, %s220
            %s614 = sld [smem:[#allocation10 + %s610]]
            %p615 = scmp.le.s32.totalorder %s614, %s221
            %p616 = pnand %p613, %p615
            %p617 = pneg %p616
            %s618 = sadd.s32 %s610, 3
            %s619 = sld [smem:[#allocation10 + %s618]]
            %p620 = scmp.ge.s32.totalorder %s619, %s203
            %p621 = pnand %p617, %p620
            %p622 = pneg %p621
            %s623 = sadd.s32 %s610, 2
            %s624 = sld [smem:[#allocation10 + %s623]]
            %p625 = scmp.le.s32.totalorder %s624, %s219
            %p626 = pnand %p622, %p625
            %p627 = pneg %p626
            %s628 = smul.u32 %s609, 9
            %s629 = sld [smem:[#allocation12 + %s628]]
            %s630 = sadd.s32 %s628, 1
            %s631 = sld [smem:[#allocation12 + %s630]]
            %s632 = sadd.s32 %s628, 2
            %s633 = sld [smem:[#allocation12 + %s632]]
            %s634 = sadd.s32 %s628, 3
            %s635 = sld [smem:[#allocation12 + %s634]]
            %s636 = sadd.s32 %s628, 4
            %s637 = sld [smem:[#allocation12 + %s636]]
            %s638 = sadd.s32 %s628, 5
            %s639 = sld [smem:[#allocation12 + %s638]]
            %s640 = scalar_select %p627, %s639, 0.0
            %s641 = sadd.s32 %s628, 6
            %s642 = sld [smem:[#allocation12 + %s641]]
            %s643 = sadd.s32 %s628, 7
            %s644 = sld [smem:[#allocation12 + %s643]]
            %s645 = sadd.s32 %s628, 8
            %s646 = sld [smem:[#allocation12 + %s645]]
            %v647 = vstv %s629
            %v648 = vsub.f32 %v216, %v647
            %v649 = vstv %s631
            %v650 = vsub.f32 %v217, %v649
            %v651 = vsub.f32 %v218, %v649
            %v652 = vstv %s633
            %v653 = vmul.f32 %v652, %v648
            %v654 = vstv %s635
            %v655 = vmul.f32 %v654, %v650
            %v656 = vmul.f32 %v654, %v651
            %v657 = vadd.f32 %v653, %v655
            %v658 = vadd.f32 %v653, %v656
            %v659 = vmul.f32 %v648, %v657
            %v660 = vmul.f32 %v648, %v658
            %v661 = vmul.f32 %v650, %v650
            %v662 = vmul.f32 %v651, %v651
            %v663 = vstv %s637
            %v664 = vmul.f32 %v663, %v661
            %v665 = vmul.f32 %v663, %v662
            %v666 = vadd.f32 %v659, %v664
            %v667 = vadd.f32 %v660, %v665
            %v668 = vmul.f32 %v666, 1.442695
            %v669 = vpow.pop %v668
            %v670 = vmul.f32 %v667, 1.442695
            %v671 = vpow.pop %v670
            %vm672 = vcmp.le.f32.partialorder %v666, 0.0
            %vm673 = vcmp.le.f32.partialorder %v667, 0.0
            %v674 = vstv %s640
            %v675 = vmul.f32 %v674, %v669
            %v676 = vmul.f32 %v674, %v671
            %v677 = vmin.f32 %v675, 0.99
            %v678 = vmin.f32 %v676, 0.99
            %v679 = vsel %vm672, %v677, 0.0
            %v680 = vsel %vm673, %v678, 0.0
            %vm681 = vcmp.ge.f32.partialorder %v679, 0.003921569
            %vm682 = vcmp.ge.f32.partialorder %v680, 0.003921569
            %vm683 = vcmp.gt.f32.partialorder %v607, 0.0
            %vm684 = vcmp.gt.f32.partialorder %v608, 0.0
            %vm685 = vmand %vm681, %vm683
            %vm686 = vmand %vm682, %vm684
            %v687 = vsub.f32 1.0, %v679
            %v688 = vsub.f32 1.0, %v680
            %v689 = vmul.f32 %v607, %v687
            %v690 = vmul.f32 %v608, %v688
            %vm691 = vcmp.ge.f32.partialorder %v689, 0.0001
            %vm692 = vcmp.ge.f32.partialorder %v690, 0.0001
            %vm693 = vmand %vm685, %vm691
            %vm694 = vmand %vm686, %vm692
            %vm695 = vmxor %vm685, %vm693
            %vm696 = vmxor %vm686, %vm694
            %v697 = vmul.f32 %v679, %v607
            %v698 = vmul.f32 %v680, %v608
            %v699 = vsel %vm693, %v697, 0.0
            %v700 = vsel %vm694, %v698, 0.0
            %v701 = vstv %s642
            %v702 = vmul.f32 %v699, %v701
            %v703 = vmul.f32 %v700, %v701
            %v704 = vadd.f32 %v591, %v702
            %v705 = vadd.f32 %v592, %v703
            %v706 = vstv %s644
            %v707 = vmul.f32 %v699, %v706
            %v708 = vmul.f32 %v700, %v706
            %v709 = vadd.f32 %v596, %v707
            %v710 = vadd.f32 %v597, %v708
            %v711 = vstv %s646
            %v712 = vmul.f32 %v699, %v711
            %v713 = vmul.f32 %v700, %v711
            %v714 = vadd.f32 %v601, %v712
            %v715 = vadd.f32 %v602, %v713
            %v716 = vsub.f32 0.0, %v607
            %v717 = vsub.f32 0.0, %v608
            %v718 = vsel %vm693, %v689, %v607
            %v719 = vsel %vm694, %v690, %v608
            %v720 = vsel %vm695, %v716, %v718
            %v721 = vsel %vm696, %v717, %v719
            %s722 = sadd.s32 %s382, 4
            %s723 = smul.u32 %s722, 4
            %s724 = sadd.s32 %s723, 1
            %s725 = sld [smem:[#allocation10 + %s724]]
            %p726 = scmp.ge.s32.totalorder %s725, %s220
            %s727 = sld [smem:[#allocation10 + %s723]]
            %p728 = scmp.le.s32.totalorder %s727, %s221
            %p729 = pnand %p726, %p728
            %p730 = pneg %p729
            %s731 = sadd.s32 %s723, 3
            %s732 = sld [smem:[#allocation10 + %s731]]
            %p733 = scmp.ge.s32.totalorder %s732, %s203
            %p734 = pnand %p730, %p733
            %p735 = pneg %p734
            %s736 = sadd.s32 %s723, 2
            %s737 = sld [smem:[#allocation10 + %s736]]
            %p738 = scmp.le.s32.totalorder %s737, %s219
            %p739 = pnand %p735, %p738
            %p740 = pneg %p739
            %s741 = smul.u32 %s722, 9
            %s742 = sld [smem:[#allocation12 + %s741]]
            %s743 = sadd.s32 %s741, 1
            %s744 = sld [smem:[#allocation12 + %s743]]
            %s745 = sadd.s32 %s741, 2
            %s746 = sld [smem:[#allocation12 + %s745]]
            %s747 = sadd.s32 %s741, 3
            %s748 = sld [smem:[#allocation12 + %s747]]
            %s749 = sadd.s32 %s741, 4
            %s750 = sld [smem:[#allocation12 + %s749]]
            %s751 = sadd.s32 %s741, 5
            %s752 = sld [smem:[#allocation12 + %s751]]
            %s753 = scalar_select %p740, %s752, 0.0
            %s754 = sadd.s32 %s741, 6
            %s755 = sld [smem:[#allocation12 + %s754]]
            %s756 = sadd.s32 %s741, 7
            %s757 = sld [smem:[#allocation12 + %s756]]
            %s758 = sadd.s32 %s741, 8
            %s759 = sld [smem:[#allocation12 + %s758]]
            %v760 = vstv %s742
            %v761 = vsub.f32 %v216, %v760
            %v762 = vstv %s744
            %v763 = vsub.f32 %v217, %v762
            %v764 = vsub.f32 %v218, %v762
            %v765 = vstv %s746
            %v766 = vmul.f32 %v765, %v761
            %v767 = vstv %s748
            %v768 = vmul.f32 %v767, %v763
            %v769 = vmul.f32 %v767, %v764
            %v770 = vadd.f32 %v766, %v768
            %v771 = vadd.f32 %v766, %v769
            %v772 = vmul.f32 %v761, %v770
            %v773 = vmul.f32 %v761, %v771
            %v774 = vmul.f32 %v763, %v763
            %v775 = vmul.f32 %v764, %v764
            %v776 = vstv %s750
            %v777 = vmul.f32 %v776, %v774
            %v778 = vmul.f32 %v776, %v775
            %v779 = vadd.f32 %v772, %v777
            %v780 = vadd.f32 %v773, %v778
            %v781 = vmul.f32 %v779, 1.442695
            %v782 = vpow.pop %v781
            %v783 = vmul.f32 %v780, 1.442695
            %v784 = vpow.pop %v783
            %vm785 = vcmp.le.f32.partialorder %v779, 0.0
            %vm786 = vcmp.le.f32.partialorder %v780, 0.0
            %v787 = vstv %s753
            %v788 = vmul.f32 %v787, %v782
            %v789 = vmul.f32 %v787, %v784
            %v790 = vmin.f32 %v788, 0.99
            %v791 = vmin.f32 %v789, 0.99
            %v792 = vsel %vm785, %v790, 0.0
            %v793 = vsel %vm786, %v791, 0.0
            %vm794 = vcmp.ge.f32.partialorder %v792, 0.003921569
            %vm795 = vcmp.ge.f32.partialorder %v793, 0.003921569
            %vm796 = vcmp.gt.f32.partialorder %v720, 0.0
            %vm797 = vcmp.gt.f32.partialorder %v721, 0.0
            %vm798 = vmand %vm794, %vm796
            %vm799 = vmand %vm795, %vm797
            %v800 = vsub.f32 1.0, %v792
            %v801 = vsub.f32 1.0, %v793
            %v802 = vmul.f32 %v720, %v800
            %v803 = vmul.f32 %v721, %v801
            %vm804 = vcmp.ge.f32.partialorder %v802, 0.0001
            %vm805 = vcmp.ge.f32.partialorder %v803, 0.0001
            %vm806 = vmand %vm798, %vm804
            %vm807 = vmand %vm799, %vm805
            %vm808 = vmxor %vm798, %vm806
            %vm809 = vmxor %vm799, %vm807
            %v810 = vmul.f32 %v792, %v720
            %v811 = vmul.f32 %v793, %v721
            %v812 = vsel %vm806, %v810, 0.0
            %v813 = vsel %vm807, %v811, 0.0
            %v814 = vstv %s755
            %v815 = vmul.f32 %v812, %v814
            %v816 = vmul.f32 %v813, %v814
            %v817 = vadd.f32 %v704, %v815
            %v818 = vadd.f32 %v705, %v816
            %v819 = vstv %s757
            %v820 = vmul.f32 %v812, %v819
            %v821 = vmul.f32 %v813, %v819
            %v822 = vadd.f32 %v709, %v820
            %v823 = vadd.f32 %v710, %v821
            %v824 = vstv %s759
            %v825 = vmul.f32 %v812, %v824
            %v826 = vmul.f32 %v813, %v824
            %v827 = vadd.f32 %v714, %v825
            %v828 = vadd.f32 %v715, %v826
            %v829 = vsub.f32 0.0, %v720
            %v830 = vsub.f32 0.0, %v721
            %v831 = vsel %vm806, %v802, %v720
            %v832 = vsel %vm807, %v803, %v721
            %v833 = vsel %vm808, %v829, %v831
            %v834 = vsel %vm809, %v830, %v832
            %s835 = sadd.s32 %s382, 5
            %s836 = smul.u32 %s835, 4
            %s837 = sadd.s32 %s836, 1
            %s838 = sld [smem:[#allocation10 + %s837]]
            %p839 = scmp.ge.s32.totalorder %s838, %s220
            %s840 = sld [smem:[#allocation10 + %s836]]
            %p841 = scmp.le.s32.totalorder %s840, %s221
            %p842 = pnand %p839, %p841
            %p843 = pneg %p842
            %s844 = sadd.s32 %s836, 3
            %s845 = sld [smem:[#allocation10 + %s844]]
            %p846 = scmp.ge.s32.totalorder %s845, %s203
            %p847 = pnand %p843, %p846
            %p848 = pneg %p847
            %s849 = sadd.s32 %s836, 2
            %s850 = sld [smem:[#allocation10 + %s849]]
            %p851 = scmp.le.s32.totalorder %s850, %s219
            %p852 = pnand %p848, %p851
            %p853 = pneg %p852
            %s854 = smul.u32 %s835, 9
            %s855 = sld [smem:[#allocation12 + %s854]]
            %s856 = sadd.s32 %s854, 1
            %s857 = sld [smem:[#allocation12 + %s856]]
            %s858 = sadd.s32 %s854, 2
            %s859 = sld [smem:[#allocation12 + %s858]]
            %s860 = sadd.s32 %s854, 3
            %s861 = sld [smem:[#allocation12 + %s860]]
            %s862 = sadd.s32 %s854, 4
            %s863 = sld [smem:[#allocation12 + %s862]]
            %s864 = sadd.s32 %s854, 5
            %s865 = sld [smem:[#allocation12 + %s864]]
            %s866 = scalar_select %p853, %s865, 0.0
            %s867 = sadd.s32 %s854, 6
            %s868 = sld [smem:[#allocation12 + %s867]]
            %s869 = sadd.s32 %s854, 7
            %s870 = sld [smem:[#allocation12 + %s869]]
            %s871 = sadd.s32 %s854, 8
            %s872 = sld [smem:[#allocation12 + %s871]]
            %v873 = vstv %s855
            %v874 = vsub.f32 %v216, %v873
            %v875 = vstv %s857
            %v876 = vsub.f32 %v217, %v875
            %v877 = vsub.f32 %v218, %v875
            %v878 = vstv %s859
            %v879 = vmul.f32 %v878, %v874
            %v880 = vstv %s861
            %v881 = vmul.f32 %v880, %v876
            %v882 = vmul.f32 %v880, %v877
            %v883 = vadd.f32 %v879, %v881
            %v884 = vadd.f32 %v879, %v882
            %v885 = vmul.f32 %v874, %v883
            %v886 = vmul.f32 %v874, %v884
            %v887 = vmul.f32 %v876, %v876
            %v888 = vmul.f32 %v877, %v877
            %v889 = vstv %s863
            %v890 = vmul.f32 %v889, %v887
            %v891 = vmul.f32 %v889, %v888
            %v892 = vadd.f32 %v885, %v890
            %v893 = vadd.f32 %v886, %v891
            %v894 = vmul.f32 %v892, 1.442695
            %v895 = vpow.pop %v894
            %v896 = vmul.f32 %v893, 1.442695
            %v897 = vpow.pop %v896
            %vm898 = vcmp.le.f32.partialorder %v892, 0.0
            %vm899 = vcmp.le.f32.partialorder %v893, 0.0
            %v900 = vstv %s866
            %v901 = vmul.f32 %v900, %v895
            %v902 = vmul.f32 %v900, %v897
            %v903 = vmin.f32 %v901, 0.99
            %v904 = vmin.f32 %v902, 0.99
            %v905 = vsel %vm898, %v903, 0.0
            %v906 = vsel %vm899, %v904, 0.0
            %vm907 = vcmp.ge.f32.partialorder %v905, 0.003921569
            %vm908 = vcmp.ge.f32.partialorder %v906, 0.003921569
            %vm909 = vcmp.gt.f32.partialorder %v833, 0.0
            %vm910 = vcmp.gt.f32.partialorder %v834, 0.0
            %vm911 = vmand %vm907, %vm909
            %vm912 = vmand %vm908, %vm910
            %v913 = vsub.f32 1.0, %v905
            %v914 = vsub.f32 1.0, %v906
            %v915 = vmul.f32 %v833, %v913
            %v916 = vmul.f32 %v834, %v914
            %vm917 = vcmp.ge.f32.partialorder %v915, 0.0001
            %vm918 = vcmp.ge.f32.partialorder %v916, 0.0001
            %vm919 = vmand %vm911, %vm917
            %vm920 = vmand %vm912, %vm918
            %vm921 = vmxor %vm911, %vm919
            %vm922 = vmxor %vm912, %vm920
            %v923 = vmul.f32 %v905, %v833
            %v924 = vmul.f32 %v906, %v834
            %v925 = vsel %vm919, %v923, 0.0
            %v926 = vsel %vm920, %v924, 0.0
            %v927 = vstv %s868
            %v928 = vmul.f32 %v925, %v927
            %v929 = vmul.f32 %v926, %v927
            %v930 = vadd.f32 %v817, %v928
            %v931 = vadd.f32 %v818, %v929
            %v932 = vstv %s870
            %v933 = vmul.f32 %v925, %v932
            %v934 = vmul.f32 %v926, %v932
            %v935 = vadd.f32 %v822, %v933
            %v936 = vadd.f32 %v823, %v934
            %v937 = vstv %s872
            %v938 = vmul.f32 %v925, %v937
            %v939 = vmul.f32 %v926, %v937
            %v940 = vadd.f32 %v827, %v938
            %v941 = vadd.f32 %v828, %v939
            %v942 = vsub.f32 0.0, %v833
            %v943 = vsub.f32 0.0, %v834
            %v944 = vsel %vm919, %v915, %v833
            %v945 = vsel %vm920, %v916, %v834
            %v946 = vsel %vm921, %v942, %v944
            %v947 = vsel %vm922, %v943, %v945
            %s948 = sadd.s32 %s382, 6
            %s949 = smul.u32 %s948, 4
            %s950 = sadd.s32 %s949, 1
            %s951 = sld [smem:[#allocation10 + %s950]]
            %p952 = scmp.ge.s32.totalorder %s951, %s220
            %s953 = sld [smem:[#allocation10 + %s949]]
            %p954 = scmp.le.s32.totalorder %s953, %s221
            %p955 = pnand %p952, %p954
            %p956 = pneg %p955
            %s957 = sadd.s32 %s949, 3
            %s958 = sld [smem:[#allocation10 + %s957]]
            %p959 = scmp.ge.s32.totalorder %s958, %s203
            %p960 = pnand %p956, %p959
            %p961 = pneg %p960
            %s962 = sadd.s32 %s949, 2
            %s963 = sld [smem:[#allocation10 + %s962]]
            %p964 = scmp.le.s32.totalorder %s963, %s219
            %p965 = pnand %p961, %p964
            %p966 = pneg %p965
            %s967 = smul.u32 %s948, 9
            %s968 = sld [smem:[#allocation12 + %s967]]
            %s969 = sadd.s32 %s967, 1
            %s970 = sld [smem:[#allocation12 + %s969]]
            %s971 = sadd.s32 %s967, 2
            %s972 = sld [smem:[#allocation12 + %s971]]
            %s973 = sadd.s32 %s967, 3
            %s974 = sld [smem:[#allocation12 + %s973]]
            %s975 = sadd.s32 %s967, 4
            %s976 = sld [smem:[#allocation12 + %s975]]
            %s977 = sadd.s32 %s967, 5
            %s978 = sld [smem:[#allocation12 + %s977]]
            %s979 = scalar_select %p966, %s978, 0.0
            %s980 = sadd.s32 %s967, 6
            %s981 = sld [smem:[#allocation12 + %s980]]
            %s982 = sadd.s32 %s967, 7
            %s983 = sld [smem:[#allocation12 + %s982]]
            %s984 = sadd.s32 %s967, 8
            %s985 = sld [smem:[#allocation12 + %s984]]
            %v986 = vstv %s968
            %v987 = vsub.f32 %v216, %v986
            %v988 = vstv %s970
            %v989 = vsub.f32 %v217, %v988
            %v990 = vsub.f32 %v218, %v988
            %v991 = vstv %s972
            %v992 = vmul.f32 %v991, %v987
            %v993 = vstv %s974
            %v994 = vmul.f32 %v993, %v989
            %v995 = vmul.f32 %v993, %v990
            %v996 = vadd.f32 %v992, %v994
            %v997 = vadd.f32 %v992, %v995
            %v998 = vmul.f32 %v987, %v996
            %v999 = vmul.f32 %v987, %v997
            %v1000 = vmul.f32 %v989, %v989
            %v1001 = vmul.f32 %v990, %v990
            %v1002 = vstv %s976
            %v1003 = vmul.f32 %v1002, %v1000
            %v1004 = vmul.f32 %v1002, %v1001
            %v1005 = vadd.f32 %v998, %v1003
            %v1006 = vadd.f32 %v999, %v1004
            %v1007 = vmul.f32 %v1005, 1.442695
            %v1008 = vpow.pop %v1007
            %v1009 = vmul.f32 %v1006, 1.442695
            %v1010 = vpow.pop %v1009
            %vm1011 = vcmp.le.f32.partialorder %v1005, 0.0
            %vm1012 = vcmp.le.f32.partialorder %v1006, 0.0
            %v1013 = vstv %s979
            %v1014 = vmul.f32 %v1013, %v1008
            %v1015 = vmul.f32 %v1013, %v1010
            %v1016 = vmin.f32 %v1014, 0.99
            %v1017 = vmin.f32 %v1015, 0.99
            %v1018 = vsel %vm1011, %v1016, 0.0
            %v1019 = vsel %vm1012, %v1017, 0.0
            %vm1020 = vcmp.ge.f32.partialorder %v1018, 0.003921569
            %vm1021 = vcmp.ge.f32.partialorder %v1019, 0.003921569
            %vm1022 = vcmp.gt.f32.partialorder %v946, 0.0
            %vm1023 = vcmp.gt.f32.partialorder %v947, 0.0
            %vm1024 = vmand %vm1020, %vm1022
            %vm1025 = vmand %vm1021, %vm1023
            %v1026 = vsub.f32 1.0, %v1018
            %v1027 = vsub.f32 1.0, %v1019
            %v1028 = vmul.f32 %v946, %v1026
            %v1029 = vmul.f32 %v947, %v1027
            %vm1030 = vcmp.ge.f32.partialorder %v1028, 0.0001
            %vm1031 = vcmp.ge.f32.partialorder %v1029, 0.0001
            %vm1032 = vmand %vm1024, %vm1030
            %vm1033 = vmand %vm1025, %vm1031
            %vm1034 = vmxor %vm1024, %vm1032
            %vm1035 = vmxor %vm1025, %vm1033
            %v1036 = vmul.f32 %v1018, %v946
            %v1037 = vmul.f32 %v1019, %v947
            %v1038 = vsel %vm1032, %v1036, 0.0
            %v1039 = vsel %vm1033, %v1037, 0.0
            %v1040 = vstv %s981
            %v1041 = vmul.f32 %v1038, %v1040
            %v1042 = vmul.f32 %v1039, %v1040
            %v1043 = vadd.f32 %v930, %v1041
            %v1044 = vadd.f32 %v931, %v1042
            %v1045 = vstv %s983
            %v1046 = vmul.f32 %v1038, %v1045
            %v1047 = vmul.f32 %v1039, %v1045
            %v1048 = vadd.f32 %v935, %v1046
            %v1049 = vadd.f32 %v936, %v1047
            %v1050 = vstv %s985
            %v1051 = vmul.f32 %v1038, %v1050
            %v1052 = vmul.f32 %v1039, %v1050
            %v1053 = vadd.f32 %v940, %v1051
            %v1054 = vadd.f32 %v941, %v1052
            %v1055 = vsub.f32 0.0, %v946
            %v1056 = vsub.f32 0.0, %v947
            %v1057 = vsel %vm1032, %v1028, %v946
            %v1058 = vsel %vm1033, %v1029, %v947
            %v1059 = vsel %vm1034, %v1055, %v1057
            %v1060 = vsel %vm1035, %v1056, %v1058
            %s1061 = sadd.s32 %s382, 7
            %s1062 = smul.u32 %s1061, 4
            %s1063 = sadd.s32 %s1062, 1
            %s1064 = sld [smem:[#allocation10 + %s1063]]
            %p1065 = scmp.ge.s32.totalorder %s1064, %s220
            %s1066 = sld [smem:[#allocation10 + %s1062]]
            %p1067 = scmp.le.s32.totalorder %s1066, %s221
            %p1068 = pnand %p1065, %p1067
            %p1069 = pneg %p1068
            %s1070 = sadd.s32 %s1062, 3
            %s1071 = sld [smem:[#allocation10 + %s1070]]
            %p1072 = scmp.ge.s32.totalorder %s1071, %s203
            %p1073 = pnand %p1069, %p1072
            %p1074 = pneg %p1073
            %s1075 = sadd.s32 %s1062, 2
            %s1076 = sld [smem:[#allocation10 + %s1075]]
            %p1077 = scmp.le.s32.totalorder %s1076, %s219
            %p1078 = pnand %p1074, %p1077
            %p1079 = pneg %p1078
            %s1080 = smul.u32 %s1061, 9
            %s1081 = sld [smem:[#allocation12 + %s1080]]
            %s1082 = sadd.s32 %s1080, 1
            %s1083 = sld [smem:[#allocation12 + %s1082]]
            %s1084 = sadd.s32 %s1080, 2
            %s1085 = sld [smem:[#allocation12 + %s1084]]
            %s1086 = sadd.s32 %s1080, 3
            %s1087 = sld [smem:[#allocation12 + %s1086]]
            %s1088 = sadd.s32 %s1080, 4
            %s1089 = sld [smem:[#allocation12 + %s1088]]
            %s1090 = sadd.s32 %s1080, 5
            %s1091 = sld [smem:[#allocation12 + %s1090]]
            %s1092 = scalar_select %p1079, %s1091, 0.0
            %s1093 = sadd.s32 %s1080, 6
            %s1094 = sld [smem:[#allocation12 + %s1093]]
            %s1095 = sadd.s32 %s1080, 7
            %s1096 = sld [smem:[#allocation12 + %s1095]]
            %s1097 = sadd.s32 %s1080, 8
            %s1098 = sld [smem:[#allocation12 + %s1097]]
            %v1099 = vstv %s1081
            %v1100 = vsub.f32 %v216, %v1099
            %v1101 = vstv %s1083
            %v1102 = vsub.f32 %v217, %v1101
            %v1103 = vsub.f32 %v218, %v1101
            %v1104 = vstv %s1085
            %v1105 = vmul.f32 %v1104, %v1100
            %v1106 = vstv %s1087
            %v1107 = vmul.f32 %v1106, %v1102
            %v1108 = vmul.f32 %v1106, %v1103
            %v1109 = vadd.f32 %v1105, %v1107
            %v1110 = vadd.f32 %v1105, %v1108
            %v1111 = vmul.f32 %v1100, %v1109
            %v1112 = vmul.f32 %v1100, %v1110
            %v1113 = vmul.f32 %v1102, %v1102
            %v1114 = vmul.f32 %v1103, %v1103
            %v1115 = vstv %s1089
            %v1116 = vmul.f32 %v1115, %v1113
            %v1117 = vmul.f32 %v1115, %v1114
            %v1118 = vadd.f32 %v1111, %v1116
            %v1119 = vadd.f32 %v1112, %v1117
            %v1120 = vmul.f32 %v1118, 1.442695
            %v1121 = vpow.pop %v1120
            %v1122 = vmul.f32 %v1119, 1.442695
            %v1123 = vpow.pop %v1122
            %vm1124 = vcmp.le.f32.partialorder %v1118, 0.0
            %vm1125 = vcmp.le.f32.partialorder %v1119, 0.0
            %v1126 = vstv %s1092
            %v1127 = vmul.f32 %v1126, %v1121
            %v1128 = vmul.f32 %v1126, %v1123
            %v1129 = vmin.f32 %v1127, 0.99
            %v1130 = vmin.f32 %v1128, 0.99
            %v1131 = vsel %vm1124, %v1129, 0.0
            %v1132 = vsel %vm1125, %v1130, 0.0
            %vm1133 = vcmp.ge.f32.partialorder %v1131, 0.003921569
            %vm1134 = vcmp.ge.f32.partialorder %v1132, 0.003921569
            %vm1135 = vcmp.gt.f32.partialorder %v1059, 0.0
            %vm1136 = vcmp.gt.f32.partialorder %v1060, 0.0
            %vm1137 = vmand %vm1133, %vm1135
            %vm1138 = vmand %vm1134, %vm1136
            %v1139 = vsub.f32 1.0, %v1131
            %v1140 = vsub.f32 1.0, %v1132
            %v1141 = vmul.f32 %v1059, %v1139
            %v1142 = vmul.f32 %v1060, %v1140
            %vm1143 = vcmp.ge.f32.partialorder %v1141, 0.0001
            %vm1144 = vcmp.ge.f32.partialorder %v1142, 0.0001
            %vm1145 = vmand %vm1137, %vm1143
            %vm1146 = vmand %vm1138, %vm1144
            %vm1147 = vmxor %vm1137, %vm1145
            %vm1148 = vmxor %vm1138, %vm1146
            %v1149 = vmul.f32 %v1131, %v1059
            %v1150 = vmul.f32 %v1132, %v1060
            %v1151 = vsel %vm1145, %v1149, 0.0
            %v1152 = vsel %vm1146, %v1150, 0.0
            %v1153 = vstv %s1094
            %v1154 = vmul.f32 %v1151, %v1153
            %v1155 = vmul.f32 %v1152, %v1153
            %v1156 = vadd.f32 %v1043, %v1154
            %v1157 = vadd.f32 %v1044, %v1155
            %v1158 = vstv %s1096
            %v1159 = vmul.f32 %v1151, %v1158
            %v1160 = vmul.f32 %v1152, %v1158
            %v1161 = vadd.f32 %v1048, %v1159
            %v1162 = vadd.f32 %v1049, %v1160
            %v1163 = vstv %s1098
            %v1164 = vmul.f32 %v1151, %v1163
            %v1165 = vmul.f32 %v1152, %v1163
            %v1166 = vadd.f32 %v1053, %v1164
            %v1167 = vadd.f32 %v1054, %v1165
            %v1168 = vsub.f32 0.0, %v1059
            %v1169 = vsub.f32 0.0, %v1060
            %v1170 = vsel %vm1145, %v1141, %v1059
            %v1171 = vsel %vm1146, %v1142, %v1060
            %v1172 = vsel %vm1147, %v1168, %v1170
            %v1173 = vsel %vm1148, %v1169, %v1171
            %s1174 = sadd.s32 %s382, 8
            %s1175 = smul.u32 %s1174, 4
            %s1176 = sadd.s32 %s1175, 1
            %s1177 = sld [smem:[#allocation10 + %s1176]]
            %p1178 = scmp.ge.s32.totalorder %s1177, %s220
            %s1179 = sld [smem:[#allocation10 + %s1175]]
            %p1180 = scmp.le.s32.totalorder %s1179, %s221
            %p1181 = pnand %p1178, %p1180
            %p1182 = pneg %p1181
            %s1183 = sadd.s32 %s1175, 3
            %s1184 = sld [smem:[#allocation10 + %s1183]]
            %p1185 = scmp.ge.s32.totalorder %s1184, %s203
            %p1186 = pnand %p1182, %p1185
            %p1187 = pneg %p1186
            %s1188 = sadd.s32 %s1175, 2
            %s1189 = sld [smem:[#allocation10 + %s1188]]
            %p1190 = scmp.le.s32.totalorder %s1189, %s219
            %p1191 = pnand %p1187, %p1190
            %p1192 = pneg %p1191
            %s1193 = smul.u32 %s1174, 9
            %s1194 = sld [smem:[#allocation12 + %s1193]]
            %s1195 = sadd.s32 %s1193, 1
            %s1196 = sld [smem:[#allocation12 + %s1195]]
            %s1197 = sadd.s32 %s1193, 2
            %s1198 = sld [smem:[#allocation12 + %s1197]]
            %s1199 = sadd.s32 %s1193, 3
            %s1200 = sld [smem:[#allocation12 + %s1199]]
            %s1201 = sadd.s32 %s1193, 4
            %s1202 = sld [smem:[#allocation12 + %s1201]]
            %s1203 = sadd.s32 %s1193, 5
            %s1204 = sld [smem:[#allocation12 + %s1203]]
            %s1205 = scalar_select %p1192, %s1204, 0.0
            %s1206 = sadd.s32 %s1193, 6
            %s1207 = sld [smem:[#allocation12 + %s1206]]
            %s1208 = sadd.s32 %s1193, 7
            %s1209 = sld [smem:[#allocation12 + %s1208]]
            %s1210 = sadd.s32 %s1193, 8
            %s1211 = sld [smem:[#allocation12 + %s1210]]
            %v1212 = vstv %s1194
            %v1213 = vsub.f32 %v216, %v1212
            %v1214 = vstv %s1196
            %v1215 = vsub.f32 %v217, %v1214
            %v1216 = vsub.f32 %v218, %v1214
            %v1217 = vstv %s1198
            %v1218 = vmul.f32 %v1217, %v1213
            %v1219 = vstv %s1200
            %v1220 = vmul.f32 %v1219, %v1215
            %v1221 = vmul.f32 %v1219, %v1216
            %v1222 = vadd.f32 %v1218, %v1220
            %v1223 = vadd.f32 %v1218, %v1221
            %v1224 = vmul.f32 %v1213, %v1222
            %v1225 = vmul.f32 %v1213, %v1223
            %v1226 = vmul.f32 %v1215, %v1215
            %v1227 = vmul.f32 %v1216, %v1216
            %v1228 = vstv %s1202
            %v1229 = vmul.f32 %v1228, %v1226
            %v1230 = vmul.f32 %v1228, %v1227
            %v1231 = vadd.f32 %v1224, %v1229
            %v1232 = vadd.f32 %v1225, %v1230
            %v1233 = vmul.f32 %v1231, 1.442695
            %v1234 = vpow.pop %v1233
            %v1235 = vmul.f32 %v1232, 1.442695
            %v1236 = vpow.pop %v1235
            %vm1237 = vcmp.le.f32.partialorder %v1231, 0.0
            %vm1238 = vcmp.le.f32.partialorder %v1232, 0.0
            %v1239 = vstv %s1205
            %v1240 = vmul.f32 %v1239, %v1234
            %v1241 = vmul.f32 %v1239, %v1236
            %v1242 = vmin.f32 %v1240, 0.99
            %v1243 = vmin.f32 %v1241, 0.99
            %v1244 = vsel %vm1237, %v1242, 0.0
            %v1245 = vsel %vm1238, %v1243, 0.0
            %vm1246 = vcmp.ge.f32.partialorder %v1244, 0.003921569
            %vm1247 = vcmp.ge.f32.partialorder %v1245, 0.003921569
            %vm1248 = vcmp.gt.f32.partialorder %v1172, 0.0
            %vm1249 = vcmp.gt.f32.partialorder %v1173, 0.0
            %vm1250 = vmand %vm1246, %vm1248
            %vm1251 = vmand %vm1247, %vm1249
            %v1252 = vsub.f32 1.0, %v1244
            %v1253 = vsub.f32 1.0, %v1245
            %v1254 = vmul.f32 %v1172, %v1252
            %v1255 = vmul.f32 %v1173, %v1253
            %vm1256 = vcmp.ge.f32.partialorder %v1254, 0.0001
            %vm1257 = vcmp.ge.f32.partialorder %v1255, 0.0001
            %vm1258 = vmand %vm1250, %vm1256
            %vm1259 = vmand %vm1251, %vm1257
            %vm1260 = vmxor %vm1250, %vm1258
            %vm1261 = vmxor %vm1251, %vm1259
            %v1262 = vmul.f32 %v1244, %v1172
            %v1263 = vmul.f32 %v1245, %v1173
            %v1264 = vsel %vm1258, %v1262, 0.0
            %v1265 = vsel %vm1259, %v1263, 0.0
            %v1266 = vstv %s1207
            %v1267 = vmul.f32 %v1264, %v1266
            %v1268 = vmul.f32 %v1265, %v1266
            %v1269 = vadd.f32 %v1156, %v1267
            %v1270 = vadd.f32 %v1157, %v1268
            %v1271 = vstv %s1209
            %v1272 = vmul.f32 %v1264, %v1271
            %v1273 = vmul.f32 %v1265, %v1271
            %v1274 = vadd.f32 %v1161, %v1272
            %v1275 = vadd.f32 %v1162, %v1273
            %v1276 = vstv %s1211
            %v1277 = vmul.f32 %v1264, %v1276
            %v1278 = vmul.f32 %v1265, %v1276
            %v1279 = vadd.f32 %v1166, %v1277
            %v1280 = vadd.f32 %v1167, %v1278
            %v1281 = vsub.f32 0.0, %v1172
            %v1282 = vsub.f32 0.0, %v1173
            %v1283 = vsel %vm1258, %v1254, %v1172
            %v1284 = vsel %vm1259, %v1255, %v1173
            %v1285 = vsel %vm1260, %v1281, %v1283
            %v1286 = vsel %vm1261, %v1282, %v1284
            %s1287 = sadd.s32 %s382, 9
            %s1288 = smul.u32 %s1287, 4
            %s1289 = sadd.s32 %s1288, 1
            %s1290 = sld [smem:[#allocation10 + %s1289]]
            %p1291 = scmp.ge.s32.totalorder %s1290, %s220
            %s1292 = sld [smem:[#allocation10 + %s1288]]
            %p1293 = scmp.le.s32.totalorder %s1292, %s221
            %p1294 = pnand %p1291, %p1293
            %p1295 = pneg %p1294
            %s1296 = sadd.s32 %s1288, 3
            %s1297 = sld [smem:[#allocation10 + %s1296]]
            %p1298 = scmp.ge.s32.totalorder %s1297, %s203
            %p1299 = pnand %p1295, %p1298
            %p1300 = pneg %p1299
            %s1301 = sadd.s32 %s1288, 2
            %s1302 = sld [smem:[#allocation10 + %s1301]]
            %p1303 = scmp.le.s32.totalorder %s1302, %s219
            %p1304 = pnand %p1300, %p1303
            %p1305 = pneg %p1304
            %s1306 = smul.u32 %s1287, 9
            %s1307 = sld [smem:[#allocation12 + %s1306]]
            %s1308 = sadd.s32 %s1306, 1
            %s1309 = sld [smem:[#allocation12 + %s1308]]
            %s1310 = sadd.s32 %s1306, 2
            %s1311 = sld [smem:[#allocation12 + %s1310]]
            %s1312 = sadd.s32 %s1306, 3
            %s1313 = sld [smem:[#allocation12 + %s1312]]
            %s1314 = sadd.s32 %s1306, 4
            %s1315 = sld [smem:[#allocation12 + %s1314]]
            %s1316 = sadd.s32 %s1306, 5
            %s1317 = sld [smem:[#allocation12 + %s1316]]
            %s1318 = scalar_select %p1305, %s1317, 0.0
            %s1319 = sadd.s32 %s1306, 6
            %s1320 = sld [smem:[#allocation12 + %s1319]]
            %s1321 = sadd.s32 %s1306, 7
            %s1322 = sld [smem:[#allocation12 + %s1321]]
            %s1323 = sadd.s32 %s1306, 8
            %s1324 = sld [smem:[#allocation12 + %s1323]]
            %v1325 = vstv %s1307
            %v1326 = vsub.f32 %v216, %v1325
            %v1327 = vstv %s1309
            %v1328 = vsub.f32 %v217, %v1327
            %v1329 = vsub.f32 %v218, %v1327
            %v1330 = vstv %s1311
            %v1331 = vmul.f32 %v1330, %v1326
            %v1332 = vstv %s1313
            %v1333 = vmul.f32 %v1332, %v1328
            %v1334 = vmul.f32 %v1332, %v1329
            %v1335 = vadd.f32 %v1331, %v1333
            %v1336 = vadd.f32 %v1331, %v1334
            %v1337 = vmul.f32 %v1326, %v1335
            %v1338 = vmul.f32 %v1326, %v1336
            %v1339 = vmul.f32 %v1328, %v1328
            %v1340 = vmul.f32 %v1329, %v1329
            %v1341 = vstv %s1315
            %v1342 = vmul.f32 %v1341, %v1339
            %v1343 = vmul.f32 %v1341, %v1340
            %v1344 = vadd.f32 %v1337, %v1342
            %v1345 = vadd.f32 %v1338, %v1343
            %v1346 = vmul.f32 %v1344, 1.442695
            %v1347 = vpow.pop %v1346
            %v1348 = vmul.f32 %v1345, 1.442695
            %v1349 = vpow.pop %v1348
            %vm1350 = vcmp.le.f32.partialorder %v1344, 0.0
            %vm1351 = vcmp.le.f32.partialorder %v1345, 0.0
            %v1352 = vstv %s1318
            %v1353 = vmul.f32 %v1352, %v1347
            %v1354 = vmul.f32 %v1352, %v1349
            %v1355 = vmin.f32 %v1353, 0.99
            %v1356 = vmin.f32 %v1354, 0.99
            %v1357 = vsel %vm1350, %v1355, 0.0
            %v1358 = vsel %vm1351, %v1356, 0.0
            %vm1359 = vcmp.ge.f32.partialorder %v1357, 0.003921569
            %vm1360 = vcmp.ge.f32.partialorder %v1358, 0.003921569
            %vm1361 = vcmp.gt.f32.partialorder %v1285, 0.0
            %vm1362 = vcmp.gt.f32.partialorder %v1286, 0.0
            %vm1363 = vmand %vm1359, %vm1361
            %vm1364 = vmand %vm1360, %vm1362
            %v1365 = vsub.f32 1.0, %v1357
            %v1366 = vsub.f32 1.0, %v1358
            %v1367 = vmul.f32 %v1285, %v1365
            %v1368 = vmul.f32 %v1286, %v1366
            %vm1369 = vcmp.ge.f32.partialorder %v1367, 0.0001
            %vm1370 = vcmp.ge.f32.partialorder %v1368, 0.0001
            %vm1371 = vmand %vm1363, %vm1369
            %vm1372 = vmand %vm1364, %vm1370
            %vm1373 = vmxor %vm1363, %vm1371
            %vm1374 = vmxor %vm1364, %vm1372
            %v1375 = vmul.f32 %v1357, %v1285
            %v1376 = vmul.f32 %v1358, %v1286
            %v1377 = vsel %vm1371, %v1375, 0.0
            %v1378 = vsel %vm1372, %v1376, 0.0
            %v1379 = vstv %s1320
            %v1380 = vmul.f32 %v1377, %v1379
            %v1381 = vmul.f32 %v1378, %v1379
            %v1382 = vadd.f32 %v1269, %v1380
            %v1383 = vadd.f32 %v1270, %v1381
            %v1384 = vstv %s1322
            %v1385 = vmul.f32 %v1377, %v1384
            %v1386 = vmul.f32 %v1378, %v1384
            %v1387 = vadd.f32 %v1274, %v1385
            %v1388 = vadd.f32 %v1275, %v1386
            %v1389 = vstv %s1324
            %v1390 = vmul.f32 %v1377, %v1389
            %v1391 = vmul.f32 %v1378, %v1389
            %v1392 = vadd.f32 %v1279, %v1390
            %v1393 = vadd.f32 %v1280, %v1391
            %v1394 = vsub.f32 0.0, %v1285
            %v1395 = vsub.f32 0.0, %v1286
            %v1396 = vsel %vm1371, %v1367, %v1285
            %v1397 = vsel %vm1372, %v1368, %v1286
            %v1398 = vsel %vm1373, %v1394, %v1396
            %v1399 = vsel %vm1374, %v1395, %v1397
            %s1400 = sadd.s32 %s382, 10
            %s1401 = smul.u32 %s1400, 4
            %s1402 = sadd.s32 %s1401, 1
            %s1403 = sld [smem:[#allocation10 + %s1402]]
            %p1404 = scmp.ge.s32.totalorder %s1403, %s220
            %s1405 = sld [smem:[#allocation10 + %s1401]]
            %p1406 = scmp.le.s32.totalorder %s1405, %s221
            %p1407 = pnand %p1404, %p1406
            %p1408 = pneg %p1407
            %s1409 = sadd.s32 %s1401, 3
            %s1410 = sld [smem:[#allocation10 + %s1409]]
            %p1411 = scmp.ge.s32.totalorder %s1410, %s203
            %p1412 = pnand %p1408, %p1411
            %p1413 = pneg %p1412
            %s1414 = sadd.s32 %s1401, 2
            %s1415 = sld [smem:[#allocation10 + %s1414]]
            %p1416 = scmp.le.s32.totalorder %s1415, %s219
            %p1417 = pnand %p1413, %p1416
            %p1418 = pneg %p1417
            %s1419 = smul.u32 %s1400, 9
            %s1420 = sld [smem:[#allocation12 + %s1419]]
            %s1421 = sadd.s32 %s1419, 1
            %s1422 = sld [smem:[#allocation12 + %s1421]]
            %s1423 = sadd.s32 %s1419, 2
            %s1424 = sld [smem:[#allocation12 + %s1423]]
            %s1425 = sadd.s32 %s1419, 3
            %s1426 = sld [smem:[#allocation12 + %s1425]]
            %s1427 = sadd.s32 %s1419, 4
            %s1428 = sld [smem:[#allocation12 + %s1427]]
            %s1429 = sadd.s32 %s1419, 5
            %s1430 = sld [smem:[#allocation12 + %s1429]]
            %s1431 = scalar_select %p1418, %s1430, 0.0
            %s1432 = sadd.s32 %s1419, 6
            %s1433 = sld [smem:[#allocation12 + %s1432]]
            %s1434 = sadd.s32 %s1419, 7
            %s1435 = sld [smem:[#allocation12 + %s1434]]
            %s1436 = sadd.s32 %s1419, 8
            %s1437 = sld [smem:[#allocation12 + %s1436]]
            %v1438 = vstv %s1420
            %v1439 = vsub.f32 %v216, %v1438
            %v1440 = vstv %s1422
            %v1441 = vsub.f32 %v217, %v1440
            %v1442 = vsub.f32 %v218, %v1440
            %v1443 = vstv %s1424
            %v1444 = vmul.f32 %v1443, %v1439
            %v1445 = vstv %s1426
            %v1446 = vmul.f32 %v1445, %v1441
            %v1447 = vmul.f32 %v1445, %v1442
            %v1448 = vadd.f32 %v1444, %v1446
            %v1449 = vadd.f32 %v1444, %v1447
            %v1450 = vmul.f32 %v1439, %v1448
            %v1451 = vmul.f32 %v1439, %v1449
            %v1452 = vmul.f32 %v1441, %v1441
            %v1453 = vmul.f32 %v1442, %v1442
            %v1454 = vstv %s1428
            %v1455 = vmul.f32 %v1454, %v1452
            %v1456 = vmul.f32 %v1454, %v1453
            %v1457 = vadd.f32 %v1450, %v1455
            %v1458 = vadd.f32 %v1451, %v1456
            %v1459 = vmul.f32 %v1457, 1.442695
            %v1460 = vpow.pop %v1459
            %v1461 = vmul.f32 %v1458, 1.442695
            %v1462 = vpow.pop %v1461
            %vm1463 = vcmp.le.f32.partialorder %v1457, 0.0
            %vm1464 = vcmp.le.f32.partialorder %v1458, 0.0
            %v1465 = vstv %s1431
            %v1466 = vmul.f32 %v1465, %v1460
            %v1467 = vmul.f32 %v1465, %v1462
            %v1468 = vmin.f32 %v1466, 0.99
            %v1469 = vmin.f32 %v1467, 0.99
            %v1470 = vsel %vm1463, %v1468, 0.0
            %v1471 = vsel %vm1464, %v1469, 0.0
            %vm1472 = vcmp.ge.f32.partialorder %v1470, 0.003921569
            %vm1473 = vcmp.ge.f32.partialorder %v1471, 0.003921569
            %vm1474 = vcmp.gt.f32.partialorder %v1398, 0.0
            %vm1475 = vcmp.gt.f32.partialorder %v1399, 0.0
            %vm1476 = vmand %vm1472, %vm1474
            %vm1477 = vmand %vm1473, %vm1475
            %v1478 = vsub.f32 1.0, %v1470
            %v1479 = vsub.f32 1.0, %v1471
            %v1480 = vmul.f32 %v1398, %v1478
            %v1481 = vmul.f32 %v1399, %v1479
            %vm1482 = vcmp.ge.f32.partialorder %v1480, 0.0001
            %vm1483 = vcmp.ge.f32.partialorder %v1481, 0.0001
            %vm1484 = vmand %vm1476, %vm1482
            %vm1485 = vmand %vm1477, %vm1483
            %vm1486 = vmxor %vm1476, %vm1484
            %vm1487 = vmxor %vm1477, %vm1485
            %v1488 = vmul.f32 %v1470, %v1398
            %v1489 = vmul.f32 %v1471, %v1399
            %v1490 = vsel %vm1484, %v1488, 0.0
            %v1491 = vsel %vm1485, %v1489, 0.0
            %v1492 = vstv %s1433
            %v1493 = vmul.f32 %v1490, %v1492
            %v1494 = vmul.f32 %v1491, %v1492
            %v1495 = vadd.f32 %v1382, %v1493
            %v1496 = vadd.f32 %v1383, %v1494
            %v1497 = vstv %s1435
            %v1498 = vmul.f32 %v1490, %v1497
            %v1499 = vmul.f32 %v1491, %v1497
            %v1500 = vadd.f32 %v1387, %v1498
            %v1501 = vadd.f32 %v1388, %v1499
            %v1502 = vstv %s1437
            %v1503 = vmul.f32 %v1490, %v1502
            %v1504 = vmul.f32 %v1491, %v1502
            %v1505 = vadd.f32 %v1392, %v1503
            %v1506 = vadd.f32 %v1393, %v1504
            %v1507 = vsub.f32 0.0, %v1398
            %v1508 = vsub.f32 0.0, %v1399
            %v1509 = vsel %vm1484, %v1480, %v1398
            %v1510 = vsel %vm1485, %v1481, %v1399
            %v1511 = vsel %vm1486, %v1507, %v1509
            %v1512 = vsel %vm1487, %v1508, %v1510
            %s1513 = sadd.s32 %s382, 11
            %s1514 = smul.u32 %s1513, 4
            %s1515 = sadd.s32 %s1514, 1
            %s1516 = sld [smem:[#allocation10 + %s1515]]
            %p1517 = scmp.ge.s32.totalorder %s1516, %s220
            %s1518 = sld [smem:[#allocation10 + %s1514]]
            %p1519 = scmp.le.s32.totalorder %s1518, %s221
            %p1520 = pnand %p1517, %p1519
            %p1521 = pneg %p1520
            %s1522 = sadd.s32 %s1514, 3
            %s1523 = sld [smem:[#allocation10 + %s1522]]
            %p1524 = scmp.ge.s32.totalorder %s1523, %s203
            %p1525 = pnand %p1521, %p1524
            %p1526 = pneg %p1525
            %s1527 = sadd.s32 %s1514, 2
            %s1528 = sld [smem:[#allocation10 + %s1527]]
            %p1529 = scmp.le.s32.totalorder %s1528, %s219
            %p1530 = pnand %p1526, %p1529
            %p1531 = pneg %p1530
            %s1532 = smul.u32 %s1513, 9
            %s1533 = sld [smem:[#allocation12 + %s1532]]
            %s1534 = sadd.s32 %s1532, 1
            %s1535 = sld [smem:[#allocation12 + %s1534]]
            %s1536 = sadd.s32 %s1532, 2
            %s1537 = sld [smem:[#allocation12 + %s1536]]
            %s1538 = sadd.s32 %s1532, 3
            %s1539 = sld [smem:[#allocation12 + %s1538]]
            %s1540 = sadd.s32 %s1532, 4
            %s1541 = sld [smem:[#allocation12 + %s1540]]
            %s1542 = sadd.s32 %s1532, 5
            %s1543 = sld [smem:[#allocation12 + %s1542]]
            %s1544 = scalar_select %p1531, %s1543, 0.0
            %s1545 = sadd.s32 %s1532, 6
            %s1546 = sld [smem:[#allocation12 + %s1545]]
            %s1547 = sadd.s32 %s1532, 7
            %s1548 = sld [smem:[#allocation12 + %s1547]]
            %s1549 = sadd.s32 %s1532, 8
            %s1550 = sld [smem:[#allocation12 + %s1549]]
            %v1551 = vstv %s1533
            %v1552 = vsub.f32 %v216, %v1551
            %v1553 = vstv %s1535
            %v1554 = vsub.f32 %v217, %v1553
            %v1555 = vsub.f32 %v218, %v1553
            %v1556 = vstv %s1537
            %v1557 = vmul.f32 %v1556, %v1552
            %v1558 = vstv %s1539
            %v1559 = vmul.f32 %v1558, %v1554
            %v1560 = vmul.f32 %v1558, %v1555
            %v1561 = vadd.f32 %v1557, %v1559
            %v1562 = vadd.f32 %v1557, %v1560
            %v1563 = vmul.f32 %v1552, %v1561
            %v1564 = vmul.f32 %v1552, %v1562
            %v1565 = vmul.f32 %v1554, %v1554
            %v1566 = vmul.f32 %v1555, %v1555
            %v1567 = vstv %s1541
            %v1568 = vmul.f32 %v1567, %v1565
            %v1569 = vmul.f32 %v1567, %v1566
            %v1570 = vadd.f32 %v1563, %v1568
            %v1571 = vadd.f32 %v1564, %v1569
            %v1572 = vmul.f32 %v1570, 1.442695
            %v1573 = vpow.pop %v1572
            %v1574 = vmul.f32 %v1571, 1.442695
            %v1575 = vpow.pop %v1574
            %vm1576 = vcmp.le.f32.partialorder %v1570, 0.0
            %vm1577 = vcmp.le.f32.partialorder %v1571, 0.0
            %v1578 = vstv %s1544
            %v1579 = vmul.f32 %v1578, %v1573
            %v1580 = vmul.f32 %v1578, %v1575
            %v1581 = vmin.f32 %v1579, 0.99
            %v1582 = vmin.f32 %v1580, 0.99
            %v1583 = vsel %vm1576, %v1581, 0.0
            %v1584 = vsel %vm1577, %v1582, 0.0
            %vm1585 = vcmp.ge.f32.partialorder %v1583, 0.003921569
            %vm1586 = vcmp.ge.f32.partialorder %v1584, 0.003921569
            %vm1587 = vcmp.gt.f32.partialorder %v1511, 0.0
            %vm1588 = vcmp.gt.f32.partialorder %v1512, 0.0
            %vm1589 = vmand %vm1585, %vm1587
            %vm1590 = vmand %vm1586, %vm1588
            %v1591 = vsub.f32 1.0, %v1583
            %v1592 = vsub.f32 1.0, %v1584
            %v1593 = vmul.f32 %v1511, %v1591
            %v1594 = vmul.f32 %v1512, %v1592
            %vm1595 = vcmp.ge.f32.partialorder %v1593, 0.0001
            %vm1596 = vcmp.ge.f32.partialorder %v1594, 0.0001
            %vm1597 = vmand %vm1589, %vm1595
            %vm1598 = vmand %vm1590, %vm1596
            %vm1599 = vmxor %vm1589, %vm1597
            %vm1600 = vmxor %vm1590, %vm1598
            %v1601 = vmul.f32 %v1583, %v1511
            %v1602 = vmul.f32 %v1584, %v1512
            %v1603 = vsel %vm1597, %v1601, 0.0
            %v1604 = vsel %vm1598, %v1602, 0.0
            %v1605 = vstv %s1546
            %v1606 = vmul.f32 %v1603, %v1605
            %v1607 = vmul.f32 %v1604, %v1605
            %v1608 = vadd.f32 %v1495, %v1606
            %v1609 = vadd.f32 %v1496, %v1607
            %v1610 = vstv %s1548
            %v1611 = vmul.f32 %v1603, %v1610
            %v1612 = vmul.f32 %v1604, %v1610
            %v1613 = vadd.f32 %v1500, %v1611
            %v1614 = vadd.f32 %v1501, %v1612
            %v1615 = vstv %s1550
            %v1616 = vmul.f32 %v1603, %v1615
            %v1617 = vmul.f32 %v1604, %v1615
            %v1618 = vadd.f32 %v1505, %v1616
            %v1619 = vadd.f32 %v1506, %v1617
            %v1620 = vsub.f32 0.0, %v1511
            %v1621 = vsub.f32 0.0, %v1512
            %v1622 = vsel %vm1597, %v1593, %v1511
            %v1623 = vsel %vm1598, %v1594, %v1512
            %v1624 = vsel %vm1599, %v1620, %v1622
            %v1625 = vsel %vm1600, %v1621, %v1623
            %s1626 = sadd.s32 %s382, 12
            %s1627 = smul.u32 %s1626, 4
            %s1628 = sadd.s32 %s1627, 1
            %s1629 = sld [smem:[#allocation10 + %s1628]]
            %p1630 = scmp.ge.s32.totalorder %s1629, %s220
            %s1631 = sld [smem:[#allocation10 + %s1627]]
            %p1632 = scmp.le.s32.totalorder %s1631, %s221
            %p1633 = pnand %p1630, %p1632
            %p1634 = pneg %p1633
            %s1635 = sadd.s32 %s1627, 3
            %s1636 = sld [smem:[#allocation10 + %s1635]]
            %p1637 = scmp.ge.s32.totalorder %s1636, %s203
            %p1638 = pnand %p1634, %p1637
            %p1639 = pneg %p1638
            %s1640 = sadd.s32 %s1627, 2
            %s1641 = sld [smem:[#allocation10 + %s1640]]
            %p1642 = scmp.le.s32.totalorder %s1641, %s219
            %p1643 = pnand %p1639, %p1642
            %p1644 = pneg %p1643
            %s1645 = smul.u32 %s1626, 9
            %s1646 = sld [smem:[#allocation12 + %s1645]]
            %s1647 = sadd.s32 %s1645, 1
            %s1648 = sld [smem:[#allocation12 + %s1647]]
            %s1649 = sadd.s32 %s1645, 2
            %s1650 = sld [smem:[#allocation12 + %s1649]]
            %s1651 = sadd.s32 %s1645, 3
            %s1652 = sld [smem:[#allocation12 + %s1651]]
            %s1653 = sadd.s32 %s1645, 4
            %s1654 = sld [smem:[#allocation12 + %s1653]]
            %s1655 = sadd.s32 %s1645, 5
            %s1656 = sld [smem:[#allocation12 + %s1655]]
            %s1657 = scalar_select %p1644, %s1656, 0.0
            %s1658 = sadd.s32 %s1645, 6
            %s1659 = sld [smem:[#allocation12 + %s1658]]
            %s1660 = sadd.s32 %s1645, 7
            %s1661 = sld [smem:[#allocation12 + %s1660]]
            %s1662 = sadd.s32 %s1645, 8
            %s1663 = sld [smem:[#allocation12 + %s1662]]
            %v1664 = vstv %s1646
            %v1665 = vsub.f32 %v216, %v1664
            %v1666 = vstv %s1648
            %v1667 = vsub.f32 %v217, %v1666
            %v1668 = vsub.f32 %v218, %v1666
            %v1669 = vstv %s1650
            %v1670 = vmul.f32 %v1669, %v1665
            %v1671 = vstv %s1652
            %v1672 = vmul.f32 %v1671, %v1667
            %v1673 = vmul.f32 %v1671, %v1668
            %v1674 = vadd.f32 %v1670, %v1672
            %v1675 = vadd.f32 %v1670, %v1673
            %v1676 = vmul.f32 %v1665, %v1674
            %v1677 = vmul.f32 %v1665, %v1675
            %v1678 = vmul.f32 %v1667, %v1667
            %v1679 = vmul.f32 %v1668, %v1668
            %v1680 = vstv %s1654
            %v1681 = vmul.f32 %v1680, %v1678
            %v1682 = vmul.f32 %v1680, %v1679
            %v1683 = vadd.f32 %v1676, %v1681
            %v1684 = vadd.f32 %v1677, %v1682
            %v1685 = vmul.f32 %v1683, 1.442695
            %v1686 = vpow.pop %v1685
            %v1687 = vmul.f32 %v1684, 1.442695
            %v1688 = vpow.pop %v1687
            %vm1689 = vcmp.le.f32.partialorder %v1683, 0.0
            %vm1690 = vcmp.le.f32.partialorder %v1684, 0.0
            %v1691 = vstv %s1657
            %v1692 = vmul.f32 %v1691, %v1686
            %v1693 = vmul.f32 %v1691, %v1688
            %v1694 = vmin.f32 %v1692, 0.99
            %v1695 = vmin.f32 %v1693, 0.99
            %v1696 = vsel %vm1689, %v1694, 0.0
            %v1697 = vsel %vm1690, %v1695, 0.0
            %vm1698 = vcmp.ge.f32.partialorder %v1696, 0.003921569
            %vm1699 = vcmp.ge.f32.partialorder %v1697, 0.003921569
            %vm1700 = vcmp.gt.f32.partialorder %v1624, 0.0
            %vm1701 = vcmp.gt.f32.partialorder %v1625, 0.0
            %vm1702 = vmand %vm1698, %vm1700
            %vm1703 = vmand %vm1699, %vm1701
            %v1704 = vsub.f32 1.0, %v1696
            %v1705 = vsub.f32 1.0, %v1697
            %v1706 = vmul.f32 %v1624, %v1704
            %v1707 = vmul.f32 %v1625, %v1705
            %vm1708 = vcmp.ge.f32.partialorder %v1706, 0.0001
            %vm1709 = vcmp.ge.f32.partialorder %v1707, 0.0001
            %vm1710 = vmand %vm1702, %vm1708
            %vm1711 = vmand %vm1703, %vm1709
            %vm1712 = vmxor %vm1702, %vm1710
            %vm1713 = vmxor %vm1703, %vm1711
            %v1714 = vmul.f32 %v1696, %v1624
            %v1715 = vmul.f32 %v1697, %v1625
            %v1716 = vsel %vm1710, %v1714, 0.0
            %v1717 = vsel %vm1711, %v1715, 0.0
            %v1718 = vstv %s1659
            %v1719 = vmul.f32 %v1716, %v1718
            %v1720 = vmul.f32 %v1717, %v1718
            %v1721 = vadd.f32 %v1608, %v1719
            %v1722 = vadd.f32 %v1609, %v1720
            %v1723 = vstv %s1661
            %v1724 = vmul.f32 %v1716, %v1723
            %v1725 = vmul.f32 %v1717, %v1723
            %v1726 = vadd.f32 %v1613, %v1724
            %v1727 = vadd.f32 %v1614, %v1725
            %v1728 = vstv %s1663
            %v1729 = vmul.f32 %v1716, %v1728
            %v1730 = vmul.f32 %v1717, %v1728
            %v1731 = vadd.f32 %v1618, %v1729
            %v1732 = vadd.f32 %v1619, %v1730
            %v1733 = vsub.f32 0.0, %v1624
            %v1734 = vsub.f32 0.0, %v1625
            %v1735 = vsel %vm1710, %v1706, %v1624
            %v1736 = vsel %vm1711, %v1707, %v1625
            %v1737 = vsel %vm1712, %v1733, %v1735
            %v1738 = vsel %vm1713, %v1734, %v1736
            %s1739 = sadd.s32 %s382, 13
            %s1740 = smul.u32 %s1739, 4
            %s1741 = sadd.s32 %s1740, 1
            %s1742 = sld [smem:[#allocation10 + %s1741]]
            %p1743 = scmp.ge.s32.totalorder %s1742, %s220
            %s1744 = sld [smem:[#allocation10 + %s1740]]
            %p1745 = scmp.le.s32.totalorder %s1744, %s221
            %p1746 = pnand %p1743, %p1745
            %p1747 = pneg %p1746
            %s1748 = sadd.s32 %s1740, 3
            %s1749 = sld [smem:[#allocation10 + %s1748]]
            %p1750 = scmp.ge.s32.totalorder %s1749, %s203
            %p1751 = pnand %p1747, %p1750
            %p1752 = pneg %p1751
            %s1753 = sadd.s32 %s1740, 2
            %s1754 = sld [smem:[#allocation10 + %s1753]]
            %p1755 = scmp.le.s32.totalorder %s1754, %s219
            %p1756 = pnand %p1752, %p1755
            %p1757 = pneg %p1756
            %s1758 = smul.u32 %s1739, 9
            %s1759 = sld [smem:[#allocation12 + %s1758]]
            %s1760 = sadd.s32 %s1758, 1
            %s1761 = sld [smem:[#allocation12 + %s1760]]
            %s1762 = sadd.s32 %s1758, 2
            %s1763 = sld [smem:[#allocation12 + %s1762]]
            %s1764 = sadd.s32 %s1758, 3
            %s1765 = sld [smem:[#allocation12 + %s1764]]
            %s1766 = sadd.s32 %s1758, 4
            %s1767 = sld [smem:[#allocation12 + %s1766]]
            %s1768 = sadd.s32 %s1758, 5
            %s1769 = sld [smem:[#allocation12 + %s1768]]
            %s1770 = scalar_select %p1757, %s1769, 0.0
            %s1771 = sadd.s32 %s1758, 6
            %s1772 = sld [smem:[#allocation12 + %s1771]]
            %s1773 = sadd.s32 %s1758, 7
            %s1774 = sld [smem:[#allocation12 + %s1773]]
            %s1775 = sadd.s32 %s1758, 8
            %s1776 = sld [smem:[#allocation12 + %s1775]]
            %v1777 = vstv %s1759
            %v1778 = vsub.f32 %v216, %v1777
            %v1779 = vstv %s1761
            %v1780 = vsub.f32 %v217, %v1779
            %v1781 = vsub.f32 %v218, %v1779
            %v1782 = vstv %s1763
            %v1783 = vmul.f32 %v1782, %v1778
            %v1784 = vstv %s1765
            %v1785 = vmul.f32 %v1784, %v1780
            %v1786 = vmul.f32 %v1784, %v1781
            %v1787 = vadd.f32 %v1783, %v1785
            %v1788 = vadd.f32 %v1783, %v1786
            %v1789 = vmul.f32 %v1778, %v1787
            %v1790 = vmul.f32 %v1778, %v1788
            %v1791 = vmul.f32 %v1780, %v1780
            %v1792 = vmul.f32 %v1781, %v1781
            %v1793 = vstv %s1767
            %v1794 = vmul.f32 %v1793, %v1791
            %v1795 = vmul.f32 %v1793, %v1792
            %v1796 = vadd.f32 %v1789, %v1794
            %v1797 = vadd.f32 %v1790, %v1795
            %v1798 = vmul.f32 %v1796, 1.442695
            %v1799 = vpow.pop %v1798
            %v1800 = vmul.f32 %v1797, 1.442695
            %v1801 = vpow.pop %v1800
            %vm1802 = vcmp.le.f32.partialorder %v1796, 0.0
            %vm1803 = vcmp.le.f32.partialorder %v1797, 0.0
            %v1804 = vstv %s1770
            %v1805 = vmul.f32 %v1804, %v1799
            %v1806 = vmul.f32 %v1804, %v1801
            %v1807 = vmin.f32 %v1805, 0.99
            %v1808 = vmin.f32 %v1806, 0.99
            %v1809 = vsel %vm1802, %v1807, 0.0
            %v1810 = vsel %vm1803, %v1808, 0.0
            %vm1811 = vcmp.ge.f32.partialorder %v1809, 0.003921569
            %vm1812 = vcmp.ge.f32.partialorder %v1810, 0.003921569
            %vm1813 = vcmp.gt.f32.partialorder %v1737, 0.0
            %vm1814 = vcmp.gt.f32.partialorder %v1738, 0.0
            %vm1815 = vmand %vm1811, %vm1813
            %vm1816 = vmand %vm1812, %vm1814
            %v1817 = vsub.f32 1.0, %v1809
            %v1818 = vsub.f32 1.0, %v1810
            %v1819 = vmul.f32 %v1737, %v1817
            %v1820 = vmul.f32 %v1738, %v1818
            %vm1821 = vcmp.ge.f32.partialorder %v1819, 0.0001
            %vm1822 = vcmp.ge.f32.partialorder %v1820, 0.0001
            %vm1823 = vmand %vm1815, %vm1821
            %vm1824 = vmand %vm1816, %vm1822
            %vm1825 = vmxor %vm1815, %vm1823
            %vm1826 = vmxor %vm1816, %vm1824
            %v1827 = vmul.f32 %v1809, %v1737
            %v1828 = vmul.f32 %v1810, %v1738
            %v1829 = vsel %vm1823, %v1827, 0.0
            %v1830 = vsel %vm1824, %v1828, 0.0
            %v1831 = vstv %s1772
            %v1832 = vmul.f32 %v1829, %v1831
            %v1833 = vmul.f32 %v1830, %v1831
            %v1834 = vadd.f32 %v1721, %v1832
            %v1835 = vadd.f32 %v1722, %v1833
            %v1836 = vstv %s1774
            %v1837 = vmul.f32 %v1829, %v1836
            %v1838 = vmul.f32 %v1830, %v1836
            %v1839 = vadd.f32 %v1726, %v1837
            %v1840 = vadd.f32 %v1727, %v1838
            %v1841 = vstv %s1776
            %v1842 = vmul.f32 %v1829, %v1841
            %v1843 = vmul.f32 %v1830, %v1841
            %v1844 = vadd.f32 %v1731, %v1842
            %v1845 = vadd.f32 %v1732, %v1843
            %v1846 = vsub.f32 0.0, %v1737
            %v1847 = vsub.f32 0.0, %v1738
            %v1848 = vsel %vm1823, %v1819, %v1737
            %v1849 = vsel %vm1824, %v1820, %v1738
            %v1850 = vsel %vm1825, %v1846, %v1848
            %v1851 = vsel %vm1826, %v1847, %v1849
            %s1852 = sadd.s32 %s382, 14
            %s1853 = smul.u32 %s1852, 4
            %s1854 = sadd.s32 %s1853, 1
            %s1855 = sld [smem:[#allocation10 + %s1854]]
            %p1856 = scmp.ge.s32.totalorder %s1855, %s220
            %s1857 = sld [smem:[#allocation10 + %s1853]]
            %p1858 = scmp.le.s32.totalorder %s1857, %s221
            %p1859 = pnand %p1856, %p1858
            %p1860 = pneg %p1859
            %s1861 = sadd.s32 %s1853, 3
            %s1862 = sld [smem:[#allocation10 + %s1861]]
            %p1863 = scmp.ge.s32.totalorder %s1862, %s203
            %p1864 = pnand %p1860, %p1863
            %p1865 = pneg %p1864
            %s1866 = sadd.s32 %s1853, 2
            %s1867 = sld [smem:[#allocation10 + %s1866]]
            %p1868 = scmp.le.s32.totalorder %s1867, %s219
            %p1869 = pnand %p1865, %p1868
            %p1870 = pneg %p1869
            %s1871 = smul.u32 %s1852, 9
            %s1872 = sld [smem:[#allocation12 + %s1871]]
            %s1873 = sadd.s32 %s1871, 1
            %s1874 = sld [smem:[#allocation12 + %s1873]]
            %s1875 = sadd.s32 %s1871, 2
            %s1876 = sld [smem:[#allocation12 + %s1875]]
            %s1877 = sadd.s32 %s1871, 3
            %s1878 = sld [smem:[#allocation12 + %s1877]]
            %s1879 = sadd.s32 %s1871, 4
            %s1880 = sld [smem:[#allocation12 + %s1879]]
            %s1881 = sadd.s32 %s1871, 5
            %s1882 = sld [smem:[#allocation12 + %s1881]]
            %s1883 = scalar_select %p1870, %s1882, 0.0
            %s1884 = sadd.s32 %s1871, 6
            %s1885 = sld [smem:[#allocation12 + %s1884]]
            %s1886 = sadd.s32 %s1871, 7
            %s1887 = sld [smem:[#allocation12 + %s1886]]
            %s1888 = sadd.s32 %s1871, 8
            %s1889 = sld [smem:[#allocation12 + %s1888]]
            %v1890 = vstv %s1872
            %v1891 = vsub.f32 %v216, %v1890
            %v1892 = vstv %s1874
            %v1893 = vsub.f32 %v217, %v1892
            %v1894 = vsub.f32 %v218, %v1892
            %v1895 = vstv %s1876
            %v1896 = vmul.f32 %v1895, %v1891
            %v1897 = vstv %s1878
            %v1898 = vmul.f32 %v1897, %v1893
            %v1899 = vmul.f32 %v1897, %v1894
            %v1900 = vadd.f32 %v1896, %v1898
            %v1901 = vadd.f32 %v1896, %v1899
            %v1902 = vmul.f32 %v1891, %v1900
            %v1903 = vmul.f32 %v1891, %v1901
            %v1904 = vmul.f32 %v1893, %v1893
            %v1905 = vmul.f32 %v1894, %v1894
            %v1906 = vstv %s1880
            %v1907 = vmul.f32 %v1906, %v1904
            %v1908 = vmul.f32 %v1906, %v1905
            %v1909 = vadd.f32 %v1902, %v1907
            %v1910 = vadd.f32 %v1903, %v1908
            %v1911 = vmul.f32 %v1909, 1.442695
            %v1912 = vpow.pop %v1911
            %v1913 = vmul.f32 %v1910, 1.442695
            %v1914 = vpow.pop %v1913
            %vm1915 = vcmp.le.f32.partialorder %v1909, 0.0
            %vm1916 = vcmp.le.f32.partialorder %v1910, 0.0
            %v1917 = vstv %s1883
            %v1918 = vmul.f32 %v1917, %v1912
            %v1919 = vmul.f32 %v1917, %v1914
            %v1920 = vmin.f32 %v1918, 0.99
            %v1921 = vmin.f32 %v1919, 0.99
            %v1922 = vsel %vm1915, %v1920, 0.0
            %v1923 = vsel %vm1916, %v1921, 0.0
            %vm1924 = vcmp.ge.f32.partialorder %v1922, 0.003921569
            %vm1925 = vcmp.ge.f32.partialorder %v1923, 0.003921569
            %vm1926 = vcmp.gt.f32.partialorder %v1850, 0.0
            %vm1927 = vcmp.gt.f32.partialorder %v1851, 0.0
            %vm1928 = vmand %vm1924, %vm1926
            %vm1929 = vmand %vm1925, %vm1927
            %v1930 = vsub.f32 1.0, %v1922
            %v1931 = vsub.f32 1.0, %v1923
            %v1932 = vmul.f32 %v1850, %v1930
            %v1933 = vmul.f32 %v1851, %v1931
            %vm1934 = vcmp.ge.f32.partialorder %v1932, 0.0001
            %vm1935 = vcmp.ge.f32.partialorder %v1933, 0.0001
            %vm1936 = vmand %vm1928, %vm1934
            %vm1937 = vmand %vm1929, %vm1935
            %vm1938 = vmxor %vm1928, %vm1936
            %vm1939 = vmxor %vm1929, %vm1937
            %v1940 = vmul.f32 %v1922, %v1850
            %v1941 = vmul.f32 %v1923, %v1851
            %v1942 = vsel %vm1936, %v1940, 0.0
            %v1943 = vsel %vm1937, %v1941, 0.0
            %v1944 = vstv %s1885
            %v1945 = vmul.f32 %v1942, %v1944
            %v1946 = vmul.f32 %v1943, %v1944
            %v1947 = vadd.f32 %v1834, %v1945
            %v1948 = vadd.f32 %v1835, %v1946
            %v1949 = vstv %s1887
            %v1950 = vmul.f32 %v1942, %v1949
            %v1951 = vmul.f32 %v1943, %v1949
            %v1952 = vadd.f32 %v1839, %v1950
            %v1953 = vadd.f32 %v1840, %v1951
            %v1954 = vstv %s1889
            %v1955 = vmul.f32 %v1942, %v1954
            %v1956 = vmul.f32 %v1943, %v1954
            %v1957 = vadd.f32 %v1844, %v1955
            %v1958 = vadd.f32 %v1845, %v1956
            %v1959 = vsub.f32 0.0, %v1850
            %v1960 = vsub.f32 0.0, %v1851
            %v1961 = vsel %vm1936, %v1932, %v1850
            %v1962 = vsel %vm1937, %v1933, %v1851
            %v1963 = vsel %vm1938, %v1959, %v1961
            %v1964 = vsel %vm1939, %v1960, %v1962
            %s1965 = sadd.s32 %s382, 15
            %s1966 = smul.u32 %s1965, 4
            %s1967 = sadd.s32 %s1966, 1
            %s1968 = sld [smem:[#allocation10 + %s1967]]
            %p1969 = scmp.ge.s32.totalorder %s1968, %s220
            %s1970 = sld [smem:[#allocation10 + %s1966]]
            %p1971 = scmp.le.s32.totalorder %s1970, %s221
            %p1972 = pnand %p1969, %p1971
            %p1973 = pneg %p1972
            %s1974 = sadd.s32 %s1966, 3
            %s1975 = sld [smem:[#allocation10 + %s1974]]
            %p1976 = scmp.ge.s32.totalorder %s1975, %s203
            %p1977 = pnand %p1973, %p1976
            %p1978 = pneg %p1977
            %s1979 = sadd.s32 %s1966, 2
            %s1980 = sld [smem:[#allocation10 + %s1979]]
            %p1981 = scmp.le.s32.totalorder %s1980, %s219
            %p1982 = pnand %p1978, %p1981
            %p1983 = pneg %p1982
            %s1984 = smul.u32 %s1965, 9
            %s1985 = sld [smem:[#allocation12 + %s1984]]
            %s1986 = sadd.s32 %s1984, 1
            %s1987 = sld [smem:[#allocation12 + %s1986]]
            %s1988 = sadd.s32 %s1984, 2
            %s1989 = sld [smem:[#allocation12 + %s1988]]
            %s1990 = sadd.s32 %s1984, 3
            %s1991 = sld [smem:[#allocation12 + %s1990]]
            %s1992 = sadd.s32 %s1984, 4
            %s1993 = sld [smem:[#allocation12 + %s1992]]
            %s1994 = sadd.s32 %s1984, 5
            %s1995 = sld [smem:[#allocation12 + %s1994]]
            %s1996 = scalar_select %p1983, %s1995, 0.0
            %s1997 = sadd.s32 %s1984, 6
            %s1998 = sld [smem:[#allocation12 + %s1997]]
            %s1999 = sadd.s32 %s1984, 7
            %s2000 = sld [smem:[#allocation12 + %s1999]]
            %s2001 = sadd.s32 %s1984, 8
            %s2002 = sld [smem:[#allocation12 + %s2001]]
            %v2003 = vstv %s1985
            %v2004 = vsub.f32 %v216, %v2003
            %v2005 = vstv %s1987
            %v2006 = vsub.f32 %v217, %v2005
            %v2007 = vsub.f32 %v218, %v2005
            %v2008 = vstv %s1989
            %v2009 = vmul.f32 %v2008, %v2004
            %v2010 = vstv %s1991
            %v2011 = vmul.f32 %v2010, %v2006
            %v2012 = vmul.f32 %v2010, %v2007
            %v2013 = vadd.f32 %v2009, %v2011
            %v2014 = vadd.f32 %v2009, %v2012
            %v2015 = vmul.f32 %v2004, %v2013
            %v2016 = vmul.f32 %v2004, %v2014
            %v2017 = vmul.f32 %v2006, %v2006
            %v2018 = vmul.f32 %v2007, %v2007
            %v2019 = vstv %s1993
            %v2020 = vmul.f32 %v2019, %v2017
            %v2021 = vmul.f32 %v2019, %v2018
            %v2022 = vadd.f32 %v2015, %v2020
            %v2023 = vadd.f32 %v2016, %v2021
            %v2024 = vmul.f32 %v2022, 1.442695
            %v2025 = vpow.pop %v2024
            %v2026 = vmul.f32 %v2023, 1.442695
            %v2027 = vpow.pop %v2026
            %vm2028 = vcmp.le.f32.partialorder %v2022, 0.0
            %vm2029 = vcmp.le.f32.partialorder %v2023, 0.0
            %v2030 = vstv %s1996
            %v2031 = vmul.f32 %v2030, %v2025
            %v2032 = vmul.f32 %v2030, %v2027
            %v2033 = vmin.f32 %v2031, 0.99
            %v2034 = vmin.f32 %v2032, 0.99
            %v2035 = vsel %vm2028, %v2033, 0.0
            %v2036 = vsel %vm2029, %v2034, 0.0
            %vm2037 = vcmp.ge.f32.partialorder %v2035, 0.003921569
            %vm2038 = vcmp.ge.f32.partialorder %v2036, 0.003921569
            %vm2039 = vcmp.gt.f32.partialorder %v1963, 0.0
            %vm2040 = vcmp.gt.f32.partialorder %v1964, 0.0
            %vm2041 = vmand %vm2037, %vm2039
            %vm2042 = vmand %vm2038, %vm2040
            %v2043 = vsub.f32 1.0, %v2035
            %v2044 = vsub.f32 1.0, %v2036
            %v2045 = vmul.f32 %v1963, %v2043
            %v2046 = vmul.f32 %v1964, %v2044
            %vm2047 = vcmp.ge.f32.partialorder %v2045, 0.0001
            %vm2048 = vcmp.ge.f32.partialorder %v2046, 0.0001
            %vm2049 = vmand %vm2041, %vm2047
            %vm2050 = vmand %vm2042, %vm2048
            %vm2051 = vmxor %vm2041, %vm2049
            %vm2052 = vmxor %vm2042, %vm2050
            %v2053 = vmul.f32 %v2035, %v1963
            %v2054 = vmul.f32 %v2036, %v1964
            %v2055 = vsel %vm2049, %v2053, 0.0
            %v2056 = vsel %vm2050, %v2054, 0.0
            %v2057 = vstv %s1998
            %v2058 = vmul.f32 %v2055, %v2057
            %v2059 = vmul.f32 %v2056, %v2057
            %v2060 = vadd.f32 %v1947, %v2058
            %v2061 = vadd.f32 %v1948, %v2059
            %v2062 = vstv %s2000
            %v2063 = vmul.f32 %v2055, %v2062
            %v2064 = vmul.f32 %v2056, %v2062
            %v2065 = vadd.f32 %v1952, %v2063
            %v2066 = vadd.f32 %v1953, %v2064
            %v2067 = vstv %s2002
            %v2068 = vmul.f32 %v2055, %v2067
            %v2069 = vmul.f32 %v2056, %v2067
            %v2070 = vadd.f32 %v1957, %v2068
            %v2071 = vadd.f32 %v1958, %v2069
            %v2072 = vsub.f32 0.0, %v1963
            %v2073 = vsub.f32 0.0, %v1964
            %v2074 = vsel %vm2049, %v2045, %v1963
            %v2075 = vsel %vm2050, %v2046, %v1964
            %v2076 = vsel %vm2051, %v2072, %v2074
            %v2077 = vsel %vm2052, %v2073, %v2075
            %2078 = vst [vmem:[#allocation2] sm:$0xff] %v2076
            %2079 = vst [vmem:[#allocation2 + $0x8] sm:$0xff] %v2077
            %2080 = vst [vmem:[#allocation3] sm:$0xff] %v2060
            %2081 = vst [vmem:[#allocation3 + $0x8] sm:$0xff] %v2061
            %2082 = vst [vmem:[#allocation4] sm:$0xff] %v2065
            %2083 = vst [vmem:[#allocation4 + $0x8] sm:$0xff] %v2066
            %2084 = vst [vmem:[#allocation5] sm:$0xff] %v2070
            %2085 = vst [vmem:[#allocation5 + $0x8] sm:$0xff] %v2071
            %v2086 = vmax.f32 %v2076, %v2077
            %2087 = vmax.xlane.f32.xlu0 %v2086
            %v2088 = vpop.xlane.xlu0 %2087
            %v2089 = vrot.slane %v2088, 4
            %v2090 = vmax.f32 %v2088, %v2089
            %v2091 = vrot.slane %v2090, 2
            %v2092 = vmax.f32 %v2090, %v2091
            %v2093 = vrot.slane %v2092, 1
            %v2094 = vmax.f32 %v2092, %v2093
            %s2095 = vtos %v2094
            %p2096 = scmp.le.f32.partialorder %s2095, 0.0
            %s2097 = scalar_select %p2096, 1, 0
            %2098 = sst [smem:[%s230]] %s2097
          $region55: #{tpu_custom_call.1} parent=48 // pred_fallthru
            _
        $region49: #{tpu_custom_call.1} parent=31 // loop_footer
          %s237 = sadd.s32 1, %s233
        $region50: #{tpu_custom_call.1} parent=31 // loop_footer_branch
          %232 = sbr.rel target = $region46
        $region51: #{tpu_custom_call.1} parent=31 // loop_exit
          _
        %v2099 = vld [vmem:[#allocation2] sm:$0xff]
        %v2100 = vld [vmem:[#allocation2 + $0x8] sm:$0xff]
        %v2101 = vand.u32 2147483647, %v2099
        %v2102 = vand.u32 2147483647, %v2100
        %v2103 = vld [vmem:[#allocation3] sm:$0xff]
        %v2104 = vld [vmem:[#allocation3 + $0x8] sm:$0xff]
        %v2105 = vmul.f32 %v2101, 0.0
        %v2106 = vmul.f32 %v2102, 0.0
        %v2107 = vadd.f32 %v2103, %v2105
        %v2108 = vadd.f32 %v2104, %v2106
        %2109 = vst [vmem:[%s201] sm:$0xff] %v2107
        %2110 = vst [vmem:[%s201 + $0x8] sm:$0xff] %v2108
        %v2111 = vld [vmem:[#allocation4] sm:$0xff]
        %v2112 = vld [vmem:[#allocation4 + $0x8] sm:$0xff]
        %v2113 = vadd.f32 %v2111, %v2105
        %v2114 = vadd.f32 %v2112, %v2106
        %s2115 = scalar_lea.vmem %s201, 16 [#allocation13]
        %2116 = vst [vmem:[%s2115] sm:$0xff] %v2113
        %2117 = vst [vmem:[%s2115 + $0x8] sm:$0xff] %v2114
        %v2118 = vld [vmem:[#allocation5] sm:$0xff]
        %v2119 = vld [vmem:[#allocation5 + $0x8] sm:$0xff]
        %v2120 = vadd.f32 %v2118, %v2105
        %v2121 = vadd.f32 %v2119, %v2106
        %s2122 = scalar_lea.vmem %s201, 32 [#allocation13]
        %2123 = vst [vmem:[%s2122] sm:$0xff] %v2120
        %2124 = vst [vmem:[%s2122 + $0x8] sm:$0xff] %v2121
        %s2125 = sand.u32 %s104, 1
        %s2126 = scalar_lea.sflag [#allocation8], %s2125
        %s2127 = sand.u32 %s104, 1
        %s2128 = smul.addr %s2127, 48
        %s2129 = scalar_lea.vmem [#allocation13], %s2128
        // Predicated region
        $region56: #{tpu_custom_call.1} parent=31 // pred_check
          %p2130 = pneg %p114
        $region57: #{tpu_custom_call.1} parent=31 // pred_check_branch
          %2132 = sbr.rel (%p2130) target = $region59
        $region58: #{tpu_custom_call.1} parent=31 // pred_region
          #allocation15 [shape = 'u32[6]{0}', space=smem, size = 0x18, scoped, tag = 'DMA stride descriptor']
          %s2133 = smul.u32 2, %s23
          %2135 = vsyncadd %s2126, 0
          %s2136 = sadd.s32 %s24, %s2133
          %s2137 = smul.addr %s2136, 8
          %s2138 = scalar_lea.hbm %s3, %s2137
          %s2140 = sshll.u32 1, 14
          %s2141 = sxor.u32 4294967295, %s2140
          %s2144 = sshll.u32 7, 18
          %s2145 = sxor.u32 4294967295, %s2144
          %s2146 = sand.u32 0, %s2145
          %s2148 = sor.u32 %s2146, 0
          %s2149 = sshll.u32 %s2129, 4
          %s2150 = int_to_ptr.vmem [resolvable:$true] %s2149
          %s2151 = sshll.u32 %s2138, 4
          %s2152 = int_to_ptr.hbm [resolvable:$true] %s2151
          %2158 = sst [smem:[#allocation15]] 256
          %s2159 = scalar_lea.smem [#allocation15], 1
          %2160 = sst [smem:[%s2159]] 1024
          %s2161 = scalar_lea.smem [#allocation15], 2
          %2162 = sst [smem:[%s2161]] 2
          %s2163 = scalar_lea.smem [#allocation15], 3
          %2164 = sst [smem:[%s2163]] 128
          %s2165 = scalar_lea.smem [#allocation15], 4
          %2166 = sst [smem:[%s2165]] 128
          %s2167 = scalar_lea.smem [#allocation15], 5
          %2168 = sst [smem:[%s2167]] 8
          %2170 = dma.general %s2150, 768, %s2152, %s2126, [#allocation14], [#allocation15], %s2148, 0
        $region59: #{tpu_custom_call.1} parent=31 // pred_fallthru
          _
      $region32: #{tpu_custom_call.1} parent=5 // pred_fallthru
        _
      %p2171 = scmp.le.s32.totalorder 2, %s14
      // Predicated region
      $region60: #{tpu_custom_call.1} parent=5 // pred_check
        %p2172 = pneg %p2171
      $region61: #{tpu_custom_call.1} parent=5 // pred_check_branch
        %2174 = sbr.rel (%p2172) target = $region63
      $region62: #{tpu_custom_call.1} parent=5 // pred_region
        %s2175 = ssub.s32 %s14, 2
        // Predicated region
        $region64: #{tpu_custom_call.1} parent=62 // pred_check
          %p2176 = pneg %p120
        $region65: #{tpu_custom_call.1} parent=62 // pred_check_branch
          %2178 = sbr.rel (%p2176) target = $region67
        $region66: #{tpu_custom_call.1} parent=62 // pred_region
          %s2179 = sand.u32 %s105, 1
          %s2180 = scalar_lea.sflag [#allocation8], %s2179
          %s2181 = sand.u32 %s105, 1
          %s2182 = smul.addr %s2181, 48
          %s2183 = scalar_lea.vmem [#allocation13], %s2182
          %2185 = dma.done %s2180, 768
        $region67: #{tpu_custom_call.1} parent=62 // pred_fallthru
          _
      $region63: #{tpu_custom_call.1} parent=5 // pred_fallthru
        _
    $region6: #{tpu_custom_call.1} parent=1 // loop_footer
      %s18 = sadd.s32 1, %s14
    $region7: #{tpu_custom_call.1} parent=1 // loop_footer_branch
      %13 = sbr.rel target = $region3
    $region8: #{tpu_custom_call.1} parent=1 // loop_exit
      _
    %2186 = vsyncpa [#allocation8], 1
    %s2187 = scalar_lea.sflag [#allocation8], 1
    %2188 = vsyncpa %s2187, 1
    %2189 = vsyncpa [#allocation9], 1
    %s2190 = scalar_lea.sflag [#allocation9], 1
    %2191 = vsyncpa %s2190, 1
    %2192 = vsyncpa [#allocation11], 1

</llo_original>
